<compile_context>
chip_gen: v7x
topology: tpu7x:2x2x1
jax: 0.10.0
libtpu: 0.0.40
codegen_flags: <defaults>
</compile_context>

<pallas_src>
import functools
import math

import jax
import jax.numpy as jnp
from jax.experimental import pallas as pl
from jax.experimental.pallas import tpu as pltpu

NUM_THETA = 12


def _gabor_bank(kernel_size, sigma, lambd, gamma, num_theta=NUM_THETA):
    """(T, K, K) Gabor bank, replicating the PyTorch _gabor_kernel construction."""
    thetas = jnp.arange(num_theta, dtype=jnp.float32) * (math.pi / num_theta)
    half = kernel_size // 2
    coords = jnp.arange(-half, half + 1, dtype=jnp.float32)   # arange(-K//2+1, K//2+1) for odd K
    yy, xx = jnp.meshgrid(coords, coords, indexing="ij")      # torch.meshgrid default ('ij')
    th = thetas[:, None, None]
    x_t = xx[None] * jnp.cos(th) + yy[None] * jnp.sin(th)
    y_t = -xx[None] * jnp.sin(th) + yy[None] * jnp.cos(th)
    return jnp.exp(-(x_t ** 2 + gamma ** 2 * y_t ** 2) / (2.0 * sigma ** 2)) * jnp.cos(
        2.0 * math.pi * x_t / lambd)


def _block_gabor_kernel(x_ref, w_ref, b_ref, o_ref, xs_ref, *, K, H, W, C, P, Wp):
    """One batch element.

    x_ref : (C, H, W)     x.dtype  raw NCHW input block (no wrapper transpose/pad/cast)
    w_ref : (K, Kcp, Np)  bf16     per-kernel-row banded folded weights (zero padded)
    b_ref : (1, Np)       f32      adjust-conv bias in output-lane layout (zero padded)
    o_ref : (H, Np)       x.dtype  output rows, lane layout n = w*C + d (lane-dense, Np%128==0)
    xs_ref: (Hp, Kcp)     f32      zero-padded channel-last scratch, lane layout kc = c*Wp + wj
    """
    # Fused pad + NCHW -> channel-last relayout.  Re-zero the scratch every grid step (the
    # padded border must be exactly zero), then drop each channel plane into its lane strip.
    xs_ref[...] = jnp.zeros_like(xs_ref)
    for c in range(C):                                         # static unroll, C is small
        xs_ref[P:P + H, c * Wp + P:c * Wp + P + W] = x_ref[c].astype(xs_ref.dtype)

    # K row-taps -> K MXU matmuls; f32 accumulator (H x Np x 4 B) easily fits in vregs here.
    acc = jnp.dot(xs_ref[0:H, :].astype(jnp.bfloat16), w_ref[0],
                  preferred_element_type=jnp.float32)
    for dy in range(1, K):                                     # static unroll
        acc = acc + jnp.dot(xs_ref[dy:dy + H, :].astype(jnp.bfloat16), w_ref[dy],
                            preferred_element_type=jnp.float32)
    o_ref[...] = (acc + b_ref[...]).astype(o_ref.dtype)


def block_gabor_pallas(x, adjust_w, adjust_b, *, kernel_size=15, sigma=5.0,
                       lambd=10.0, gamma=0.5, num_theta=NUM_THETA):
    """x: (B,C,H,W). adjust_w: (C, C*T) (1x1 conv weight, squeezed). adjust_b: (C,)."""
    B, C, H, W = x.shape
    K, T, P = kernel_size, num_theta, kernel_size // 2
    assert K % 2 == 1, "BlockGabor fold assumes an odd kernel_size"
    Hp, Wp = H + K - 1, W + K - 1
    Kc = C * Wp                              # matmul contraction width (input lanes)
    N = C * W                                # real output lanes
    Kcp = pl.cdiv(Kc, 128) * 128             # padded contraction (zero rows in the band)
    Np = pl.cdiv(N, 128) * 128               # lane-dense output width (>=128, multiple of 128)

    # ---- static weight fold (parameters only): Gabor bank + channel shuffle + 1x1 adjust
    gab = _gabor_bank(K, sigma, lambd, gamma, T)                       # (T, K, K)
    q = jnp.arange(C * T)
    perm = (q % C) * T + (q // C)    # conv-out channel p = c*T+t reads adjust column (p%C)*T + p//C
    w_eff = adjust_w.astype(jnp.float32)[:, perm].reshape(C, C, T)     # [d, c, t]
    A = jnp.einsum("dct,tij->ijcd", w_eff, gab)                        # (K, K, C_in, C_out)

    # Width-banded per-row weights:
    #   band[i, c*Wp + wj, w*C + d] = A[i, wj-w, c, d]  if 0 <= wj-w < K else 0
    # VMEM cost K*Kcp*Np*2 bytes (~0.5 MiB here).  For large W this must be width-tiled
    # (halo (Wt+K-1)*C per tile, Wt*C a multiple of 128) to fit v7x's 64 MiB VMEM.
    wj = jnp.arange(Wp)[:, None]
    w_ = jnp.arange(W)[None, :]
    j = wj - w_
    valid = (j >= 0) & (j < K)
    band = A[:, jnp.clip(j, 0, K - 1), :, :]                           # (K, Wp, W, C, D)
    band = jnp.where(valid[None, :, :, None, None], band, 0.0)
    band = band.transpose(0, 3, 1, 2, 4).reshape(K, Kc, N)             # [(i), (c,wj), (w,d)]
    band = jnp.pad(band, ((0, 0), (0, Kcp - Kc), (0, Np - N))).astype(jnp.bfloat16)
    bias_row = jnp.pad(jnp.tile(adjust_b.astype(jnp.float32), (W,)),
                       (0, Np - N)).reshape(1, Np)

    kernel = functools.partial(_block_gabor_kernel, K=K, H=H, W=W, C=C, P=P, Wp=Wp)

    def call(single_buffer_weights):
        # Band / bias are grid-invariant; request a single pipeline buffer for them (halves
        # their VMEM footprint).  Fall back to default double buffering if unsupported.
        w_kw = dict(pipeline_mode=pl.Buffered(1)) if single_buffer_weights else {}
        return pl.pallas_call(
            kernel,
            out_shape=jax.ShapeDtypeStruct((B, H, Np), x.dtype),
            grid=(B,),
            in_specs=[
                pl.BlockSpec((None, C, H, W), lambda b: (b, 0, 0, 0)),          # raw NCHW x
                pl.BlockSpec((K, Kcp, Np), lambda b: (0, 0, 0), **w_kw),        # banded weights
                pl.BlockSpec((1, Np), lambda b: (0, 0), **w_kw),                # bias row
            ],
            out_specs=pl.BlockSpec((None, H, Np), lambda b: (b, 0, 0)),
            scratch_shapes=[pltpu.VMEM((Hp, Kcp), jnp.float32)],
            compiler_params=pltpu.CompilerParams(
                dimension_semantics=("parallel",),
                vmem_limit_bytes=32 * 1024 * 1024),
        )(x, band, bias_row)

    try:
        y2d = jax.block_until_ready(call(True))
    except Exception:   # this jax build rejects pl.Buffered(1) -> use default buffering
        y2d = jax.block_until_ready(call(False))

    # (B, H, Np) -> (B, C, H, W): drop the lane padding and un-permute channels.  This stays
    # in XLA on purpose: writing NCHW directly from the kernel would force 16-lane masked
    # stores (the bigger cost per the review).  Output dtype is already x.dtype.
    return jnp.transpose(y2d[..., :N].reshape(B, H, W, C), (0, 3, 1, 2))


def block_gabor_reference(x, adjust_w, adjust_b, *, kernel_size=15, sigma=5.0,
                          lambd=10.0, gamma=0.5, num_theta=NUM_THETA):
    """Pure-JAX reference mirroring the PyTorch forward step by step."""
    B, C, H, W = x.shape
    K, T, P = kernel_size, num_theta, kernel_size // 2
    gab = _gabor_bank(K, sigma, lambd, gamma, T)                       # (T, K, K)
    filt = jnp.tile(gab[None], (C, 1, 1, 1)).reshape(C * T, 1, K, K)   # filter f = c*T + t
    conv = jax.lax.conv_general_dilated(
        x.astype(jnp.float32), filt, window_strides=(1, 1),
        padding=[(P, P), (P, P)],
        dimension_numbers=("NCHW", "OIHW", "NCHW"),
        feature_group_count=C)                                         # (B, C*T, H, W)
    feat = conv.reshape(B, T, C, H, W).transpose(0, 2, 1, 3, 4).reshape(B, C * T, H, W)
    y = jnp.einsum("dp,bphw->bdhw", adjust_w.astype(jnp.float32), feat)
    return y + adjust_b.astype(jnp.float32)[None, :, None, None]


if __name__ == "__main__":
    B, C, H, W = 2, 4, 16, 16
    K, sigma, lambd, gamma = 15, 5.0, 10.0, 0.5
    T = NUM_THETA

    key = jax.random.PRNGKey(0)
    kx, kw, kb = jax.random.split(key, 3)
    x = jax.random.normal(kx, (B, C, H, W), jnp.float32)
    adjust_w = 0.05 * jax.random.normal(kw, (C, C * T), jnp.float32)   # Conv2d(C*12, C, 1) weight
    adjust_b = 0.01 * jax.random.normal(kb, (C,), jnp.float32)         # Conv2d bias

    y = block_gabor_pallas(x, adjust_w, adjust_b, kernel_size=K, sigma=sigma,
                           lambd=lambd, gamma=gamma)
    y = jax.block_until_ready(y)

    y_ref = block_gabor_reference(x, adjust_w, adjust_b, kernel_size=K, sigma=sigma,
                                  lambd=lambd, gamma=gamma)
    assert y.shape == (B, C, H, W)
    assert bool(jnp.all(jnp.isfinite(y)))
    assert bool(jnp.allclose(y, y_ref, rtol=2e-2, atol=2e-2)), "mismatch vs reference"
    print("KERNEL_OK")
</pallas_src>

<mosaic_0001>
module attributes {stable_mosaic.version = 11 : i64} {
  func.func @_block_gabor_kernel(%arg0: i32, %arg1: memref<1x4x16x16xf32, #tpu.memory_space<vmem>>, %arg2: memref<15x128x128xbf16, #tpu.memory_space<vmem>>, %arg3: memref<1x128xf32, #tpu.memory_space<vmem>>, %arg4: memref<1x16x128xf32, #tpu.memory_space<vmem>>, %arg5: memref<30x128xf32, #tpu.memory_space<vmem>>) attributes {dimension_semantics = [#tpu.dimension_semantics<parallel>], iteration_bounds = array<i64: 2>, scalar_prefetch = 0 : i64, scratch_operands = 1 : i64, tpu.core_type = #tpu.core_type<tc>, window_params = [{transform_indices = @transform_0, window_bounds = array<i64: 1, 4, 16, 16>}, {pipeline_mode = #tpu.pipeline_mode<synchronous>, transform_indices = @transform_1, window_bounds = array<i64: 15, 128, 128>}, {pipeline_mode = #tpu.pipeline_mode<synchronous>, transform_indices = @transform_2, window_bounds = array<i64: 1, 128>}, {transform_indices = @transform_3, window_bounds = array<i64: 1, 16, 128>}]} {
    %cst = arith.constant 0.000000e+00 : f32
    %0 = vector.broadcast %cst : f32 to vector<30x128xf32>
    %c0 = arith.constant 0 : index
    %c0_0 = arith.constant 0 : index
    %1 = vector.load %arg5[%c0, %c0_0] : memref<30x128xf32, #tpu.memory_space<vmem>>, vector<30x128xf32>
    tpu.vector_store %arg5[%c0, %c0_0], %0 {strides = array<i32>} : memref<30x128xf32, #tpu.memory_space<vmem>>, vector<30x128xf32>,
    %c0_1 = arith.constant 0 : index
    %c0_2 = arith.constant 0 : index
    %c0_3 = arith.constant 0 : index
    %c0_4 = arith.constant 0 : index
    %2 = vector.load %arg1[%c0_1, %c0_2, %c0_3, %c0_4] : memref<1x4x16x16xf32, #tpu.memory_space<vmem>>, vector<1x1x16x16xf32>
    %3 = vector.shape_cast %2 : vector<1x1x16x16xf32> to vector<16x16xf32>
    %c7 = arith.constant 7 : index
    %c7_5 = arith.constant 7 : index
    %4 = vector.load %arg5[%c7, %c7_5] : memref<30x128xf32, #tpu.memory_space<vmem>>, vector<16x16xf32>
    tpu.vector_store %arg5[%c7, %c7_5], %3 {strides = array<i32>} : memref<30x128xf32, #tpu.memory_space<vmem>>, vector<16x16xf32>,
    %c0_6 = arith.constant 0 : index
    %c1 = arith.constant 1 : index
    %c0_7 = arith.constant 0 : index
    %c0_8 = arith.constant 0 : index
    %5 = vector.load %arg1[%c0_6, %c1, %c0_7, %c0_8] : memref<1x4x16x16xf32, #tpu.memory_space<vmem>>, vector<1x1x16x16xf32>
    %6 = vector.shape_cast %5 : vector<1x1x16x16xf32> to vector<16x16xf32>
    %c7_9 = arith.constant 7 : index
    %c37 = arith.constant 37 : index
    %7 = vector.load %arg5[%c7_9, %c37] : memref<30x128xf32, #tpu.memory_space<vmem>>, vector<16x16xf32>
    tpu.vector_store %arg5[%c7_9, %c37], %6 {strides = array<i32>} : memref<30x128xf32, #tpu.memory_space<vmem>>, vector<16x16xf32>,
    %c0_10 = arith.constant 0 : index
    %c2 = arith.constant 2 : index
    %c0_11 = arith.constant 0 : index
    %c0_12 = arith.constant 0 : index
    %8 = vector.load %arg1[%c0_10, %c2, %c0_11, %c0_12] : memref<1x4x16x16xf32, #tpu.memory_space<vmem>>, vector<1x1x16x16xf32>
    %9 = vector.shape_cast %8 : vector<1x1x16x16xf32> to vector<16x16xf32>
    %c7_13 = arith.constant 7 : index
    %c67 = arith.constant 67 : index
    %10 = vector.load %arg5[%c7_13, %c67] : memref<30x128xf32, #tpu.memory_space<vmem>>, vector<16x16xf32>
    tpu.vector_store %arg5[%c7_13, %c67], %9 {strides = array<i32>} : memref<30x128xf32, #tpu.memory_space<vmem>>, vector<16x16xf32>,
    %c0_14 = arith.constant 0 : index
    %c3 = arith.constant 3 : index
    %c0_15 = arith.constant 0 : index
    %c0_16 = arith.constant 0 : index
    %11 = vector.load %arg1[%c0_14, %c3, %c0_15, %c0_16] : memref<1x4x16x16xf32, #tpu.memory_space<vmem>>, vector<1x1x16x16xf32>
    %12 = vector.shape_cast %11 : vector<1x1x16x16xf32> to vector<16x16xf32>
    %c7_17 = arith.constant 7 : index
    %c97 = arith.constant 97 : index
    %13 = vector.load %arg5[%c7_17, %c97] : memref<30x128xf32, #tpu.memory_space<vmem>>, vector<16x16xf32>
    tpu.vector_store %arg5[%c7_17, %c97], %12 {strides = array<i32>} : memref<30x128xf32, #tpu.memory_space<vmem>>, vector<16x16xf32>,
    %c0_18 = arith.constant 0 : index
    %c0_19 = arith.constant 0 : index
    %14 = vector.load %arg5[%c0_18, %c0_19] : memref<30x128xf32, #tpu.memory_space<vmem>>, vector<16x128xf32>
    %15 = arith.truncf %14 : vector<16x128xf32> to vector<16x128xbf16>
    %c0_20 = arith.constant 0 : index
    %c0_21 = arith.constant 0 : index
    %c0_22 = arith.constant 0 : index
    %16 = vector.load %arg2[%c0_20, %c0_21, %c0_22] : memref<15x128x128xbf16, #tpu.memory_space<vmem>>, vector<1x128x128xbf16>
    %17 = vector.shape_cast %16 : vector<1x128x128xbf16> to vector<128x128xbf16>
    %cst_23 = arith.constant dense<0.000000e+00> : vector<16x128xf32>
    %18 = tpu.matmul %15, %17, %cst_23 {dimension_numbers = #tpu.dot_dimension_numbers<[1], [0], [0], [1], [0, 0, 1, 1], [], []>} : vector<16x128xbf16>, vector<128x128xbf16>, vector<16x128xf32> -> vector<16x128xf32>
    %c1_24 = arith.constant 1 : index
    %c0_25 = arith.constant 0 : index
    %19 = vector.load %arg5[%c1_24, %c0_25] : memref<30x128xf32, #tpu.memory_space<vmem>>, vector<16x128xf32>
    %20 = arith.truncf %19 : vector<16x128xf32> to vector<16x128xbf16>
    %c1_26 = arith.constant 1 : index
    %c0_27 = arith.constant 0 : index
    %c0_28 = arith.constant 0 : index
    %21 = vector.load %arg2[%c1_26, %c0_27, %c0_28] : memref<15x128x128xbf16, #tpu.memory_space<vmem>>, vector<1x128x128xbf16>
    %22 = vector.shape_cast %21 : vector<1x128x128xbf16> to vector<128x128xbf16>
    %cst_29 = arith.constant dense<0.000000e+00> : vector<16x128xf32>
    %23 = tpu.matmul %20, %22, %cst_29 {dimension_numbers = #tpu.dot_dimension_numbers<[1], [0], [0], [1], [0, 0, 1, 1], [], []>} : vector<16x128xbf16>, vector<128x128xbf16>, vector<16x128xf32> -> vector<16x128xf32>
    %24 = arith.addf %18, %23 : vector<16x128xf32>
    %c2_30 = arith.constant 2 : index
    %c0_31 = arith.constant 0 : index
    %25 = vector.load %arg5[%c2_30, %c0_31] : memref<30x128xf32, #tpu.memory_space<vmem>>, vector<16x128xf32>
    %26 = arith.truncf %25 : vector<16x128xf32> to vector<16x128xbf16>
    %c2_32 = arith.constant 2 : index
    %c0_33 = arith.constant 0 : index
    %c0_34 = arith.constant 0 : index
    %27 = vector.load %arg2[%c2_32, %c0_33, %c0_34] : memref<15x128x128xbf16, #tpu.memory_space<vmem>>, vector<1x128x128xbf16>
    %28 = vector.shape_cast %27 : vector<1x128x128xbf16> to vector<128x128xbf16>
    %cst_35 = arith.constant dense<0.000000e+00> : vector<16x128xf32>
    %29 = tpu.matmul %26, %28, %cst_35 {dimension_numbers = #tpu.dot_dimension_numbers<[1], [0], [0], [1], [0, 0, 1, 1], [], []>} : vector<16x128xbf16>, vector<128x128xbf16>, vector<16x128xf32> -> vector<16x128xf32>
    %30 = arith.addf %24, %29 : vector<16x128xf32>
    %c3_36 = arith.constant 3 : index
    %c0_37 = arith.constant 0 : index
    %31 = vector.load %arg5[%c3_36, %c0_37] : memref<30x128xf32, #tpu.memory_space<vmem>>, vector<16x128xf32>
    %32 = arith.truncf %31 : vector<16x128xf32> to vector<16x128xbf16>
    %c3_38 = arith.constant 3 : index
    %c0_39 = arith.constant 0 : index
    %c0_40 = arith.constant 0 : index
    %33 = vector.load %arg2[%c3_38, %c0_39, %c0_40] : memref<15x128x128xbf16, #tpu.memory_space<vmem>>, vector<1x128x128xbf16>
    %34 = vector.shape_cast %33 : vector<1x128x128xbf16> to vector<128x128xbf16>
    %cst_41 = arith.constant dense<0.000000e+00> : vector<16x128xf32>
    %35 = tpu.matmul %32, %34, %cst_41 {dimension_numbers = #tpu.dot_dimension_numbers<[1], [0], [0], [1], [0, 0, 1, 1], [], []>} : vector<16x128xbf16>, vector<128x128xbf16>, vector<16x128xf32> -> vector<16x128xf32>
    %36 = arith.addf %30, %35 : vector<16x128xf32>
    %c4 = arith.constant 4 : index
    %c0_42 = arith.constant 0 : index
    %37 = vector.load %arg5[%c4, %c0_42] : memref<30x128xf32, #tpu.memory_space<vmem>>, vector<16x128xf32>
    %38 = arith.truncf %37 : vector<16x128xf32> to vector<16x128xbf16>
    %c4_43 = arith.constant 4 : index
    %c0_44 = arith.constant 0 : index
    %c0_45 = arith.constant 0 : index
    %39 = vector.load %arg2[%c4_43, %c0_44, %c0_45] : memref<15x128x128xbf16, #tpu.memory_space<vmem>>, vector<1x128x128xbf16>
    %40 = vector.shape_cast %39 : vector<1x128x128xbf16> to vector<128x128xbf16>
    %cst_46 = arith.constant dense<0.000000e+00> : vector<16x128xf32>
    %41 = tpu.matmul %38, %40, %cst_46 {dimension_numbers = #tpu.dot_dimension_numbers<[1], [0], [0], [1], [0, 0, 1, 1], [], []>} : vector<16x128xbf16>, vector<128x128xbf16>, vector<16x128xf32> -> vector<16x128xf32>
    %42 = arith.addf %36, %41 : vector<16x128xf32>
    %c5 = arith.constant 5 : index
    %c0_47 = arith.constant 0 : index
    %43 = vector.load %arg5[%c5, %c0_47] : memref<30x128xf32, #tpu.memory_space<vmem>>, vector<16x128xf32>
    %44 = arith.truncf %43 : vector<16x128xf32> to vector<16x128xbf16>
    %c5_48 = arith.constant 5 : index
    %c0_49 = arith.constant 0 : index
    %c0_50 = arith.constant 0 : index
    %45 = vector.load %arg2[%c5_48, %c0_49, %c0_50] : memref<15x128x128xbf16, #tpu.memory_space<vmem>>, vector<1x128x128xbf16>
    %46 = vector.shape_cast %45 : vector<1x128x128xbf16> to vector<128x128xbf16>
    %cst_51 = arith.constant dense<0.000000e+00> : vector<16x128xf32>
    %47 = tpu.matmul %44, %46, %cst_51 {dimension_numbers = #tpu.dot_dimension_numbers<[1], [0], [0], [1], [0, 0, 1, 1], [], []>} : vector<16x128xbf16>, vector<128x128xbf16>, vector<16x128xf32> -> vector<16x128xf32>
    %48 = arith.addf %42, %47 : vector<16x128xf32>
    %c6 = arith.constant 6 : index
    %c0_52 = arith.constant 0 : index
    %49 = vector.load %arg5[%c6, %c0_52] : memref<30x128xf32, #tpu.memory_space<vmem>>, vector<16x128xf32>
    %50 = arith.truncf %49 : vector<16x128xf32> to vector<16x128xbf16>
    %c6_53 = arith.constant 6 : index
    %c0_54 = arith.constant 0 : index
    %c0_55 = arith.constant 0 : index
    %51 = vector.load %arg2[%c6_53, %c0_54, %c0_55] : memref<15x128x128xbf16, #tpu.memory_space<vmem>>, vector<1x128x128xbf16>
    %52 = vector.shape_cast %51 : vector<1x128x128xbf16> to vector<128x128xbf16>
    %cst_56 = arith.constant dense<0.000000e+00> : vector<16x128xf32>
    %53 = tpu.matmul %50, %52, %cst_56 {dimension_numbers = #tpu.dot_dimension_numbers<[1], [0], [0], [1], [0, 0, 1, 1], [], []>} : vector<16x128xbf16>, vector<128x128xbf16>, vector<16x128xf32> -> vector<16x128xf32>
    %54 = arith.addf %48, %53 : vector<16x128xf32>
    %c7_57 = arith.constant 7 : index
    %c0_58 = arith.constant 0 : index
    %55 = vector.load %arg5[%c7_57, %c0_58] : memref<30x128xf32, #tpu.memory_space<vmem>>, vector<16x128xf32>
    %56 = arith.truncf %55 : vector<16x128xf32> to vector<16x128xbf16>
    %c7_59 = arith.constant 7 : index
    %c0_60 = arith.constant 0 : index
    %c0_61 = arith.constant 0 : index
    %57 = vector.load %arg2[%c7_59, %c0_60, %c0_61] : memref<15x128x128xbf16, #tpu.memory_space<vmem>>, vector<1x128x128xbf16>
    %58 = vector.shape_cast %57 : vector<1x128x128xbf16> to vector<128x128xbf16>
    %cst_62 = arith.constant dense<0.000000e+00> : vector<16x128xf32>
    %59 = tpu.matmul %56, %58, %cst_62 {dimension_numbers = #tpu.dot_dimension_numbers<[1], [0], [0], [1], [0, 0, 1, 1], [], []>} : vector<16x128xbf16>, vector<128x128xbf16>, vector<16x128xf32> -> vector<16x128xf32>
    %60 = arith.addf %54, %59 : vector<16x128xf32>
    %c8 = arith.constant 8 : index
    %c0_63 = arith.constant 0 : index
    %61 = vector.load %arg5[%c8, %c0_63] : memref<30x128xf32, #tpu.memory_space<vmem>>, vector<16x128xf32>
    %62 = arith.truncf %61 : vector<16x128xf32> to vector<16x128xbf16>
    %c8_64 = arith.constant 8 : index
    %c0_65 = arith.constant 0 : index
    %c0_66 = arith.constant 0 : index
    %63 = vector.load %arg2[%c8_64, %c0_65, %c0_66] : memref<15x128x128xbf16, #tpu.memory_space<vmem>>, vector<1x128x128xbf16>
    %64 = vector.shape_cast %63 : vector<1x128x128xbf16> to vector<128x128xbf16>
    %cst_67 = arith.constant dense<0.000000e+00> : vector<16x128xf32>
    %65 = tpu.matmul %62, %64, %cst_67 {dimension_numbers = #tpu.dot_dimension_numbers<[1], [0], [0], [1], [0, 0, 1, 1], [], []>} : vector<16x128xbf16>, vector<128x128xbf16>, vector<16x128xf32> -> vector<16x128xf32>
    %66 = arith.addf %60, %65 : vector<16x128xf32>
    %c9 = arith.constant 9 : index
    %c0_68 = arith.constant 0 : index
    %67 = vector.load %arg5[%c9, %c0_68] : memref<30x128xf32, #tpu.memory_space<vmem>>, vector<16x128xf32>
    %68 = arith.truncf %67 : vector<16x128xf32> to vector<16x128xbf16>
    %c9_69 = arith.constant 9 : index
    %c0_70 = arith.constant 0 : index
    %c0_71 = arith.constant 0 : index
    %69 = vector.load %arg2[%c9_69, %c0_70, %c0_71] : memref<15x128x128xbf16, #tpu.memory_space<vmem>>, vector<1x128x128xbf16>
    %70 = vector.shape_cast %69 : vector<1x128x128xbf16> to vector<128x128xbf16>
    %cst_72 = arith.constant dense<0.000000e+00> : vector<16x128xf32>
    %71 = tpu.matmul %68, %70, %cst_72 {dimension_numbers = #tpu.dot_dimension_numbers<[1], [0], [0], [1], [0, 0, 1, 1], [], []>} : vector<16x128xbf16>, vector<128x128xbf16>, vector<16x128xf32> -> vector<16x128xf32>
    %72 = arith.addf %66, %71 : vector<16x128xf32>
    %c10 = arith.constant 10 : index
    %c0_73 = arith.constant 0 : index
    %73 = vector.load %arg5[%c10, %c0_73] : memref<30x128xf32, #tpu.memory_space<vmem>>, vector<16x128xf32>
    %74 = arith.truncf %73 : vector<16x128xf32> to vector<16x128xbf16>
    %c10_74 = arith.constant 10 : index
    %c0_75 = arith.constant 0 : index
    %c0_76 = arith.constant 0 : index
    %75 = vector.load %arg2[%c10_74, %c0_75, %c0_76] : memref<15x128x128xbf16, #tpu.memory_space<vmem>>, vector<1x128x128xbf16>
    %76 = vector.shape_cast %75 : vector<1x128x128xbf16> to vector<128x128xbf16>
    %cst_77 = arith.constant dense<0.000000e+00> : vector<16x128xf32>
    %77 = tpu.matmul %74, %76, %cst_77 {dimension_numbers = #tpu.dot_dimension_numbers<[1], [0], [0], [1], [0, 0, 1, 1], [], []>} : vector<16x128xbf16>, vector<128x128xbf16>, vector<16x128xf32> -> vector<16x128xf32>
    %78 = arith.addf %72, %77 : vector<16x128xf32>
    %c11 = arith.constant 11 : index
    %c0_78 = arith.constant 0 : index
    %79 = vector.load %arg5[%c11, %c0_78] : memref<30x128xf32, #tpu.memory_space<vmem>>, vector<16x128xf32>
    %80 = arith.truncf %79 : vector<16x128xf32> to vector<16x128xbf16>
    %c11_79 = arith.constant 11 : index
    %c0_80 = arith.constant 0 : index
    %c0_81 = arith.constant 0 : index
    %81 = vector.load %arg2[%c11_79, %c0_80, %c0_81] : memref<15x128x128xbf16, #tpu.memory_space<vmem>>, vector<1x128x128xbf16>
    %82 = vector.shape_cast %81 : vector<1x128x128xbf16> to vector<128x128xbf16>
    %cst_82 = arith.constant dense<0.000000e+00> : vector<16x128xf32>
    %83 = tpu.matmul %80, %82, %cst_82 {dimension_numbers = #tpu.dot_dimension_numbers<[1], [0], [0], [1], [0, 0, 1, 1], [], []>} : vector<16x128xbf16>, vector<128x128xbf16>, vector<16x128xf32> -> vector<16x128xf32>
    %84 = arith.addf %78, %83 : vector<16x128xf32>
    %c12 = arith.constant 12 : index
    %c0_83 = arith.constant 0 : index
    %85 = vector.load %arg5[%c12, %c0_83] : memref<30x128xf32, #tpu.memory_space<vmem>>, vector<16x128xf32>
    %86 = arith.truncf %85 : vector<16x128xf32> to vector<16x128xbf16>
    %c12_84 = arith.constant 12 : index
    %c0_85 = arith.constant 0 : index
    %c0_86 = arith.constant 0 : index
    %87 = vector.load %arg2[%c12_84, %c0_85, %c0_86] : memref<15x128x128xbf16, #tpu.memory_space<vmem>>, vector<1x128x128xbf16>
    %88 = vector.shape_cast %87 : vector<1x128x128xbf16> to vector<128x128xbf16>
    %cst_87 = arith.constant dense<0.000000e+00> : vector<16x128xf32>
    %89 = tpu.matmul %86, %88, %cst_87 {dimension_numbers = #tpu.dot_dimension_numbers<[1], [0], [0], [1], [0, 0, 1, 1], [], []>} : vector<16x128xbf16>, vector<128x128xbf16>, vector<16x128xf32> -> vector<16x128xf32>
    %90 = arith.addf %84, %89 : vector<16x128xf32>
    %c13 = arith.constant 13 : index
    %c0_88 = arith.constant 0 : index
    %91 = vector.load %arg5[%c13, %c0_88] : memref<30x128xf32, #tpu.memory_space<vmem>>, vector<16x128xf32>
    %92 = arith.truncf %91 : vector<16x128xf32> to vector<16x128xbf16>
    %c13_89 = arith.constant 13 : index
    %c0_90 = arith.constant 0 : index
    %c0_91 = arith.constant 0 : index
    %93 = vector.load %arg2[%c13_89, %c0_90, %c0_91] : memref<15x128x128xbf16, #tpu.memory_space<vmem>>, vector<1x128x128xbf16>
    %94 = vector.shape_cast %93 : vector<1x128x128xbf16> to vector<128x128xbf16>
    %cst_92 = arith.constant dense<0.000000e+00> : vector<16x128xf32>
    %95 = tpu.matmul %92, %94, %cst_92 {dimension_numbers = #tpu.dot_dimension_numbers<[1], [0], [0], [1], [0, 0, 1, 1], [], []>} : vector<16x128xbf16>, vector<128x128xbf16>, vector<16x128xf32> -> vector<16x128xf32>
    %96 = arith.addf %90, %95 : vector<16x128xf32>
    %c14 = arith.constant 14 : index
    %c0_93 = arith.constant 0 : index
    %97 = vector.load %arg5[%c14, %c0_93] : memref<30x128xf32, #tpu.memory_space<vmem>>, vector<16x128xf32>
    %98 = arith.truncf %97 : vector<16x128xf32> to vector<16x128xbf16>
    %c14_94 = arith.constant 14 : index
    %c0_95 = arith.constant 0 : index
    %c0_96 = arith.constant 0 : index
    %99 = vector.load %arg2[%c14_94, %c0_95, %c0_96] : memref<15x128x128xbf16, #tpu.memory_space<vmem>>, vector<1x128x128xbf16>
    %100 = vector.shape_cast %99 : vector<1x128x128xbf16> to vector<128x128xbf16>
    %cst_97 = arith.constant dense<0.000000e+00> : vector<16x128xf32>
    %101 = tpu.matmul %98, %100, %cst_97 {dimension_numbers = #tpu.dot_dimension_numbers<[1], [0], [0], [1], [0, 0, 1, 1], [], []>} : vector<16x128xbf16>, vector<128x128xbf16>, vector<16x128xf32> -> vector<16x128xf32>
    %102 = arith.addf %96, %101 : vector<16x128xf32>
    %c0_98 = arith.constant 0 : index
    %c0_99 = arith.constant 0 : index
    %103 = vector.load %arg3[%c0_98, %c0_99] : memref<1x128xf32, #tpu.memory_space<vmem>>, vector<1x128xf32>
    %104 = vector.broadcast %103 : vector<1x128xf32> to vector<16x128xf32>
    %105 = arith.addf %102, %104 : vector<16x128xf32>
    %c0_100 = arith.constant 0 : index
    %c0_101 = arith.constant 0 : index
    %c0_102 = arith.constant 0 : index
    %106 = vector.load %arg4[%c0_100, %c0_101, %c0_102] : memref<1x16x128xf32, #tpu.memory_space<vmem>>, vector<1x16x128xf32>
    %107 = vector.shape_cast %106 : vector<1x16x128xf32> to vector<16x128xf32>
    %108 = vector.shape_cast %105 : vector<16x128xf32> to vector<1x16x128xf32>
    tpu.vector_store %arg4[%c0_100, %c0_101, %c0_102], %108 {strides = array<i32>} : memref<1x16x128xf32, #tpu.memory_space<vmem>>, vector<1x16x128xf32>,
    return
  }
  func.func @transform_0(%arg0: i32) -> (i32, i32, i32, i32) {
    %c0_i32 = arith.constant 0 : i32
    %c0_i32_0 = arith.constant 0 : i32
    %c0_i32_1 = arith.constant 0 : i32
    %c0_i32_2 = arith.constant 0 : i32
    return %arg0, %c0_i32, %c0_i32_0, %c0_i32_1 : i32, i32, i32, i32
  }
  func.func @transform_1(%arg0: i32) -> (i32, i32, i32) {
    %c0_i32 = arith.constant 0 : i32
    %c0_i32_0 = arith.constant 0 : i32
    %c0_i32_1 = arith.constant 0 : i32
    %c0_i32_2 = arith.constant 0 : i32
    return %c0_i32, %c0_i32_0, %c0_i32_1 : i32, i32, i32
  }
  func.func @transform_2(%arg0: i32) -> (i32, i32) {
    %c0_i32 = arith.constant 0 : i32
    %c0_i32_0 = arith.constant 0 : i32
    %c0_i32_1 = arith.constant 0 : i32
    return %c0_i32, %c0_i32_0 : i32, i32
  }
  func.func @transform_3(%arg0: i32) -> (i32, i32, i32) {
    %c0_i32 = arith.constant 0 : i32
    %c0_i32_0 = arith.constant 0 : i32
    %c0_i32_1 = arith.constant 0 : i32
    return %arg0, %c0_i32, %c0_i32_0 : i32, i32, i32
  }
}

module attributes {stable_mosaic.version = 11 : i64} {
  func.func @_block_gabor_kernel(%arg0: i32, %arg1: memref<1x4x16x16xf32, #tpu.memory_space<vmem>>, %arg2: memref<15x128x128xbf16, #tpu.memory_space<vmem>>, %arg3: memref<1x128xf32, #tpu.memory_space<vmem>>, %arg4: memref<1x16x128xf32, #tpu.memory_space<vmem>>, %arg5: memref<30x128xf32, #tpu.memory_space<vmem>>) attributes {dimension_semantics = [#tpu.dimension_semantics<parallel>], iteration_bounds = array<i64: 2>, scalar_prefetch = 0 : i64, scratch_operands = 1 : i64, tpu.core_type = #tpu.core_type<tc>, window_params = [{transform_indices = @transform_0, window_bounds = array<i64: 1, 4, 16, 16>}, {pipeline_mode = #tpu.pipeline_mode<synchronous>, transform_indices = @transform_1, window_bounds = array<i64: 15, 128, 128>}, {pipeline_mode = #tpu.pipeline_mode<synchronous>, transform_indices = @transform_2, window_bounds = array<i64: 1, 128>}, {transform_indices = @transform_3, window_bounds = array<i64: 1, 16, 128>}]} {
    %cst = arith.constant 0.000000e+00 : f32
    %0 = vector.broadcast %cst : f32 to vector<30x128xf32>
    %c0 = arith.constant 0 : index
    %c0_0 = arith.constant 0 : index
    %1 = vector.load %arg5[%c0, %c0_0] : memref<30x128xf32, #tpu.memory_space<vmem>>, vector<30x128xf32>
    tpu.vector_store %arg5[%c0, %c0_0], %0 {strides = array<i32>} : memref<30x128xf32, #tpu.memory_space<vmem>>, vector<30x128xf32>,
    %c0_1 = arith.constant 0 : index
    %c0_2 = arith.constant 0 : index
    %c0_3 = arith.constant 0 : index
    %c0_4 = arith.constant 0 : index
    %2 = vector.load %arg1[%c0_1, %c0_2, %c0_3, %c0_4] : memref<1x4x16x16xf32, #tpu.memory_space<vmem>>, vector<1x1x16x16xf32>
    %3 = vector.shape_cast %2 : vector<1x1x16x16xf32> to vector<16x16xf32>
    %c7 = arith.constant 7 : index
    %c7_5 = arith.constant 7 : index
    %4 = vector.load %arg5[%c7, %c7_5] : memref<30x128xf32, #tpu.memory_space<vmem>>, vector<16x16xf32>
    tpu.vector_store %arg5[%c7, %c7_5], %3 {strides = array<i32>} : memref<30x128xf32, #tpu.memory_space<vmem>>, vector<16x16xf32>,
    %c0_6 = arith.constant 0 : index
    %c1 = arith.constant 1 : index
    %c0_7 = arith.constant 0 : index
    %c0_8 = arith.constant 0 : index
    %5 = vector.load %arg1[%c0_6, %c1, %c0_7, %c0_8] : memref<1x4x16x16xf32, #tpu.memory_space<vmem>>, vector<1x1x16x16xf32>
    %6 = vector.shape_cast %5 : vector<1x1x16x16xf32> to vector<16x16xf32>
    %c7_9 = arith.constant 7 : index
    %c37 = arith.constant 37 : index
    %7 = vector.load %arg5[%c7_9, %c37] : memref<30x128xf32, #tpu.memory_space<vmem>>, vector<16x16xf32>
    tpu.vector_store %arg5[%c7_9, %c37], %6 {strides = array<i32>} : memref<30x128xf32, #tpu.memory_space<vmem>>, vector<16x16xf32>,
    %c0_10 = arith.constant 0 : index
    %c2 = arith.constant 2 : index
    %c0_11 = arith.constant 0 : index
    %c0_12 = arith.constant 0 : index
    %8 = vector.load %arg1[%c0_10, %c2, %c0_11, %c0_12] : memref<1x4x16x16xf32, #tpu.memory_space<vmem>>, vector<1x1x16x16xf32>
    %9 = vector.shape_cast %8 : vector<1x1x16x16xf32> to vector<16x16xf32>
    %c7_13 = arith.constant 7 : index
    %c67 = arith.constant 67 : index
    %10 = vector.load %arg5[%c7_13, %c67] : memref<30x128xf32, #tpu.memory_space<vmem>>, vector<16x16xf32>
    tpu.vector_store %arg5[%c7_13, %c67], %9 {strides = array<i32>} : memref<30x128xf32, #tpu.memory_space<vmem>>, vector<16x16xf32>,
    %c0_14 = arith.constant 0 : index
    %c3 = arith.constant 3 : index
    %c0_15 = arith.constant 0 : index
    %c0_16 = arith.constant 0 : index
    %11 = vector.load %arg1[%c0_14, %c3, %c0_15, %c0_16] : memref<1x4x16x16xf32, #tpu.memory_space<vmem>>, vector<1x1x16x16xf32>
    %12 = vector.shape_cast %11 : vector<1x1x16x16xf32> to vector<16x16xf32>
    %c7_17 = arith.constant 7 : index
    %c97 = arith.constant 97 : index
    %13 = vector.load %arg5[%c7_17, %c97] : memref<30x128xf32, #tpu.memory_space<vmem>>, vector<16x16xf32>
    tpu.vector_store %arg5[%c7_17, %c97], %12 {strides = array<i32>} : memref<30x128xf32, #tpu.memory_space<vmem>>, vector<16x16xf32>,
    %c0_18 = arith.constant 0 : index
    %c0_19 = arith.constant 0 : index
    %14 = vector.load %arg5[%c0_18, %c0_19] : memref<30x128xf32, #tpu.memory_space<vmem>>, vector<16x128xf32>
    %15 = arith.truncf %14 : vector<16x128xf32> to vector<16x128xbf16>
    %c0_20 = arith.constant 0 : index
    %c0_21 = arith.constant 0 : index
    %c0_22 = arith.constant 0 : index
    %16 = vector.load %arg2[%c0_20, %c0_21, %c0_22] : memref<15x128x128xbf16, #tpu.memory_space<vmem>>, vector<1x128x128xbf16>
    %17 = vector.shape_cast %16 : vector<1x128x128xbf16> to vector<128x128xbf16>
    %cst_23 = arith.constant dense<0.000000e+00> : vector<16x128xf32>
    %18 = tpu.matmul %15, %17, %cst_23 {dimension_numbers = #tpu.dot_dimension_numbers<[1], [0], [0], [1], [0, 0, 1, 1], [], []>} : vector<16x128xbf16>, vector<128x128xbf16>, vector<16x128xf32> -> vector<16x128xf32>
    %c1_24 = arith.constant 1 : index
    %c0_25 = arith.constant 0 : index
    %19 = vector.load %arg5[%c1_24, %c0_25] : memref<30x128xf32, #tpu.memory_space<vmem>>, vector<16x128xf32>
    %20 = arith.truncf %19 : vector<16x128xf32> to vector<16x128xbf16>
    %c1_26 = arith.constant 1 : index
    %c0_27 = arith.constant 0 : index
    %c0_28 = arith.constant 0 : index
    %21 = vector.load %arg2[%c1_26, %c0_27, %c0_28] : memref<15x128x128xbf16, #tpu.memory_space<vmem>>, vector<1x128x128xbf16>
    %22 = vector.shape_cast %21 : vector<1x128x128xbf16> to vector<128x128xbf16>
    %cst_29 = arith.constant dense<0.000000e+00> : vector<16x128xf32>
    %23 = tpu.matmul %20, %22, %cst_29 {dimension_numbers = #tpu.dot_dimension_numbers<[1], [0], [0], [1], [0, 0, 1, 1], [], []>} : vector<16x128xbf16>, vector<128x128xbf16>, vector<16x128xf32> -> vector<16x128xf32>
    %24 = arith.addf %18, %23 : vector<16x128xf32>
    %c2_30 = arith.constant 2 : index
    %c0_31 = arith.constant 0 : index
    %25 = vector.load %arg5[%c2_30, %c0_31] : memref<30x128xf32, #tpu.memory_space<vmem>>, vector<16x128xf32>
    %26 = arith.truncf %25 : vector<16x128xf32> to vector<16x128xbf16>
    %c2_32 = arith.constant 2 : index
    %c0_33 = arith.constant 0 : index
    %c0_34 = arith.constant 0 : index
    %27 = vector.load %arg2[%c2_32, %c0_33, %c0_34] : memref<15x128x128xbf16, #tpu.memory_space<vmem>>, vector<1x128x128xbf16>
    %28 = vector.shape_cast %27 : vector<1x128x128xbf16> to vector<128x128xbf16>
    %cst_35 = arith.constant dense<0.000000e+00> : vector<16x128xf32>
    %29 = tpu.matmul %26, %28, %cst_35 {dimension_numbers = #tpu.dot_dimension_numbers<[1], [0], [0], [1], [0, 0, 1, 1], [], []>} : vector<16x128xbf16>, vector<128x128xbf16>, vector<16x128xf32> -> vector<16x128xf32>
    %30 = arith.addf %24, %29 : vector<16x128xf32>
    %c3_36 = arith.constant 3 : index
    %c0_37 = arith.constant 0 : index
    %31 = vector.load %arg5[%c3_36, %c0_37] : memref<30x128xf32, #tpu.memory_space<vmem>>, vector<16x128xf32>
    %32 = arith.truncf %31 : vector<16x128xf32> to vector<16x128xbf16>
    %c3_38 = arith.constant 3 : index
    %c0_39 = arith.constant 0 : index
    %c0_40 = arith.constant 0 : index
    %33 = vector.load %arg2[%c3_38, %c0_39, %c0_40] : memref<15x128x128xbf16, #tpu.memory_space<vmem>>, vector<1x128x128xbf16>
    %34 = vector.shape_cast %33 : vector<1x128x128xbf16> to vector<128x128xbf16>
    %cst_41 = arith.constant dense<0.000000e+00> : vector<16x128xf32>
    %35 = tpu.matmul %32, %34, %cst_41 {dimension_numbers = #tpu.dot_dimension_numbers<[1], [0], [0], [1], [0, 0, 1, 1], [], []>} : vector<16x128xbf16>, vector<128x128xbf16>, vector<16x128xf32> -> vector<16x128xf32>
    %36 = arith.addf %30, %35 : vector<16x128xf32>
    %c4 = arith.constant 4 : index
    %c0_42 = arith.constant 0 : index
    %37 = vector.load %arg5[%c4, %c0_42] : memref<30x128xf32, #tpu.memory_space<vmem>>, vector<16x128xf32>
    %38 = arith.truncf %37 : vector<16x128xf32> to vector<16x128xbf16>
    %c4_43 = arith.constant 4 : index
    %c0_44 = arith.constant 0 : index
    %c0_45 = arith.constant 0 : index
    %39 = vector.load %arg2[%c4_43, %c0_44, %c0_45] : memref<15x128x128xbf16, #tpu.memory_space<vmem>>, vector<1x128x128xbf16>
    %40 = vector.shape_cast %39 : vector<1x128x128xbf16> to vector<128x128xbf16>
    %cst_46 = arith.constant dense<0.000000e+00> : vector<16x128xf32>
    %41 = tpu.matmul %38, %40, %cst_46 {dimension_numbers = #tpu.dot_dimension_numbers<[1], [0], [0], [1], [0, 0, 1, 1], [], []>} : vector<16x128xbf16>, vector<128x128xbf16>, vector<16x128xf32> -> vector<16x128xf32>
    %42 = arith.addf %36, %41 : vector<16x128xf32>
    %c5 = arith.constant 5 : index
    %c0_47 = arith.constant 0 : index
    %43 = vector.load %arg5[%c5, %c0_47] : memref<30x128xf32, #tpu.memory_space<vmem>>, vector<16x128xf32>
    %44 = arith.truncf %43 : vector<16x128xf32> to vector<16x128xbf16>
    %c5_48 = arith.constant 5 : index
    %c0_49 = arith.constant 0 : index
    %c0_50 = arith.constant 0 : index
    %45 = vector.load %arg2[%c5_48, %c0_49, %c0_50] : memref<15x128x128xbf16, #tpu.memory_space<vmem>>, vector<1x128x128xbf16>
    %46 = vector.shape_cast %45 : vector<1x128x128xbf16> to vector<128x128xbf16>
    %cst_51 = arith.constant dense<0.000000e+00> : vector<16x128xf32>
    %47 = tpu.matmul %44, %46, %cst_51 {dimension_numbers = #tpu.dot_dimension_numbers<[1], [0], [0], [1], [0, 0, 1, 1], [], []>} : vector<16x128xbf16>, vector<128x128xbf16>, vector<16x128xf32> -> vector<16x128xf32>
    %48 = arith.addf %42, %47 : vector<16x128xf32>
    %c6 = arith.constant 6 : index
    %c0_52 = arith.constant 0 : index
    %49 = vector.load %arg5[%c6, %c0_52] : memref<30x128xf32, #tpu.memory_space<vmem>>, vector<16x128xf32>
    %50 = arith.truncf %49 : vector<16x128xf32> to vector<16x128xbf16>
    %c6_53 = arith.constant 6 : index
    %c0_54 = arith.constant 0 : index
    %c0_55 = arith.constant 0 : index
    %51 = vector.load %arg2[%c6_53, %c0_54, %c0_55] : memref<15x128x128xbf16, #tpu.memory_space<vmem>>, vector<1x128x128xbf16>
    %52 = vector.shape_cast %51 : vector<1x128x128xbf16> to vector<128x128xbf16>
    %cst_56 = arith.constant dense<0.000000e+00> : vector<16x128xf32>
    %53 = tpu.matmul %50, %52, %cst_56 {dimension_numbers = #tpu.dot_dimension_numbers<[1], [0], [0], [1], [0, 0, 1, 1], [], []>} : vector<16x128xbf16>, vector<128x128xbf16>, vector<16x128xf32> -> vector<16x128xf32>
    %54 = arith.addf %48, %53 : vector<16x128xf32>
    %c7_57 = arith.constant 7 : index
    %c0_58 = arith.constant 0 : index
    %55 = vector.load %arg5[%c7_57, %c0_58] : memref<30x128xf32, #tpu.memory_space<vmem>>, vector<16x128xf32>
    %56 = arith.truncf %55 : vector<16x128xf32> to vector<16x128xbf16>
    %c7_59 = arith.constant 7 : index
    %c0_60 = arith.constant 0 : index
    %c0_61 = arith.constant 0 : index
    %57 = vector.load %arg2[%c7_59, %c0_60, %c0_61] : memref<15x128x128xbf16, #tpu.memory_space<vmem>>, vector<1x128x128xbf16>
    %58 = vector.shape_cast %57 : vector<1x128x128xbf16> to vector<128x128xbf16>
    %cst_62 = arith.constant dense<0.000000e+00> : vector<16x128xf32>
    %59 = tpu.matmul %56, %58, %cst_62 {dimension_numbers = #tpu.dot_dimension_numbers<[1], [0], [0], [1], [0, 0, 1, 1], [], []>} : vector<16x128xbf16>, vector<128x128xbf16>, vector<16x128xf32> -> vector<16x128xf32>
    %60 = arith.addf %54, %59 : vector<16x128xf32>
    %c8 = arith.constant 8 : index
    %c0_63 = arith.constant 0 : index
    %61 = vector.load %arg5[%c8, %c0_63] : memref<30x128xf32, #tpu.memory_space<vmem>>, vector<16x128xf32>
    %62 = arith.truncf %61 : vector<16x128xf32> to vector<16x128xbf16>
    %c8_64 = arith.constant 8 : index
    %c0_65 = arith.constant 0 : index
    %c0_66 = arith.constant 0 : index
    %63 = vector.load %arg2[%c8_64, %c0_65, %c0_66] : memref<15x128x128xbf16, #tpu.memory_space<vmem>>, vector<1x128x128xbf16>
    %64 = vector.shape_cast %63 : vector<1x128x128xbf16> to vector<128x128xbf16>
    %cst_67 = arith.constant dense<0.000000e+00> : vector<16x128xf32>
    %65 = tpu.matmul %62, %64, %cst_67 {dimension_numbers = #tpu.dot_dimension_numbers<[1], [0], [0], [1], [0, 0, 1, 1], [], []>} : vector<16x128xbf16>, vector<128x128xbf16>, vector<16x128xf32> -> vector<16x128xf32>
    %66 = arith.addf %60, %65 : vector<16x128xf32>
    %c9 = arith.constant 9 : index
    %c0_68 = arith.constant 0 : index
    %67 = vector.load %arg5[%c9, %c0_68] : memref<30x128xf32, #tpu.memory_space<vmem>>, vector<16x128xf32>
    %68 = arith.truncf %67 : vector<16x128xf32> to vector<16x128xbf16>
    %c9_69 = arith.constant 9 : index
    %c0_70 = arith.constant 0 : index
    %c0_71 = arith.constant 0 : index
    %69 = vector.load %arg2[%c9_69, %c0_70, %c0_71] : memref<15x128x128xbf16, #tpu.memory_space<vmem>>, vector<1x128x128xbf16>
    %70 = vector.shape_cast %69 : vector<1x128x128xbf16> to vector<128x128xbf16>
    %cst_72 = arith.constant dense<0.000000e+00> : vector<16x128xf32>
    %71 = tpu.matmul %68, %70, %cst_72 {dimension_numbers = #tpu.dot_dimension_numbers<[1], [0], [0], [1], [0, 0, 1, 1], [], []>} : vector<16x128xbf16>, vector<128x128xbf16>, vector<16x128xf32> -> vector<16x128xf32>
    %72 = arith.addf %66, %71 : vector<16x128xf32>
    %c10 = arith.constant 10 : index
    %c0_73 = arith.constant 0 : index
    %73 = vector.load %arg5[%c10, %c0_73] : memref<30x128xf32, #tpu.memory_space<vmem>>, vector<16x128xf32>
    %74 = arith.truncf %73 : vector<16x128xf32> to vector<16x128xbf16>
    %c10_74 = arith.constant 10 : index
    %c0_75 = arith.constant 0 : index
    %c0_76 = arith.constant 0 : index
    %75 = vector.load %arg2[%c10_74, %c0_75, %c0_76] : memref<15x128x128xbf16, #tpu.memory_space<vmem>>, vector<1x128x128xbf16>
    %76 = vector.shape_cast %75 : vector<1x128x128xbf16> to vector<128x128xbf16>
    %cst_77 = arith.constant dense<0.000000e+00> : vector<16x128xf32>
    %77 = tpu.matmul %74, %76, %cst_77 {dimension_numbers = #tpu.dot_dimension_numbers<[1], [0], [0], [1], [0, 0, 1, 1], [], []>} : vector<16x128xbf16>, vector<128x128xbf16>, vector<16x128xf32> -> vector<16x128xf32>
    %78 = arith.addf %72, %77 : vector<16x128xf32>
    %c11 = arith.constant 11 : index
    %c0_78 = arith.constant 0 : index
    %79 = vector.load %arg5[%c11, %c0_78] : memref<30x128xf32, #tpu.memory_space<vmem>>, vector<16x128xf32>
    %80 = arith.truncf %79 : vector<16x128xf32> to vector<16x128xbf16>
    %c11_79 = arith.constant 11 : index
    %c0_80 = arith.constant 0 : index
    %c0_81 = arith.constant 0 : index
    %81 = vector.load %arg2[%c11_79, %c0_80, %c0_81] : memref<15x128x128xbf16, #tpu.memory_space<vmem>>, vector<1x128x128xbf16>
    %82 = vector.shape_cast %81 : vector<1x128x128xbf16> to vector<128x128xbf16>
    %cst_82 = arith.constant dense<0.000000e+00> : vector<16x128xf32>
    %83 = tpu.matmul %80, %82, %cst_82 {dimension_numbers = #tpu.dot_dimension_numbers<[1], [0], [0], [1], [0, 0, 1, 1], [], []>} : vector<16x128xbf16>, vector<128x128xbf16>, vector<16x128xf32> -> vector<16x128xf32>
    %84 = arith.addf %78, %83 : vector<16x128xf32>
    %c12 = arith.constant 12 : index
    %c0_83 = arith.constant 0 : index
    %85 = vector.load %arg5[%c12, %c0_83] : memref<30x128xf32, #tpu.memory_space<vmem>>, vector<16x128xf32>
    %86 = arith.truncf %85 : vector<16x128xf32> to vector<16x128xbf16>
    %c12_84 = arith.constant 12 : index
    %c0_85 = arith.constant 0 : index
    %c0_86 = arith.constant 0 : index
    %87 = vector.load %arg2[%c12_84, %c0_85, %c0_86] : memref<15x128x128xbf16, #tpu.memory_space<vmem>>, vector<1x128x128xbf16>
    %88 = vector.shape_cast %87 : vector<1x128x128xbf16> to vector<128x128xbf16>
    %cst_87 = arith.constant dense<0.000000e+00> : vector<16x128xf32>
    %89 = tpu.matmul %86, %88, %cst_87 {dimension_numbers = #tpu.dot_dimension_numbers<[1], [0], [0], [1], [0, 0, 1, 1], [], []>} : vector<16x128xbf16>, vector<128x128xbf16>, vector<16x128xf32> -> vector<16x128xf32>
    %90 = arith.addf %84, %89 : vector<16x128xf32>
    %c13 = arith.constant 13 : index
    %c0_88 = arith.constant 0 : index
    %91 = vector.load %arg5[%c13, %c0_88] : memref<30x128xf32, #tpu.memory_space<vmem>>, vector<16x128xf32>
    %92 = arith.truncf %91 : vector<16x128xf32> to vector<16x128xbf16>
    %c13_89 = arith.constant 13 : index
    %c0_90 = arith.constant 0 : index
    %c0_91 = arith.constant 0 : index
    %93 = vector.load %arg2[%c13_89, %c0_90, %c0_91] : memref<15x128x128xbf16, #tpu.memory_space<vmem>>, vector<1x128x128xbf16>
    %94 = vector.shape_cast %93 : vector<1x128x128xbf16> to vector<128x128xbf16>
    %cst_92 = arith.constant dense<0.000000e+00> : vector<16x128xf32>
    %95 = tpu.matmul %92, %94, %cst_92 {dimension_numbers = #tpu.dot_dimension_numbers<[1], [0], [0], [1], [0, 0, 1, 1], [], []>} : vector<16x128xbf16>, vector<128x128xbf16>, vector<16x128xf32> -> vector<16x128xf32>
    %96 = arith.addf %90, %95 : vector<16x128xf32>
    %c14 = arith.constant 14 : index
    %c0_93 = arith.constant 0 : index
    %97 = vector.load %arg5[%c14, %c0_93] : memref<30x128xf32, #tpu.memory_space<vmem>>, vector<16x128xf32>
    %98 = arith.truncf %97 : vector<16x128xf32> to vector<16x128xbf16>
    %c14_94 = arith.constant 14 : index
    %c0_95 = arith.constant 0 : index
    %c0_96 = arith.constant 0 : index
    %99 = vector.load %arg2[%c14_94, %c0_95, %c0_96] : memref<15x128x128xbf16, #tpu.memory_space<vmem>>, vector<1x128x128xbf16>
    %100 = vector.shape_cast %99 : vector<1x128x128xbf16> to vector<128x128xbf16>
    %cst_97 = arith.constant dense<0.000000e+00> : vector<16x128xf32>
    %101 = tpu.matmul %98, %100, %cst_97 {dimension_numbers = #tpu.dot_dimension_numbers<[1], [0], [0], [1], [0, 0, 1, 1], [], []>} : vector<16x128xbf16>, vector<128x128xbf16>, vector<16x128xf32> -> vector<16x128xf32>
    %102 = arith.addf %96, %101 : vector<16x128xf32>
    %c0_98 = arith.constant 0 : index
    %c0_99 = arith.constant 0 : index
    %103 = vector.load %arg3[%c0_98, %c0_99] : memref<1x128xf32, #tpu.memory_space<vmem>>, vector<1x128xf32>
    %104 = vector.broadcast %103 : vector<1x128xf32> to vector<16x128xf32>
    %105 = arith.addf %102, %104 : vector<16x128xf32>
    %c0_100 = arith.constant 0 : index
    %c0_101 = arith.constant 0 : index
    %c0_102 = arith.constant 0 : index
    %106 = vector.load %arg4[%c0_100, %c0_101, %c0_102] : memref<1x16x128xf32, #tpu.memory_space<vmem>>, vector<1x16x128xf32>
    %107 = vector.shape_cast %106 : vector<1x16x128xf32> to vector<16x128xf32>
    %108 = vector.shape_cast %105 : vector<16x128xf32> to vector<1x16x128xf32>
    tpu.vector_store %arg4[%c0_100, %c0_101, %c0_102], %108 {strides = array<i32>} : memref<1x16x128xf32, #tpu.memory_space<vmem>>, vector<1x16x128xf32>,
    return
  }
  func.func @transform_0(%arg0: i32) -> (i32, i32, i32, i32) {
    %c0_i32 = arith.constant 0 : i32
    %c0_i32_0 = arith.constant 0 : i32
    %c0_i32_1 = arith.constant 0 : i32
    %c0_i32_2 = arith.constant 0 : i32
    return %arg0, %c0_i32, %c0_i32_0, %c0_i32_1 : i32, i32, i32, i32
  }
  func.func @transform_1(%arg0: i32) -> (i32, i32, i32) {
    %c0_i32 = arith.constant 0 : i32
    %c0_i32_0 = arith.constant 0 : i32
    %c0_i32_1 = arith.constant 0 : i32
    %c0_i32_2 = arith.constant 0 : i32
    return %c0_i32, %c0_i32_0, %c0_i32_1 : i32, i32, i32
  }
  func.func @transform_2(%arg0: i32) -> (i32, i32) {
    %c0_i32 = arith.constant 0 : i32
    %c0_i32_0 = arith.constant 0 : i32
    %c0_i32_1 = arith.constant 0 : i32
    return %c0_i32, %c0_i32_0 : i32, i32
  }
  func.func @transform_3(%arg0: i32) -> (i32, i32, i32) {
    %c0_i32 = arith.constant 0 : i32
    %c0_i32_0 = arith.constant 0 : i32
    %c0_i32_1 = arith.constant 0 : i32
    return %arg0, %c0_i32, %c0_i32_0 : i32, i32, i32
  }
}

</mosaic_0001>

<llo_original>
// kernel: tpu_custom_call.1
$region0: #{tpu_custom_call.1}
  #allocation0 [shape = 'u32[]', space=smem, size = 0x4, offset = 0x4, fixed_abs, tag = 'smem constant byte address 0x4 - core index']
  #allocation1 [shape = 'u32[144,128]{1,0:T(1,128)}', space=vmem, size = 0x12000, scoped, tag = 'internal scratch']
  #allocation2 [shape = 'f32[30,128]{1,0:T(8,128)}', space=vmem, size = 0x4000, scoped, tag = 'scratch operand']
  %s0 = inlined_call_operand.hbm [shape: f32[2,4,16,16], index: 0, kind: input, shape index: {}]
  %s1 = inlined_call_operand.hbm [shape: bf16[15,128,128], index: 1, kind: input, shape index: {}]
  %s2 = inlined_call_operand.vmem [shape: f32[1,128], index: 2, kind: input, shape index: {}]
  %s3 = inlined_call_operand.hbm [shape: f32[2,16,128], index: 3, kind: output, shape index: {}]
  %s4 = sld [smem:[#allocation0]]
  $region53: #{tpu_custom_call.1} parent=0
    _
  %s6 = ssub.s32 1, %s4
  %s7 = scalar_select 0, %s6, %s4
  $region1: #{tpu_custom_call.1} parent=0
    #allocation3 [shape = 'u8[65536]{0}', space=vmem, size = 0x10000, scoped, tag = 'input window, operand 0']
    #allocation4 [shape = 's32[2]{0}', space=sflag, size = 0x8, scoped, tag = 'scoped memory for tpu_custom_call.1']
    #allocation5 [shape = 's32[2]{0}', space=sflag, size = 0x8, scoped, tag = 'scoped memory for tpu_custom_call.1']
    #allocation6 [shape = 'u8[491520]{0}', space=vmem, size = 0x78000, scoped, tag = 'input window, operand 1, single buffered']
    #allocation7 [shape = 's32[1]{0}', space=sflag, size = 0x4, scoped, tag = 'scoped memory for tpu_custom_call.1']
    #allocation8 [shape = 'u8[16384]{0}', space=vmem, size = 0x4000, scoped, tag = 'output window, operand 0']
    %8 = vsyncpa [#allocation4], 0
    %s9 = scalar_lea.sflag [#allocation4], 1
    %10 = vsyncpa %s9, 0
    %11 = vsyncpa [#allocation7], 0
    %12 = vsyncpa [#allocation5], 0
    %s13 = scalar_lea.sflag [#allocation5], 1
    %14 = vsyncpa %s13, 0
    loop: start=0, step=1, limit=4
    $region2: #{tpu_custom_call.1} parent=1 // loop_pre_header
      _
    $region3: #{tpu_custom_call.1} parent=1 // loop_header
      %s16 = sphi 0, %s20
      %p17 = scmp.ge.s32.totalorder %s16, 4
      %s26 = sphi 0, %s28
      %s29 = sphi 0, %s26
      %s30 = sphi 0, %s29
      %s46 = sphi 0, %s30
      %s50 = sphi 0, %s50
      %s52 = sphi 0, %s50
      %s53 = sphi 0, %s52
      %s67 = sphi 0, %s53
      %s71 = sphi 0, %s71
      %s73 = sphi 0, %s71
      %s74 = sphi 0, %s73
      %s88 = sphi 0, %s74
      %s94 = sphi 0, %s96
      %s97 = sphi 0, %s94
      %s98 = sphi 0, %s97
      %s114 = sphi 0, %s98
    $region4: #{tpu_custom_call.1} parent=1 // loop_header_branch
      %19 = sbr.rel (%p17) target = $region8
    $region5: #{tpu_custom_call.1} parent=1 // loop_body
      %s21 = ssub.s32 %s16, 1
      %s22 = ssub.s32 %s16, 2
      %s23 = sadd.s32 %s16, 1
      %s24 = ssub.s32 %s16, %s23
      %p25 = scmp.eq.s32.totalorder %s24, 0
      %s27 = sadd.s32 %s26, 1
      %s28 = scalar_select %p25, %s26, %s27
      %p31 = pneg %p25
      %p32 = scmp.eq.s32.totalorder %s16, 1
      %p33 = por %p31, %p32
      %p34 = scmp.ne.s32.totalorder %s26, %s29
      %p35 = scmp.eq.s32.totalorder %s16, 0
      %p36 = por %p34, %p35
      %p37 = scmp.ne.s32.totalorder %s26, %s29
      %p38 = scmp.eq.s32.totalorder %s21, 1
      %p39 = por %p37, %p38
      %p40 = scmp.ne.s32.totalorder %s29, %s30
      %p41 = scmp.eq.s32.totalorder %s21, 0
      %p42 = por %p40, %p41
      %p43 = scmp.ne.s32.totalorder %s29, %s30
      %p44 = scmp.eq.s32.totalorder %s22, 1
      %p45 = por %p43, %p44
      %p47 = scmp.ne.s32.totalorder %s30, %s46
      %p48 = scmp.eq.s32.totalorder %s22, 0
      %p49 = por %p47, %p48
      %s51 = sadd.s32 %s50, 1
      %p54 = scmp.eq.s32.totalorder %s16, 1
      %p55 = scmp.ne.s32.totalorder %s50, %s52
      %p56 = scmp.eq.s32.totalorder %s16, 0
      %p57 = por %p55, %p56
      %p58 = scmp.ne.s32.totalorder %s50, %s52
      %p59 = scmp.eq.s32.totalorder %s21, 1
      %p60 = por %p58, %p59
      %p61 = scmp.ne.s32.totalorder %s52, %s53
      %p62 = scmp.eq.s32.totalorder %s21, 0
      %p63 = por %p61, %p62
      %p64 = scmp.ne.s32.totalorder %s52, %s53
      %p65 = scmp.eq.s32.totalorder %s22, 1
      %p66 = por %p64, %p65
      %p68 = scmp.ne.s32.totalorder %s53, %s67
      %p69 = scmp.eq.s32.totalorder %s22, 0
      %p70 = por %p68, %p69
      %s72 = sadd.s32 %s71, 1
      %p75 = scmp.eq.s32.totalorder %s16, 1
      %p76 = scmp.ne.s32.totalorder %s71, %s73
      %p77 = scmp.eq.s32.totalorder %s16, 0
      %p78 = por %p76, %p77
      %p79 = scmp.ne.s32.totalorder %s71, %s73
      %p80 = scmp.eq.s32.totalorder %s21, 1
      %p81 = por %p79, %p80
      %p82 = scmp.ne.s32.totalorder %s73, %s74
      %p83 = scmp.eq.s32.totalorder %s21, 0
      %p84 = por %p82, %p83
      %p85 = scmp.ne.s32.totalorder %s73, %s74
      %p86 = scmp.eq.s32.totalorder %s22, 1
      %p87 = por %p85, %p86
      %p89 = scmp.ne.s32.totalorder %s74, %s88
      %p90 = scmp.eq.s32.totalorder %s22, 0
      %p91 = por %p89, %p90
      %s92 = ssub.s32 %s16, %s23
      %p93 = scmp.eq.s32.totalorder %s92, 0
      %s95 = sadd.s32 %s94, 1
      %s96 = scalar_select %p93, %s94, %s95
      %p99 = pneg %p93
      %p100 = scmp.eq.s32.totalorder %s16, 1
      %p101 = por %p99, %p100
      %p102 = scmp.ne.s32.totalorder %s94, %s97
      %p103 = scmp.eq.s32.totalorder %s16, 0
      %p104 = por %p102, %p103
      %p105 = scmp.ne.s32.totalorder %s94, %s97
      %p106 = scmp.eq.s32.totalorder %s21, 1
      %p107 = por %p105, %p106
      %p108 = scmp.ne.s32.totalorder %s97, %s98
      %p109 = scmp.eq.s32.totalorder %s21, 0
      %p110 = por %p108, %p109
      %p111 = scmp.ne.s32.totalorder %s97, %s98
      %p112 = scmp.eq.s32.totalorder %s22, 1
      %p113 = por %p111, %p112
      %p115 = scmp.ne.s32.totalorder %s98, %s114
      %p116 = scmp.eq.s32.totalorder %s22, 0
      %p117 = por %p115, %p116
      %p118 = scmp.le.s32.totalorder 1, %s16
      %p119 = scmp.lt.s32.totalorder %s16, 3
      %p120 = pnand %p118, %p119
      %p121 = pneg %p120
      // Predicated region
      $region9: #{tpu_custom_call.1} parent=5 // pred_check
        _
      $region10: #{tpu_custom_call.1} parent=5 // pred_check_branch
        %123 = sbr.rel (%p120) target = $region12
      $region11: #{tpu_custom_call.1} parent=5 // pred_region
        %s124 = ssub.s32 %s16, 1
        // Predicated region
        $region13: #{tpu_custom_call.1} parent=11 // pred_check
          %p125 = pneg %p63
        $region14: #{tpu_custom_call.1} parent=11 // pred_check_branch
          %127 = sbr.rel (%p125) target = $region16
        $region15: #{tpu_custom_call.1} parent=11 // pred_region
          %s129 = ssub.s32 15360, 15360
          %130 = vsyncadd [#allocation7], %s129
          %s131 = sshll.u32 [#allocation6], 4
          %s132 = int_to_ptr.vmem [resolvable:$true] %s131
          %137 = dma.hbm_to_vmem [thread:$0]  %s1, 15360, %s132, [#allocation7], 64, 64, 4
        $region16: #{tpu_custom_call.1} parent=11 // pred_fallthru
          _
        // Predicated region
        $region17: #{tpu_custom_call.1} parent=11 // pred_check
          %p138 = pneg %p84
        $region18: #{tpu_custom_call.1} parent=11 // pred_check_branch
          %140 = sbr.rel (%p138) target = $region20
        $region19: #{tpu_custom_call.1} parent=11 // pred_region
          _
        $region20: #{tpu_custom_call.1} parent=11 // pred_fallthru
          _
      $region12: #{tpu_custom_call.1} parent=5 // pred_fallthru
        _
      %p141 = scmp.lt.s32.totalorder %s16, 2
      // Predicated region
      $region21: #{tpu_custom_call.1} parent=5 // pred_check
        %p142 = pneg %p141
      $region22: #{tpu_custom_call.1} parent=5 // pred_check_branch
        %144 = sbr.rel (%p142) target = $region24
      $region23: #{tpu_custom_call.1} parent=5 // pred_region
        // Predicated region
        $region25: #{tpu_custom_call.1} parent=23 // pred_check
          %p145 = pneg %p36
        $region26: #{tpu_custom_call.1} parent=23 // pred_check_branch
          %147 = sbr.rel (%p145) target = $region28
        $region27: #{tpu_custom_call.1} parent=23 // pred_region
          %s148 = sand.u32 %s26, 1
          %s149 = scalar_lea.sflag [#allocation4], %s148
          %s150 = sand.u32 %s26, 1
          %s151 = smul.addr %s150, 64
          %s152 = scalar_lea.vmem [#allocation3], %s151
          %s154 = ssub.s32 1024, 1024
          %155 = vsyncadd %s149, %s154
          %s156 = smul.addr %s16, 8
          %s157 = smul.addr %s156, 128
          %s158 = scalar_lea.hbm %s0, %s157
          %s159 = sshll.u32 %s152, 4
          %s160 = int_to_ptr.vmem [resolvable:$true] %s159
          %165 = dma.hbm_to_vmem [thread:$0]  %s158, 1024, %s160, %s149, 128, 128, 8
        $region28: #{tpu_custom_call.1} parent=23 // pred_fallthru
          _
      $region24: #{tpu_custom_call.1} parent=5 // pred_fallthru
        _
      %p166 = scmp.le.s32.totalorder 1, %s16
      %p167 = scmp.lt.s32.totalorder %s16, 3
      %p168 = pnand %p166, %p167
      %p169 = pneg %p168
      // Predicated region
      $region29: #{tpu_custom_call.1} parent=5 // pred_check
        _
      $region30: #{tpu_custom_call.1} parent=5 // pred_check_branch
        %171 = sbr.rel (%p168) target = $region32
      $region31: #{tpu_custom_call.1} parent=5 // pred_region
        %s172 = ssub.s32 %s16, 1
        %s173 = sand.u32 %s29, 1
        %s174 = scalar_lea.sflag [#allocation4], %s173
        %s175 = sand.u32 %s29, 1
        %s176 = smul.addr %s175, 64
        %s177 = scalar_lea.vmem [#allocation3], %s176
        // Predicated region
        $region33: #{tpu_custom_call.1} parent=31 // pred_check
          %p178 = pneg %p42
        $region34: #{tpu_custom_call.1} parent=31 // pred_check_branch
          %180 = sbr.rel (%p178) target = $region36
        $region35: #{tpu_custom_call.1} parent=31 // pred_region
          %181 = dma.done %s174, 1024
        $region36: #{tpu_custom_call.1} parent=31 // pred_fallthru
          _
        // Predicated region
        $region37: #{tpu_custom_call.1} parent=31 // pred_check
          %p182 = pneg %p63
        $region38: #{tpu_custom_call.1} parent=31 // pred_check_branch
          %184 = sbr.rel (%p182) target = $region40
        $region39: #{tpu_custom_call.1} parent=31 // pred_region
          %185 = dma.done [#allocation7], 15360
        $region40: #{tpu_custom_call.1} parent=31 // pred_fallthru
          _
        %s186 = sand.u32 %s29, 1
        %s187 = scalar_lea.sflag [#allocation4], %s186
        %s188 = sand.u32 %s29, 1
        %s189 = smul.addr %s188, 64
        %s190 = scalar_lea.vmem [#allocation3], %s189
        %p191 = pneg %p42
        %p192 = pneg %p39
        %p193 = pneg %p63
        %p194 = pneg %p60
        %p195 = pneg %p84
        %p196 = pneg %p81
        %p197 = pneg %p110
        %p198 = pneg %p107
        %s199 = sand.u32 %s97, 1
        %s200 = scalar_lea.sflag [#allocation5], %s199
        %s201 = sand.u32 %s97, 1
        %s202 = smul.addr %s201, 16
        %s203 = scalar_lea.vmem [#allocation8], %s202
        %205 = vst [vmem:[#allocation2] sm:$0xff] 0.0
        %206 = vst [vmem:[#allocation2 + $0x8] sm:$0xff] 0.0
        %207 = vst [vmem:[#allocation2 + $0x10] sm:$0xff] 0.0
        %208 = vst [vmem:[#allocation2 + $0x18] sm:$0x3f] 0.0
        %v209 = vld [vmem:[%s177] sm:$0xff]
        %v210 = vld [vmem:[%s177 + $0x8] sm:$0xff]
        %213 = vrot.lane.b32.xlu0 %v209, 7
        %v214 = vpop.permute.xlu0 %213
        %215 = vrot.lane.b32.xlu0 %v210, 7
        %v216 = vpop.permute.xlu0 %215
        %vm219 = vcmask 187448
        %220 = vst.msk [vmem:[#allocation2 + $0x7] sm:$0xff] %vm219, %v214
        %221 = vst.msk [vmem:[#allocation2 + $0xf] sm:$0xff] %vm219, %v216
        %s222 = scalar_lea.vmem %s177, 16 [#allocation3]
        %v223 = vld [vmem:[%s222] sm:$0xff]
        %v224 = vld [vmem:[%s222 + $0x8] sm:$0xff]
        %227 = vrot.lane.b32.xlu0 %v223, 37
        %v228 = vpop.permute.xlu0 %227
        %229 = vrot.lane.b32.xlu0 %v224, 37
        %v230 = vpop.permute.xlu0 %229
        %vm233 = vcmask 433448
        %234 = vst.msk [vmem:[#allocation2 + $0x7] sm:$0xff] %vm233, %v228
        %235 = vst.msk [vmem:[#allocation2 + $0xf] sm:$0xff] %vm233, %v230
        %s236 = scalar_lea.vmem %s177, 32 [#allocation3]
        %v237 = vld [vmem:[%s236] sm:$0xff]
        %v238 = vld [vmem:[%s236 + $0x8] sm:$0xff]
        %241 = vrot.lane.b32.xlu0 %v237, 67
        %v242 = vpop.permute.xlu0 %241
        %243 = vrot.lane.b32.xlu0 %v238, 67
        %v244 = vpop.permute.xlu0 %243
        %vm247 = vcmask 679448
        %248 = vst.msk [vmem:[#allocation2 + $0x7] sm:$0xff] %vm247, %v242
        %249 = vst.msk [vmem:[#allocation2 + $0xf] sm:$0xff] %vm247, %v244
        %s250 = scalar_lea.vmem %s177, 48 [#allocation3]
        %v251 = vld [vmem:[%s250] sm:$0xff]
        %v252 = vld [vmem:[%s250 + $0x8] sm:$0xff]
        %255 = vrot.lane.b32.xlu0 %v251, 97
        %v256 = vpop.permute.xlu0 %255
        %257 = vrot.lane.b32.xlu0 %v252, 97
        %v258 = vpop.permute.xlu0 %257
        %vm261 = vcmask 925448
        %262 = vst.msk [vmem:[#allocation2 + $0x7] sm:$0xff] %vm261, %v256
        %263 = vst.msk [vmem:[#allocation2 + $0xf] sm:$0xff] %vm261, %v258
        %v264 = vld [vmem:[#allocation2] sm:$0xff]
        %v265 = vld [vmem:[#allocation2 + $0x8] sm:$0xff]
        %v266 = vpack.c.bf16 %v265, %v264
        %v267 = vld [vmem:[#allocation6] sm:$0xf]
        %v268 = vld [vmem:[#allocation6 + $0x4] sm:$0xf]
        %v269 = vld [vmem:[#allocation6 + $0x8] sm:$0xf]
        %v270 = vld [vmem:[#allocation6 + $0xc] sm:$0xf]
        %v271 = vld [vmem:[#allocation6 + $0x10] sm:$0xf]
        %v272 = vld [vmem:[#allocation6 + $0x14] sm:$0xf]
        %v273 = vld [vmem:[#allocation6 + $0x18] sm:$0xf]
        %v274 = vld [vmem:[#allocation6 + $0x1c] sm:$0xf]
        %v275 = vld [vmem:[#allocation6 + $0x20] sm:$0xf]
        %v276 = vld [vmem:[#allocation6 + $0x24] sm:$0xf]
        %v277 = vld [vmem:[#allocation6 + $0x28] sm:$0xf]
        %v278 = vld [vmem:[#allocation6 + $0x2c] sm:$0xf]
        %v279 = vld [vmem:[#allocation6 + $0x30] sm:$0xf]
        %v280 = vld [vmem:[#allocation6 + $0x34] sm:$0xf]
        %v281 = vld [vmem:[#allocation6 + $0x38] sm:$0xf]
        %v282 = vld [vmem:[#allocation6 + $0x3c] sm:$0xf]
        %v283 = vld [vmem:[#allocation2 + $0x1] sm:$0xff]
        %v284 = vld [vmem:[#allocation2 + $0x9] sm:$0xff]
        %v285 = vpack.c.bf16 %v284, %v283
        %s286 = scalar_lea.vmem [#allocation6], 64
        %v287 = vld [vmem:[%s286] sm:$0xf]
        %v288 = vld [vmem:[%s286 + $0x4] sm:$0xf]
        %v289 = vld [vmem:[%s286 + $0x8] sm:$0xf]
        %v290 = vld [vmem:[%s286 + $0xc] sm:$0xf]
        %v291 = vld [vmem:[%s286 + $0x10] sm:$0xf]
        %v292 = vld [vmem:[%s286 + $0x14] sm:$0xf]
        %v293 = vld [vmem:[%s286 + $0x18] sm:$0xf]
        %v294 = vld [vmem:[%s286 + $0x1c] sm:$0xf]
        %v295 = vld [vmem:[%s286 + $0x20] sm:$0xf]
        %v296 = vld [vmem:[%s286 + $0x24] sm:$0xf]
        %v297 = vld [vmem:[%s286 + $0x28] sm:$0xf]
        %v298 = vld [vmem:[%s286 + $0x2c] sm:$0xf]
        %v299 = vld [vmem:[%s286 + $0x30] sm:$0xf]
        %v300 = vld [vmem:[%s286 + $0x34] sm:$0xf]
        %v301 = vld [vmem:[%s286 + $0x38] sm:$0xf]
        %v302 = vld [vmem:[%s286 + $0x3c] sm:$0xf]
        %v319 = vunpack.c.l.b16 %v287
        %v320 = vunpack.c.l.b16 %v288
        %v321 = vunpack.c.l.b16 %v289
        %v322 = vunpack.c.l.b16 %v290
        %v323 = vunpack.c.l.b16 %v291
        %v324 = vunpack.c.l.b16 %v292
        %v325 = vunpack.c.l.b16 %v293
        %v326 = vunpack.c.l.b16 %v294
        %v327 = vunpack.c.l.b16 %v295
        %v328 = vunpack.c.l.b16 %v296
        %v329 = vunpack.c.l.b16 %v297
        %v330 = vunpack.c.l.b16 %v298
        %v331 = vunpack.c.l.b16 %v299
        %v332 = vunpack.c.l.b16 %v300
        %v333 = vunpack.c.l.b16 %v301
        %v334 = vunpack.c.l.b16 %v302
        %v335 = vpack.c.b16 %v320, %v319
        %v336 = vpack.c.b16 %v322, %v321
        %v337 = vpack.c.b16 %v324, %v323
        %v338 = vpack.c.b16 %v326, %v325
        %v339 = vpack.c.b16 %v328, %v327
        %v340 = vpack.c.b16 %v330, %v329
        %v341 = vpack.c.b16 %v332, %v331
        %v342 = vpack.c.b16 %v334, %v333
        %351 = vmatprep.subr.bf16.mxu0 0
        %352 = vmatpush1.bf16.msra.mxu0 %v335
        %353 = vmatprep.subr.bf16.mxu0 0
        %354 = vmatpush1.bf16.msra.mxu0 %v336
        %355 = vmatprep.subr.bf16.mxu0 0
        %356 = vmatpush1.bf16.msra.mxu0 %v337
        %357 = vmatprep.subr.bf16.mxu0 0
        %358 = vmatpush1.bf16.msra.mxu0 %v338
        %359 = vmatprep.subr.bf16.mxu0 0
        %360 = vmatpush1.bf16.msra.mxu0 %v339
        %361 = vmatprep.subr.bf16.mxu0 0
        %362 = vmatpush1.bf16.msra.mxu0 %v340
        %363 = vmatprep.subr.bf16.mxu0 0
        %364 = vmatpush1.bf16.msra.mxu0 %v341
        %365 = vmatprep.subr.bf16.mxu0 0
        %366 = vmatpush1.bf16.msra.mxu0 %v342
        %367 = vmatprep.subr.bf16.mxu0 0
        %368 = vmatpush1.bf16.msra.mxu0 0
        %369 = vmatprep.subr.bf16.mxu0 0
        %370 = vmatpush1.bf16.msra.mxu0 0
        %371 = vmatprep.subr.bf16.mxu0 0
        %372 = vmatpush1.bf16.msra.mxu0 0
        %373 = vmatprep.subr.bf16.mxu0 0
        %374 = vmatpush1.bf16.msra.mxu0 0
        %375 = vmatprep.subr.bf16.mxu0 0
        %376 = vmatpush1.bf16.msra.mxu0 0
        %377 = vmatprep.subr.bf16.mxu0 0
        %378 = vmatpush1.bf16.msra.mxu0 0
        %379 = vmatprep.subr.bf16.mxu0 0
        %380 = vmatpush1.bf16.msra.mxu0 0
        %381 = vmatprep.subr.bf16.mxu0 0
        %382 = vmatpush1.bf16.msra.mxu0 0
        %383 = vmatprep.mubr.bf16.mxu0 0
        %384 = vmatmul.mubr.bf16.gmra.mrb[0].mxu0 %v285
        %v385 = vpop.f32.mrb[0].mxu0
        %v386 = vadd.f32 0.0, %v385
        %v387 = vpop.f32.mrb[0].mxu0
        %v388 = vpop.f32.mrb[0].mxu0
        %v389 = vadd.f32 0.0, %v388
        %v390 = vpop.f32.mrb[0].mxu0
        %391 = vdwg.mxu0
        %v408 = vunpack.c.l.b16 %v267
        %v409 = vunpack.c.l.b16 %v268
        %v410 = vunpack.c.l.b16 %v269
        %v411 = vunpack.c.l.b16 %v270
        %v412 = vunpack.c.l.b16 %v271
        %v413 = vunpack.c.l.b16 %v272
        %v414 = vunpack.c.l.b16 %v273
        %v415 = vunpack.c.l.b16 %v274
        %v416 = vunpack.c.l.b16 %v275
        %v417 = vunpack.c.l.b16 %v276
        %v418 = vunpack.c.l.b16 %v277
        %v419 = vunpack.c.l.b16 %v278
        %v420 = vunpack.c.l.b16 %v279
        %v421 = vunpack.c.l.b16 %v280
        %v422 = vunpack.c.l.b16 %v281
        %v423 = vunpack.c.l.b16 %v282
        %v424 = vpack.c.b16 %v409, %v408
        %v425 = vpack.c.b16 %v411, %v410
        %v426 = vpack.c.b16 %v413, %v412
        %v427 = vpack.c.b16 %v415, %v414
        %v428 = vpack.c.b16 %v417, %v416
        %v429 = vpack.c.b16 %v419, %v418
        %v430 = vpack.c.b16 %v421, %v420
        %v431 = vpack.c.b16 %v423, %v422
        %440 = vmatprep.subr.bf16.mxu0 0
        %441 = vmatpush1.bf16.msra.mxu0 %v424
        %442 = vmatprep.subr.bf16.mxu0 0
        %443 = vmatpush1.bf16.msra.mxu0 %v425
        %444 = vmatprep.subr.bf16.mxu0 0
        %445 = vmatpush1.bf16.msra.mxu0 %v426
        %446 = vmatprep.subr.bf16.mxu0 0
        %447 = vmatpush1.bf16.msra.mxu0 %v427
        %448 = vmatprep.subr.bf16.mxu0 0
        %449 = vmatpush1.bf16.msra.mxu0 %v428
        %450 = vmatprep.subr.bf16.mxu0 0
        %451 = vmatpush1.bf16.msra.mxu0 %v429
        %452 = vmatprep.subr.bf16.mxu0 0
        %453 = vmatpush1.bf16.msra.mxu0 %v430
        %454 = vmatprep.subr.bf16.mxu0 0
        %455 = vmatpush1.bf16.msra.mxu0 %v431
        %456 = vmatprep.subr.bf16.mxu0 0
        %457 = vmatpush1.bf16.msra.mxu0 0
        %458 = vmatprep.subr.bf16.mxu0 0
        %459 = vmatpush1.bf16.msra.mxu0 0
        %460 = vmatprep.subr.bf16.mxu0 0
        %461 = vmatpush1.bf16.msra.mxu0 0
        %462 = vmatprep.subr.bf16.mxu0 0
        %463 = vmatpush1.bf16.msra.mxu0 0
        %464 = vmatprep.subr.bf16.mxu0 0
        %465 = vmatpush1.bf16.msra.mxu0 0
        %466 = vmatprep.subr.bf16.mxu0 0
        %467 = vmatpush1.bf16.msra.mxu0 0
        %468 = vmatprep.subr.bf16.mxu0 0
        %469 = vmatpush1.bf16.msra.mxu0 0
        %470 = vmatprep.subr.bf16.mxu0 0
        %471 = vmatpush1.bf16.msra.mxu0 0
        %472 = vmatprep.mubr.bf16.mxu0 0
        %473 = vmatmul.mubr.bf16.gmra.mrb[0].mxu0 %v266
        %v474 = vpop.f32.mrb[0].mxu0
        %v475 = vadd.f32 %v386, %v474
        %v476 = vpop.f32.mrb[0].mxu0
        %v477 = vpop.f32.mrb[0].mxu0
        %v478 = vadd.f32 %v389, %v477
        %v479 = vpop.f32.mrb[0].mxu0
        %480 = vdwg.mxu0
        %v481 = vld [vmem:[#allocation2 + $0x2] sm:$0xff]
        %v482 = vld [vmem:[#allocation2 + $0xa] sm:$0xff]
        %v483 = vpack.c.bf16 %v482, %v481
        %s484 = scalar_lea.vmem [#allocation6], 128
        %v485 = vld [vmem:[%s484] sm:$0xf]
        %v486 = vld [vmem:[%s484 + $0x4] sm:$0xf]
        %v487 = vld [vmem:[%s484 + $0x8] sm:$0xf]
        %v488 = vld [vmem:[%s484 + $0xc] sm:$0xf]
        %v489 = vld [vmem:[%s484 + $0x10] sm:$0xf]
        %v490 = vld [vmem:[%s484 + $0x14] sm:$0xf]
        %v491 = vld [vmem:[%s484 + $0x18] sm:$0xf]
        %v492 = vld [vmem:[%s484 + $0x1c] sm:$0xf]
        %v493 = vld [vmem:[%s484 + $0x20] sm:$0xf]
        %v494 = vld [vmem:[%s484 + $0x24] sm:$0xf]
        %v495 = vld [vmem:[%s484 + $0x28] sm:$0xf]
        %v496 = vld [vmem:[%s484 + $0x2c] sm:$0xf]
        %v497 = vld [vmem:[%s484 + $0x30] sm:$0xf]
        %v498 = vld [vmem:[%s484 + $0x34] sm:$0xf]
        %v499 = vld [vmem:[%s484 + $0x38] sm:$0xf]
        %v500 = vld [vmem:[%s484 + $0x3c] sm:$0xf]
        %v517 = vunpack.c.l.b16 %v485
        %v518 = vunpack.c.l.b16 %v486
        %v519 = vunpack.c.l.b16 %v487
        %v520 = vunpack.c.l.b16 %v488
        %v521 = vunpack.c.l.b16 %v489
        %v522 = vunpack.c.l.b16 %v490
        %v523 = vunpack.c.l.b16 %v491
        %v524 = vunpack.c.l.b16 %v492
        %v525 = vunpack.c.l.b16 %v493
        %v526 = vunpack.c.l.b16 %v494
        %v527 = vunpack.c.l.b16 %v495
        %v528 = vunpack.c.l.b16 %v496
        %v529 = vunpack.c.l.b16 %v497
        %v530 = vunpack.c.l.b16 %v498
        %v531 = vunpack.c.l.b16 %v499
        %v532 = vunpack.c.l.b16 %v500
        %v533 = vpack.c.b16 %v518, %v517
        %v534 = vpack.c.b16 %v520, %v519
        %v535 = vpack.c.b16 %v522, %v521
        %v536 = vpack.c.b16 %v524, %v523
        %v537 = vpack.c.b16 %v526, %v525
        %v538 = vpack.c.b16 %v528, %v527
        %v539 = vpack.c.b16 %v530, %v529
        %v540 = vpack.c.b16 %v532, %v531
        %549 = vmatprep.subr.bf16.mxu0 0
        %550 = vmatpush1.bf16.msra.mxu0 %v533
        %551 = vmatprep.subr.bf16.mxu0 0
        %552 = vmatpush1.bf16.msra.mxu0 %v534
        %553 = vmatprep.subr.bf16.mxu0 0
        %554 = vmatpush1.bf16.msra.mxu0 %v535
        %555 = vmatprep.subr.bf16.mxu0 0
        %556 = vmatpush1.bf16.msra.mxu0 %v536
        %557 = vmatprep.subr.bf16.mxu0 0
        %558 = vmatpush1.bf16.msra.mxu0 %v537
        %559 = vmatprep.subr.bf16.mxu0 0
        %560 = vmatpush1.bf16.msra.mxu0 %v538
        %561 = vmatprep.subr.bf16.mxu0 0
        %562 = vmatpush1.bf16.msra.mxu0 %v539
        %563 = vmatprep.subr.bf16.mxu0 0
        %564 = vmatpush1.bf16.msra.mxu0 %v540
        %565 = vmatprep.subr.bf16.mxu0 0
        %566 = vmatpush1.bf16.msra.mxu0 0
        %567 = vmatprep.subr.bf16.mxu0 0
        %568 = vmatpush1.bf16.msra.mxu0 0
        %569 = vmatprep.subr.bf16.mxu0 0
        %570 = vmatpush1.bf16.msra.mxu0 0
        %571 = vmatprep.subr.bf16.mxu0 0
        %572 = vmatpush1.bf16.msra.mxu0 0
        %573 = vmatprep.subr.bf16.mxu0 0
        %574 = vmatpush1.bf16.msra.mxu0 0
        %575 = vmatprep.subr.bf16.mxu0 0
        %576 = vmatpush1.bf16.msra.mxu0 0
        %577 = vmatprep.subr.bf16.mxu0 0
        %578 = vmatpush1.bf16.msra.mxu0 0
        %579 = vmatprep.subr.bf16.mxu0 0
        %580 = vmatpush1.bf16.msra.mxu0 0
        %581 = vmatprep.mubr.bf16.mxu0 0
        %582 = vmatmul.mubr.bf16.gmra.mrb[0].mxu0 %v483
        %v583 = vpop.f32.mrb[0].mxu0
        %v584 = vadd.f32 0.0, %v583
        %v585 = vpop.f32.mrb[0].mxu0
        %v586 = vpop.f32.mrb[0].mxu0
        %v587 = vadd.f32 0.0, %v586
        %v588 = vpop.f32.mrb[0].mxu0
        %589 = vdwg.mxu0
        %v590 = vadd.f32 %v475, %v584
        %v591 = vadd.f32 %v478, %v587
        %v592 = vld [vmem:[#allocation2 + $0x3] sm:$0xff]
        %v593 = vld [vmem:[#allocation2 + $0xb] sm:$0xff]
        %v594 = vpack.c.bf16 %v593, %v592
        %s595 = scalar_lea.vmem [#allocation6], 192
        %v596 = vld [vmem:[%s595] sm:$0xf]
        %v597 = vld [vmem:[%s595 + $0x4] sm:$0xf]
        %v598 = vld [vmem:[%s595 + $0x8] sm:$0xf]
        %v599 = vld [vmem:[%s595 + $0xc] sm:$0xf]
        %v600 = vld [vmem:[%s595 + $0x10] sm:$0xf]
        %v601 = vld [vmem:[%s595 + $0x14] sm:$0xf]
        %v602 = vld [vmem:[%s595 + $0x18] sm:$0xf]
        %v603 = vld [vmem:[%s595 + $0x1c] sm:$0xf]
        %v604 = vld [vmem:[%s595 + $0x20] sm:$0xf]
        %v605 = vld [vmem:[%s595 + $0x24] sm:$0xf]
        %v606 = vld [vmem:[%s595 + $0x28] sm:$0xf]
        %v607 = vld [vmem:[%s595 + $0x2c] sm:$0xf]
        %v608 = vld [vmem:[%s595 + $0x30] sm:$0xf]
        %v609 = vld [vmem:[%s595 + $0x34] sm:$0xf]
        %v610 = vld [vmem:[%s595 + $0x38] sm:$0xf]
        %v611 = vld [vmem:[%s595 + $0x3c] sm:$0xf]
        %v628 = vunpack.c.l.b16 %v596
        %v629 = vunpack.c.l.b16 %v597
        %v630 = vunpack.c.l.b16 %v598
        %v631 = vunpack.c.l.b16 %v599
        %v632 = vunpack.c.l.b16 %v600
        %v633 = vunpack.c.l.b16 %v601
        %v634 = vunpack.c.l.b16 %v602
        %v635 = vunpack.c.l.b16 %v603
        %v636 = vunpack.c.l.b16 %v604
        %v637 = vunpack.c.l.b16 %v605
        %v638 = vunpack.c.l.b16 %v606
        %v639 = vunpack.c.l.b16 %v607
        %v640 = vunpack.c.l.b16 %v608
        %v641 = vunpack.c.l.b16 %v609
        %v642 = vunpack.c.l.b16 %v610
        %v643 = vunpack.c.l.b16 %v611
        %v644 = vpack.c.b16 %v629, %v628
        %v645 = vpack.c.b16 %v631, %v630
        %v646 = vpack.c.b16 %v633, %v632
        %v647 = vpack.c.b16 %v635, %v634
        %v648 = vpack.c.b16 %v637, %v636
        %v649 = vpack.c.b16 %v639, %v638
        %v650 = vpack.c.b16 %v641, %v640
        %v651 = vpack.c.b16 %v643, %v642
        %660 = vmatprep.subr.bf16.mxu0 0
        %661 = vmatpush1.bf16.msra.mxu0 %v644
        %662 = vmatprep.subr.bf16.mxu0 0
        %663 = vmatpush1.bf16.msra.mxu0 %v645
        %664 = vmatprep.subr.bf16.mxu0 0
        %665 = vmatpush1.bf16.msra.mxu0 %v646
        %666 = vmatprep.subr.bf16.mxu0 0
        %667 = vmatpush1.bf16.msra.mxu0 %v647
        %668 = vmatprep.subr.bf16.mxu0 0
        %669 = vmatpush1.bf16.msra.mxu0 %v648
        %670 = vmatprep.subr.bf16.mxu0 0
        %671 = vmatpush1.bf16.msra.mxu0 %v649
        %672 = vmatprep.subr.bf16.mxu0 0
        %673 = vmatpush1.bf16.msra.mxu0 %v650
        %674 = vmatprep.subr.bf16.mxu0 0
        %675 = vmatpush1.bf16.msra.mxu0 %v651
        %676 = vmatprep.subr.bf16.mxu0 0
        %677 = vmatpush1.bf16.msra.mxu0 0
        %678 = vmatprep.subr.bf16.mxu0 0
        %679 = vmatpush1.bf16.msra.mxu0 0
        %680 = vmatprep.subr.bf16.mxu0 0
        %681 = vmatpush1.bf16.msra.mxu0 0
        %682 = vmatprep.subr.bf16.mxu0 0
        %683 = vmatpush1.bf16.msra.mxu0 0
        %684 = vmatprep.subr.bf16.mxu0 0
        %685 = vmatpush1.bf16.msra.mxu0 0
        %686 = vmatprep.subr.bf16.mxu0 0
        %687 = vmatpush1.bf16.msra.mxu0 0
        %688 = vmatprep.subr.bf16.mxu0 0
        %689 = vmatpush1.bf16.msra.mxu0 0
        %690 = vmatprep.subr.bf16.mxu0 0
        %691 = vmatpush1.bf16.msra.mxu0 0
        %692 = vmatprep.mubr.bf16.mxu0 0
        %693 = vmatmul.mubr.bf16.gmra.mrb[0].mxu0 %v594
        %v694 = vpop.f32.mrb[0].mxu0
        %v695 = vadd.f32 0.0, %v694
        %v696 = vpop.f32.mrb[0].mxu0
        %v697 = vpop.f32.mrb[0].mxu0
        %v698 = vadd.f32 0.0, %v697
        %v699 = vpop.f32.mrb[0].mxu0
        %700 = vdwg.mxu0
        %v701 = vadd.f32 %v590, %v695
        %v702 = vadd.f32 %v591, %v698
        %v703 = vld [vmem:[#allocation2 + $0x4] sm:$0xff]
        %v704 = vld [vmem:[#allocation2 + $0xc] sm:$0xff]
        %v705 = vpack.c.bf16 %v704, %v703
        %s706 = scalar_lea.vmem [#allocation6], 256
        %v707 = vld [vmem:[%s706] sm:$0xf]
        %v708 = vld [vmem:[%s706 + $0x4] sm:$0xf]
        %v709 = vld [vmem:[%s706 + $0x8] sm:$0xf]
        %v710 = vld [vmem:[%s706 + $0xc] sm:$0xf]
        %v711 = vld [vmem:[%s706 + $0x10] sm:$0xf]
        %v712 = vld [vmem:[%s706 + $0x14] sm:$0xf]
        %v713 = vld [vmem:[%s706 + $0x18] sm:$0xf]
        %v714 = vld [vmem:[%s706 + $0x1c] sm:$0xf]
        %v715 = vld [vmem:[%s706 + $0x20] sm:$0xf]
        %v716 = vld [vmem:[%s706 + $0x24] sm:$0xf]
        %v717 = vld [vmem:[%s706 + $0x28] sm:$0xf]
        %v718 = vld [vmem:[%s706 + $0x2c] sm:$0xf]
        %v719 = vld [vmem:[%s706 + $0x30] sm:$0xf]
        %v720 = vld [vmem:[%s706 + $0x34] sm:$0xf]
        %v721 = vld [vmem:[%s706 + $0x38] sm:$0xf]
        %v722 = vld [vmem:[%s706 + $0x3c] sm:$0xf]
        %v739 = vunpack.c.l.b16 %v707
        %v740 = vunpack.c.l.b16 %v708
        %v741 = vunpack.c.l.b16 %v709
        %v742 = vunpack.c.l.b16 %v710
        %v743 = vunpack.c.l.b16 %v711
        %v744 = vunpack.c.l.b16 %v712
        %v745 = vunpack.c.l.b16 %v713
        %v746 = vunpack.c.l.b16 %v714
        %v747 = vunpack.c.l.b16 %v715
        %v748 = vunpack.c.l.b16 %v716
        %v749 = vunpack.c.l.b16 %v717
        %v750 = vunpack.c.l.b16 %v718
        %v751 = vunpack.c.l.b16 %v719
        %v752 = vunpack.c.l.b16 %v720
        %v753 = vunpack.c.l.b16 %v721
        %v754 = vunpack.c.l.b16 %v722
        %v755 = vpack.c.b16 %v740, %v739
        %v756 = vpack.c.b16 %v742, %v741
        %v757 = vpack.c.b16 %v744, %v743
        %v758 = vpack.c.b16 %v746, %v745
        %v759 = vpack.c.b16 %v748, %v747
        %v760 = vpack.c.b16 %v750, %v749
        %v761 = vpack.c.b16 %v752, %v751
        %v762 = vpack.c.b16 %v754, %v753
        %771 = vmatprep.subr.bf16.mxu0 0
        %772 = vmatpush1.bf16.msra.mxu0 %v755
        %773 = vmatprep.subr.bf16.mxu0 0
        %774 = vmatpush1.bf16.msra.mxu0 %v756
        %775 = vmatprep.subr.bf16.mxu0 0
        %776 = vmatpush1.bf16.msra.mxu0 %v757
        %777 = vmatprep.subr.bf16.mxu0 0
        %778 = vmatpush1.bf16.msra.mxu0 %v758
        %779 = vmatprep.subr.bf16.mxu0 0
        %780 = vmatpush1.bf16.msra.mxu0 %v759
        %781 = vmatprep.subr.bf16.mxu0 0
        %782 = vmatpush1.bf16.msra.mxu0 %v760
        %783 = vmatprep.subr.bf16.mxu0 0
        %784 = vmatpush1.bf16.msra.mxu0 %v761
        %785 = vmatprep.subr.bf16.mxu0 0
        %786 = vmatpush1.bf16.msra.mxu0 %v762
        %787 = vmatprep.subr.bf16.mxu0 0
        %788 = vmatpush1.bf16.msra.mxu0 0
        %789 = vmatprep.subr.bf16.mxu0 0
        %790 = vmatpush1.bf16.msra.mxu0 0
        %791 = vmatprep.subr.bf16.mxu0 0
        %792 = vmatpush1.bf16.msra.mxu0 0
        %793 = vmatprep.subr.bf16.mxu0 0
        %794 = vmatpush1.bf16.msra.mxu0 0
        %795 = vmatprep.subr.bf16.mxu0 0
        %796 = vmatpush1.bf16.msra.mxu0 0
        %797 = vmatprep.subr.bf16.mxu0 0
        %798 = vmatpush1.bf16.msra.mxu0 0
        %799 = vmatprep.subr.bf16.mxu0 0
        %800 = vmatpush1.bf16.msra.mxu0 0
        %801 = vmatprep.subr.bf16.mxu0 0
        %802 = vmatpush1.bf16.msra.mxu0 0
        %803 = vmatprep.mubr.bf16.mxu0 0
        %804 = vmatmul.mubr.bf16.gmra.mrb[0].mxu0 %v705
        %v805 = vpop.f32.mrb[0].mxu0
        %v806 = vadd.f32 0.0, %v805
        %v807 = vpop.f32.mrb[0].mxu0
        %v808 = vpop.f32.mrb[0].mxu0
        %v809 = vadd.f32 0.0, %v808
        %v810 = vpop.f32.mrb[0].mxu0
        %811 = vdwg.mxu0
        %v812 = vadd.f32 %v701, %v806
        %v813 = vadd.f32 %v702, %v809
        %v814 = vld [vmem:[#allocation2 + $0x5] sm:$0xff]
        %v815 = vld [vmem:[#allocation2 + $0xd] sm:$0xff]
        %v816 = vpack.c.bf16 %v815, %v814
        %s817 = scalar_lea.vmem [#allocation6], 320
        %v818 = vld [vmem:[%s817] sm:$0xf]
        %v819 = vld [vmem:[%s817 + $0x4] sm:$0xf]
        %v820 = vld [vmem:[%s817 + $0x8] sm:$0xf]
        %v821 = vld [vmem:[%s817 + $0xc] sm:$0xf]
        %v822 = vld [vmem:[%s817 + $0x10] sm:$0xf]
        %v823 = vld [vmem:[%s817 + $0x14] sm:$0xf]
        %v824 = vld [vmem:[%s817 + $0x18] sm:$0xf]
        %v825 = vld [vmem:[%s817 + $0x1c] sm:$0xf]
        %v826 = vld [vmem:[%s817 + $0x20] sm:$0xf]
        %v827 = vld [vmem:[%s817 + $0x24] sm:$0xf]
        %v828 = vld [vmem:[%s817 + $0x28] sm:$0xf]
        %v829 = vld [vmem:[%s817 + $0x2c] sm:$0xf]
        %v830 = vld [vmem:[%s817 + $0x30] sm:$0xf]
        %v831 = vld [vmem:[%s817 + $0x34] sm:$0xf]
        %v832 = vld [vmem:[%s817 + $0x38] sm:$0xf]
        %v833 = vld [vmem:[%s817 + $0x3c] sm:$0xf]
        %v850 = vunpack.c.l.b16 %v818
        %v851 = vunpack.c.l.b16 %v819
        %v852 = vunpack.c.l.b16 %v820
        %v853 = vunpack.c.l.b16 %v821
        %v854 = vunpack.c.l.b16 %v822
        %v855 = vunpack.c.l.b16 %v823
        %v856 = vunpack.c.l.b16 %v824
        %v857 = vunpack.c.l.b16 %v825
        %v858 = vunpack.c.l.b16 %v826
        %v859 = vunpack.c.l.b16 %v827
        %v860 = vunpack.c.l.b16 %v828
        %v861 = vunpack.c.l.b16 %v829
        %v862 = vunpack.c.l.b16 %v830
        %v863 = vunpack.c.l.b16 %v831
        %v864 = vunpack.c.l.b16 %v832
        %v865 = vunpack.c.l.b16 %v833
        %v866 = vpack.c.b16 %v851, %v850
        %v867 = vpack.c.b16 %v853, %v852
        %v868 = vpack.c.b16 %v855, %v854
        %v869 = vpack.c.b16 %v857, %v856
        %v870 = vpack.c.b16 %v859, %v858
        %v871 = vpack.c.b16 %v861, %v860
        %v872 = vpack.c.b16 %v863, %v862
        %v873 = vpack.c.b16 %v865, %v864
        %882 = vmatprep.subr.bf16.mxu0 0
        %883 = vmatpush1.bf16.msra.mxu0 %v866
        %884 = vmatprep.subr.bf16.mxu0 0
        %885 = vmatpush1.bf16.msra.mxu0 %v867
        %886 = vmatprep.subr.bf16.mxu0 0
        %887 = vmatpush1.bf16.msra.mxu0 %v868
        %888 = vmatprep.subr.bf16.mxu0 0
        %889 = vmatpush1.bf16.msra.mxu0 %v869
        %890 = vmatprep.subr.bf16.mxu0 0
        %891 = vmatpush1.bf16.msra.mxu0 %v870
        %892 = vmatprep.subr.bf16.mxu0 0
        %893 = vmatpush1.bf16.msra.mxu0 %v871
        %894 = vmatprep.subr.bf16.mxu0 0
        %895 = vmatpush1.bf16.msra.mxu0 %v872
        %896 = vmatprep.subr.bf16.mxu0 0
        %897 = vmatpush1.bf16.msra.mxu0 %v873
        %898 = vmatprep.subr.bf16.mxu0 0
        %899 = vmatpush1.bf16.msra.mxu0 0
        %900 = vmatprep.subr.bf16.mxu0 0
        %901 = vmatpush1.bf16.msra.mxu0 0
        %902 = vmatprep.subr.bf16.mxu0 0
        %903 = vmatpush1.bf16.msra.mxu0 0
        %904 = vmatprep.subr.bf16.mxu0 0
        %905 = vmatpush1.bf16.msra.mxu0 0
        %906 = vmatprep.subr.bf16.mxu0 0
        %907 = vmatpush1.bf16.msra.mxu0 0
        %908 = vmatprep.subr.bf16.mxu0 0
        %909 = vmatpush1.bf16.msra.mxu0 0
        %910 = vmatprep.subr.bf16.mxu0 0
        %911 = vmatpush1.bf16.msra.mxu0 0
        %912 = vmatprep.subr.bf16.mxu0 0
        %913 = vmatpush1.bf16.msra.mxu0 0
        %914 = vmatprep.mubr.bf16.mxu0 0
        %915 = vmatmul.mubr.bf16.gmra.mrb[0].mxu0 %v816
        %v916 = vpop.f32.mrb[0].mxu0
        %v917 = vadd.f32 0.0, %v916
        %v918 = vpop.f32.mrb[0].mxu0
        %v919 = vpop.f32.mrb[0].mxu0
        %v920 = vadd.f32 0.0, %v919
        %v921 = vpop.f32.mrb[0].mxu0
        %922 = vdwg.mxu0
        %v923 = vadd.f32 %v812, %v917
        %v924 = vadd.f32 %v813, %v920
        %v925 = vld [vmem:[#allocation2 + $0x6] sm:$0xff]
        %v926 = vld [vmem:[#allocation2 + $0xe] sm:$0xff]
        %v927 = vpack.c.bf16 %v926, %v925
        %s928 = scalar_lea.vmem [#allocation6], 384
        %v929 = vld [vmem:[%s928] sm:$0xf]
        %v930 = vld [vmem:[%s928 + $0x4] sm:$0xf]
        %v931 = vld [vmem:[%s928 + $0x8] sm:$0xf]
        %v932 = vld [vmem:[%s928 + $0xc] sm:$0xf]
        %v933 = vld [vmem:[%s928 + $0x10] sm:$0xf]
        %v934 = vld [vmem:[%s928 + $0x14] sm:$0xf]
        %v935 = vld [vmem:[%s928 + $0x18] sm:$0xf]
        %v936 = vld [vmem:[%s928 + $0x1c] sm:$0xf]
        %v937 = vld [vmem:[%s928 + $0x20] sm:$0xf]
        %v938 = vld [vmem:[%s928 + $0x24] sm:$0xf]
        %v939 = vld [vmem:[%s928 + $0x28] sm:$0xf]
        %v940 = vld [vmem:[%s928 + $0x2c] sm:$0xf]
        %v941 = vld [vmem:[%s928 + $0x30] sm:$0xf]
        %v942 = vld [vmem:[%s928 + $0x34] sm:$0xf]
        %v943 = vld [vmem:[%s928 + $0x38] sm:$0xf]
        %v944 = vld [vmem:[%s928 + $0x3c] sm:$0xf]
        %v961 = vunpack.c.l.b16 %v929
        %v962 = vunpack.c.l.b16 %v930
        %v963 = vunpack.c.l.b16 %v931
        %v964 = vunpack.c.l.b16 %v932
        %v965 = vunpack.c.l.b16 %v933
        %v966 = vunpack.c.l.b16 %v934
        %v967 = vunpack.c.l.b16 %v935
        %v968 = vunpack.c.l.b16 %v936
        %v969 = vunpack.c.l.b16 %v937
        %v970 = vunpack.c.l.b16 %v938
        %v971 = vunpack.c.l.b16 %v939
        %v972 = vunpack.c.l.b16 %v940
        %v973 = vunpack.c.l.b16 %v941
        %v974 = vunpack.c.l.b16 %v942
        %v975 = vunpack.c.l.b16 %v943
        %v976 = vunpack.c.l.b16 %v944
        %v977 = vpack.c.b16 %v962, %v961
        %v978 = vpack.c.b16 %v964, %v963
        %v979 = vpack.c.b16 %v966, %v965
        %v980 = vpack.c.b16 %v968, %v967
        %v981 = vpack.c.b16 %v970, %v969
        %v982 = vpack.c.b16 %v972, %v971
        %v983 = vpack.c.b16 %v974, %v973
        %v984 = vpack.c.b16 %v976, %v975
        %993 = vmatprep.subr.bf16.mxu0 0
        %994 = vmatpush1.bf16.msra.mxu0 %v977
        %995 = vmatprep.subr.bf16.mxu0 0
        %996 = vmatpush1.bf16.msra.mxu0 %v978
        %997 = vmatprep.subr.bf16.mxu0 0
        %998 = vmatpush1.bf16.msra.mxu0 %v979
        %999 = vmatprep.subr.bf16.mxu0 0
        %1000 = vmatpush1.bf16.msra.mxu0 %v980
        %1001 = vmatprep.subr.bf16.mxu0 0
        %1002 = vmatpush1.bf16.msra.mxu0 %v981
        %1003 = vmatprep.subr.bf16.mxu0 0
        %1004 = vmatpush1.bf16.msra.mxu0 %v982
        %1005 = vmatprep.subr.bf16.mxu0 0
        %1006 = vmatpush1.bf16.msra.mxu0 %v983
        %1007 = vmatprep.subr.bf16.mxu0 0
        %1008 = vmatpush1.bf16.msra.mxu0 %v984
        %1009 = vmatprep.subr.bf16.mxu0 0
        %1010 = vmatpush1.bf16.msra.mxu0 0
        %1011 = vmatprep.subr.bf16.mxu0 0
        %1012 = vmatpush1.bf16.msra.mxu0 0
        %1013 = vmatprep.subr.bf16.mxu0 0
        %1014 = vmatpush1.bf16.msra.mxu0 0
        %1015 = vmatprep.subr.bf16.mxu0 0
        %1016 = vmatpush1.bf16.msra.mxu0 0
        %1017 = vmatprep.subr.bf16.mxu0 0
        %1018 = vmatpush1.bf16.msra.mxu0 0
        %1019 = vmatprep.subr.bf16.mxu0 0
        %1020 = vmatpush1.bf16.msra.mxu0 0
        %1021 = vmatprep.subr.bf16.mxu0 0
        %1022 = vmatpush1.bf16.msra.mxu0 0
        %1023 = vmatprep.subr.bf16.mxu0 0
        %1024 = vmatpush1.bf16.msra.mxu0 0
        %1025 = vmatprep.mubr.bf16.mxu0 0
        %1026 = vmatmul.mubr.bf16.gmra.mrb[0].mxu0 %v927
        %v1027 = vpop.f32.mrb[0].mxu0
        %v1028 = vadd.f32 0.0, %v1027
        %v1029 = vpop.f32.mrb[0].mxu0
        %v1030 = vpop.f32.mrb[0].mxu0
        %v1031 = vadd.f32 0.0, %v1030
        %v1032 = vpop.f32.mrb[0].mxu0
        %1033 = vdwg.mxu0
        %v1034 = vadd.f32 %v923, %v1028
        %v1035 = vadd.f32 %v924, %v1031
        %v1036 = vld [vmem:[#allocation2 + $0x7] sm:$0xff]
        %v1037 = vld [vmem:[#allocation2 + $0xf] sm:$0xff]
        %v1038 = vpack.c.bf16 %v1037, %v1036
        %s1039 = scalar_lea.vmem [#allocation6], 448
        %v1040 = vld [vmem:[%s1039] sm:$0xf]
        %v1041 = vld [vmem:[%s1039 + $0x4] sm:$0xf]
        %v1042 = vld [vmem:[%s1039 + $0x8] sm:$0xf]
        %v1043 = vld [vmem:[%s1039 + $0xc] sm:$0xf]
        %v1044 = vld [vmem:[%s1039 + $0x10] sm:$0xf]
        %v1045 = vld [vmem:[%s1039 + $0x14] sm:$0xf]
        %v1046 = vld [vmem:[%s1039 + $0x18] sm:$0xf]
        %v1047 = vld [vmem:[%s1039 + $0x1c] sm:$0xf]
        %v1048 = vld [vmem:[%s1039 + $0x20] sm:$0xf]
        %v1049 = vld [vmem:[%s1039 + $0x24] sm:$0xf]
        %v1050 = vld [vmem:[%s1039 + $0x28] sm:$0xf]
        %v1051 = vld [vmem:[%s1039 + $0x2c] sm:$0xf]
        %v1052 = vld [vmem:[%s1039 + $0x30] sm:$0xf]
        %v1053 = vld [vmem:[%s1039 + $0x34] sm:$0xf]
        %v1054 = vld [vmem:[%s1039 + $0x38] sm:$0xf]
        %v1055 = vld [vmem:[%s1039 + $0x3c] sm:$0xf]
        %v1072 = vunpack.c.l.b16 %v1040
        %v1073 = vunpack.c.l.b16 %v1041
        %v1074 = vunpack.c.l.b16 %v1042
        %v1075 = vunpack.c.l.b16 %v1043
        %v1076 = vunpack.c.l.b16 %v1044
        %v1077 = vunpack.c.l.b16 %v1045
        %v1078 = vunpack.c.l.b16 %v1046
        %v1079 = vunpack.c.l.b16 %v1047
        %v1080 = vunpack.c.l.b16 %v1048
        %v1081 = vunpack.c.l.b16 %v1049
        %v1082 = vunpack.c.l.b16 %v1050
        %v1083 = vunpack.c.l.b16 %v1051
        %v1084 = vunpack.c.l.b16 %v1052
        %v1085 = vunpack.c.l.b16 %v1053
        %v1086 = vunpack.c.l.b16 %v1054
        %v1087 = vunpack.c.l.b16 %v1055
        %v1088 = vpack.c.b16 %v1073, %v1072
        %v1089 = vpack.c.b16 %v1075, %v1074
        %v1090 = vpack.c.b16 %v1077, %v1076
        %v1091 = vpack.c.b16 %v1079, %v1078
        %v1092 = vpack.c.b16 %v1081, %v1080
        %v1093 = vpack.c.b16 %v1083, %v1082
        %v1094 = vpack.c.b16 %v1085, %v1084
        %v1095 = vpack.c.b16 %v1087, %v1086
        %1104 = vmatprep.subr.bf16.mxu0 0
        %1105 = vmatpush1.bf16.msra.mxu0 %v1088
        %1106 = vmatprep.subr.bf16.mxu0 0
        %1107 = vmatpush1.bf16.msra.mxu0 %v1089
        %1108 = vmatprep.subr.bf16.mxu0 0
        %1109 = vmatpush1.bf16.msra.mxu0 %v1090
        %1110 = vmatprep.subr.bf16.mxu0 0
        %1111 = vmatpush1.bf16.msra.mxu0 %v1091
        %1112 = vmatprep.subr.bf16.mxu0 0
        %1113 = vmatpush1.bf16.msra.mxu0 %v1092
        %1114 = vmatprep.subr.bf16.mxu0 0
        %1115 = vmatpush1.bf16.msra.mxu0 %v1093
        %1116 = vmatprep.subr.bf16.mxu0 0
        %1117 = vmatpush1.bf16.msra.mxu0 %v1094
        %1118 = vmatprep.subr.bf16.mxu0 0
        %1119 = vmatpush1.bf16.msra.mxu0 %v1095
        %1120 = vmatprep.subr.bf16.mxu0 0
        %1121 = vmatpush1.bf16.msra.mxu0 0
        %1122 = vmatprep.subr.bf16.mxu0 0
        %1123 = vmatpush1.bf16.msra.mxu0 0
        %1124 = vmatprep.subr.bf16.mxu0 0
        %1125 = vmatpush1.bf16.msra.mxu0 0
        %1126 = vmatprep.subr.bf16.mxu0 0
        %1127 = vmatpush1.bf16.msra.mxu0 0
        %1128 = vmatprep.subr.bf16.mxu0 0
        %1129 = vmatpush1.bf16.msra.mxu0 0
        %1130 = vmatprep.subr.bf16.mxu0 0
        %1131 = vmatpush1.bf16.msra.mxu0 0
        %1132 = vmatprep.subr.bf16.mxu0 0
        %1133 = vmatpush1.bf16.msra.mxu0 0
        %1134 = vmatprep.subr.bf16.mxu0 0
        %1135 = vmatpush1.bf16.msra.mxu0 0
        %1136 = vmatprep.mubr.bf16.mxu0 0
        %1137 = vmatmul.mubr.bf16.gmra.mrb[0].mxu0 %v1038
        %v1138 = vpop.f32.mrb[0].mxu0
        %v1139 = vadd.f32 0.0, %v1138
        %v1140 = vpop.f32.mrb[0].mxu0
        %v1141 = vpop.f32.mrb[0].mxu0
        %v1142 = vadd.f32 0.0, %v1141
        %v1143 = vpop.f32.mrb[0].mxu0
        %1144 = vdwg.mxu0
        %v1145 = vadd.f32 %v1034, %v1139
        %v1146 = vadd.f32 %v1035, %v1142
        %v1147 = vld [vmem:[#allocation2 + $0x8] sm:$0xff]
        %v1148 = vld [vmem:[#allocation2 + $0x10] sm:$0xff]
        %v1149 = vpack.c.bf16 %v1148, %v1147
        %s1150 = scalar_lea.vmem [#allocation6], 512
        %v1151 = vld [vmem:[%s1150] sm:$0xf]
        %v1152 = vld [vmem:[%s1150 + $0x4] sm:$0xf]
        %v1153 = vld [vmem:[%s1150 + $0x8] sm:$0xf]
        %v1154 = vld [vmem:[%s1150 + $0xc] sm:$0xf]
        %v1155 = vld [vmem:[%s1150 + $0x10] sm:$0xf]
        %v1156 = vld [vmem:[%s1150 + $0x14] sm:$0xf]
        %v1157 = vld [vmem:[%s1150 + $0x18] sm:$0xf]
        %v1158 = vld [vmem:[%s1150 + $0x1c] sm:$0xf]
        %v1159 = vld [vmem:[%s1150 + $0x20] sm:$0xf]
        %v1160 = vld [vmem:[%s1150 + $0x24] sm:$0xf]
        %v1161 = vld [vmem:[%s1150 + $0x28] sm:$0xf]
        %v1162 = vld [vmem:[%s1150 + $0x2c] sm:$0xf]
        %v1163 = vld [vmem:[%s1150 + $0x30] sm:$0xf]
        %v1164 = vld [vmem:[%s1150 + $0x34] sm:$0xf]
        %v1165 = vld [vmem:[%s1150 + $0x38] sm:$0xf]
        %v1166 = vld [vmem:[%s1150 + $0x3c] sm:$0xf]
        %v1183 = vunpack.c.l.b16 %v1151
        %v1184 = vunpack.c.l.b16 %v1152
        %v1185 = vunpack.c.l.b16 %v1153
        %v1186 = vunpack.c.l.b16 %v1154
        %v1187 = vunpack.c.l.b16 %v1155
        %v1188 = vunpack.c.l.b16 %v1156
        %v1189 = vunpack.c.l.b16 %v1157
        %v1190 = vunpack.c.l.b16 %v1158
        %v1191 = vunpack.c.l.b16 %v1159
        %v1192 = vunpack.c.l.b16 %v1160
        %v1193 = vunpack.c.l.b16 %v1161
        %v1194 = vunpack.c.l.b16 %v1162
        %v1195 = vunpack.c.l.b16 %v1163
        %v1196 = vunpack.c.l.b16 %v1164
        %v1197 = vunpack.c.l.b16 %v1165
        %v1198 = vunpack.c.l.b16 %v1166
        %v1199 = vpack.c.b16 %v1184, %v1183
        %v1200 = vpack.c.b16 %v1186, %v1185
        %v1201 = vpack.c.b16 %v1188, %v1187
        %v1202 = vpack.c.b16 %v1190, %v1189
        %v1203 = vpack.c.b16 %v1192, %v1191
        %v1204 = vpack.c.b16 %v1194, %v1193
        %v1205 = vpack.c.b16 %v1196, %v1195
        %v1206 = vpack.c.b16 %v1198, %v1197
        %1215 = vmatprep.subr.bf16.mxu0 0
        %1216 = vmatpush1.bf16.msra.mxu0 %v1199
        %1217 = vmatprep.subr.bf16.mxu0 0
        %1218 = vmatpush1.bf16.msra.mxu0 %v1200
        %1219 = vmatprep.subr.bf16.mxu0 0
        %1220 = vmatpush1.bf16.msra.mxu0 %v1201
        %1221 = vmatprep.subr.bf16.mxu0 0
        %1222 = vmatpush1.bf16.msra.mxu0 %v1202
        %1223 = vmatprep.subr.bf16.mxu0 0
        %1224 = vmatpush1.bf16.msra.mxu0 %v1203
        %1225 = vmatprep.subr.bf16.mxu0 0
        %1226 = vmatpush1.bf16.msra.mxu0 %v1204
        %1227 = vmatprep.subr.bf16.mxu0 0
        %1228 = vmatpush1.bf16.msra.mxu0 %v1205
        %1229 = vmatprep.subr.bf16.mxu0 0
        %1230 = vmatpush1.bf16.msra.mxu0 %v1206
        %1231 = vmatprep.subr.bf16.mxu0 0
        %1232 = vmatpush1.bf16.msra.mxu0 0
        %1233 = vmatprep.subr.bf16.mxu0 0
        %1234 = vmatpush1.bf16.msra.mxu0 0
        %1235 = vmatprep.subr.bf16.mxu0 0
        %1236 = vmatpush1.bf16.msra.mxu0 0
        %1237 = vmatprep.subr.bf16.mxu0 0
        %1238 = vmatpush1.bf16.msra.mxu0 0
        %1239 = vmatprep.subr.bf16.mxu0 0
        %1240 = vmatpush1.bf16.msra.mxu0 0
        %1241 = vmatprep.subr.bf16.mxu0 0
        %1242 = vmatpush1.bf16.msra.mxu0 0
        %1243 = vmatprep.subr.bf16.mxu0 0
        %1244 = vmatpush1.bf16.msra.mxu0 0
        %1245 = vmatprep.subr.bf16.mxu0 0
        %1246 = vmatpush1.bf16.msra.mxu0 0
        %1247 = vmatprep.mubr.bf16.mxu0 0
        %1248 = vmatmul.mubr.bf16.gmra.mrb[0].mxu0 %v1149
        %v1249 = vpop.f32.mrb[0].mxu0
        %v1250 = vadd.f32 0.0, %v1249
        %v1251 = vpop.f32.mrb[0].mxu0
        %v1252 = vpop.f32.mrb[0].mxu0
        %v1253 = vadd.f32 0.0, %v1252
        %v1254 = vpop.f32.mrb[0].mxu0
        %1255 = vdwg.mxu0
        %v1256 = vadd.f32 %v1145, %v1250
        %v1257 = vadd.f32 %v1146, %v1253
        %v1258 = vld [vmem:[#allocation2 + $0x9] sm:$0xff]
        %v1259 = vld [vmem:[#allocation2 + $0x11] sm:$0xff]
        %v1260 = vpack.c.bf16 %v1259, %v1258
        %s1261 = scalar_lea.vmem [#allocation6], 576
        %v1262 = vld [vmem:[%s1261] sm:$0xf]
        %v1263 = vld [vmem:[%s1261 + $0x4] sm:$0xf]
        %v1264 = vld [vmem:[%s1261 + $0x8] sm:$0xf]
        %v1265 = vld [vmem:[%s1261 + $0xc] sm:$0xf]
        %v1266 = vld [vmem:[%s1261 + $0x10] sm:$0xf]
        %v1267 = vld [vmem:[%s1261 + $0x14] sm:$0xf]
        %v1268 = vld [vmem:[%s1261 + $0x18] sm:$0xf]
        %v1269 = vld [vmem:[%s1261 + $0x1c] sm:$0xf]
        %v1270 = vld [vmem:[%s1261 + $0x20] sm:$0xf]
        %v1271 = vld [vmem:[%s1261 + $0x24] sm:$0xf]
        %v1272 = vld [vmem:[%s1261 + $0x28] sm:$0xf]
        %v1273 = vld [vmem:[%s1261 + $0x2c] sm:$0xf]
        %v1274 = vld [vmem:[%s1261 + $0x30] sm:$0xf]
        %v1275 = vld [vmem:[%s1261 + $0x34] sm:$0xf]
        %v1276 = vld [vmem:[%s1261 + $0x38] sm:$0xf]
        %v1277 = vld [vmem:[%s1261 + $0x3c] sm:$0xf]
        %v1294 = vunpack.c.l.b16 %v1262
        %v1295 = vunpack.c.l.b16 %v1263
        %v1296 = vunpack.c.l.b16 %v1264
        %v1297 = vunpack.c.l.b16 %v1265
        %v1298 = vunpack.c.l.b16 %v1266
        %v1299 = vunpack.c.l.b16 %v1267
        %v1300 = vunpack.c.l.b16 %v1268
        %v1301 = vunpack.c.l.b16 %v1269
        %v1302 = vunpack.c.l.b16 %v1270
        %v1303 = vunpack.c.l.b16 %v1271
        %v1304 = vunpack.c.l.b16 %v1272
        %v1305 = vunpack.c.l.b16 %v1273
        %v1306 = vunpack.c.l.b16 %v1274
        %v1307 = vunpack.c.l.b16 %v1275
        %v1308 = vunpack.c.l.b16 %v1276
        %v1309 = vunpack.c.l.b16 %v1277
        %v1310 = vpack.c.b16 %v1295, %v1294
        %v1311 = vpack.c.b16 %v1297, %v1296
        %v1312 = vpack.c.b16 %v1299, %v1298
        %v1313 = vpack.c.b16 %v1301, %v1300
        %v1314 = vpack.c.b16 %v1303, %v1302
        %v1315 = vpack.c.b16 %v1305, %v1304
        %v1316 = vpack.c.b16 %v1307, %v1306
        %v1317 = vpack.c.b16 %v1309, %v1308
        %1326 = vmatprep.subr.bf16.mxu0 0
        %1327 = vmatpush1.bf16.msra.mxu0 %v1310
        %1328 = vmatprep.subr.bf16.mxu0 0
        %1329 = vmatpush1.bf16.msra.mxu0 %v1311
        %1330 = vmatprep.subr.bf16.mxu0 0
        %1331 = vmatpush1.bf16.msra.mxu0 %v1312
        %1332 = vmatprep.subr.bf16.mxu0 0
        %1333 = vmatpush1.bf16.msra.mxu0 %v1313
        %1334 = vmatprep.subr.bf16.mxu0 0
        %1335 = vmatpush1.bf16.msra.mxu0 %v1314
        %1336 = vmatprep.subr.bf16.mxu0 0
        %1337 = vmatpush1.bf16.msra.mxu0 %v1315
        %1338 = vmatprep.subr.bf16.mxu0 0
        %1339 = vmatpush1.bf16.msra.mxu0 %v1316
        %1340 = vmatprep.subr.bf16.mxu0 0
        %1341 = vmatpush1.bf16.msra.mxu0 %v1317
        %1342 = vmatprep.subr.bf16.mxu0 0
        %1343 = vmatpush1.bf16.msra.mxu0 0
        %1344 = vmatprep.subr.bf16.mxu0 0
        %1345 = vmatpush1.bf16.msra.mxu0 0
        %1346 = vmatprep.subr.bf16.mxu0 0
        %1347 = vmatpush1.bf16.msra.mxu0 0
        %1348 = vmatprep.subr.bf16.mxu0 0
        %1349 = vmatpush1.bf16.msra.mxu0 0
        %1350 = vmatprep.subr.bf16.mxu0 0
        %1351 = vmatpush1.bf16.msra.mxu0 0
        %1352 = vmatprep.subr.bf16.mxu0 0
        %1353 = vmatpush1.bf16.msra.mxu0 0
        %1354 = vmatprep.subr.bf16.mxu0 0
        %1355 = vmatpush1.bf16.msra.mxu0 0
        %1356 = vmatprep.subr.bf16.mxu0 0
        %1357 = vmatpush1.bf16.msra.mxu0 0
        %1358 = vmatprep.mubr.bf16.mxu0 0
        %1359 = vmatmul.mubr.bf16.gmra.mrb[0].mxu0 %v1260
        %v1360 = vpop.f32.mrb[0].mxu0
        %v1361 = vadd.f32 0.0, %v1360
        %v1362 = vpop.f32.mrb[0].mxu0
        %v1363 = vpop.f32.mrb[0].mxu0
        %v1364 = vadd.f32 0.0, %v1363
        %v1365 = vpop.f32.mrb[0].mxu0
        %1366 = vdwg.mxu0
        %v1367 = vadd.f32 %v1256, %v1361
        %v1368 = vadd.f32 %v1257, %v1364
        %v1369 = vld [vmem:[#allocation2 + $0xa] sm:$0xff]
        %v1370 = vld [vmem:[#allocation2 + $0x12] sm:$0xff]
        %v1371 = vpack.c.bf16 %v1370, %v1369
        %s1372 = scalar_lea.vmem [#allocation6], 640
        %v1373 = vld [vmem:[%s1372] sm:$0xf]
        %v1374 = vld [vmem:[%s1372 + $0x4] sm:$0xf]
        %v1375 = vld [vmem:[%s1372 + $0x8] sm:$0xf]
        %v1376 = vld [vmem:[%s1372 + $0xc] sm:$0xf]
        %v1377 = vld [vmem:[%s1372 + $0x10] sm:$0xf]
        %v1378 = vld [vmem:[%s1372 + $0x14] sm:$0xf]
        %v1379 = vld [vmem:[%s1372 + $0x18] sm:$0xf]
        %v1380 = vld [vmem:[%s1372 + $0x1c] sm:$0xf]
        %v1381 = vld [vmem:[%s1372 + $0x20] sm:$0xf]
        %v1382 = vld [vmem:[%s1372 + $0x24] sm:$0xf]
        %v1383 = vld [vmem:[%s1372 + $0x28] sm:$0xf]
        %v1384 = vld [vmem:[%s1372 + $0x2c] sm:$0xf]
        %v1385 = vld [vmem:[%s1372 + $0x30] sm:$0xf]
        %v1386 = vld [vmem:[%s1372 + $0x34] sm:$0xf]
        %v1387 = vld [vmem:[%s1372 + $0x38] sm:$0xf]
        %v1388 = vld [vmem:[%s1372 + $0x3c] sm:$0xf]
        %v1405 = vunpack.c.l.b16 %v1373
        %v1406 = vunpack.c.l.b16 %v1374
        %v1407 = vunpack.c.l.b16 %v1375
        %v1408 = vunpack.c.l.b16 %v1376
        %v1409 = vunpack.c.l.b16 %v1377
        %v1410 = vunpack.c.l.b16 %v1378
        %v1411 = vunpack.c.l.b16 %v1379
        %v1412 = vunpack.c.l.b16 %v1380
        %v1413 = vunpack.c.l.b16 %v1381
        %v1414 = vunpack.c.l.b16 %v1382
        %v1415 = vunpack.c.l.b16 %v1383
        %v1416 = vunpack.c.l.b16 %v1384
        %v1417 = vunpack.c.l.b16 %v1385
        %v1418 = vunpack.c.l.b16 %v1386
        %v1419 = vunpack.c.l.b16 %v1387
        %v1420 = vunpack.c.l.b16 %v1388
        %v1421 = vpack.c.b16 %v1406, %v1405
        %v1422 = vpack.c.b16 %v1408, %v1407
        %v1423 = vpack.c.b16 %v1410, %v1409
        %v1424 = vpack.c.b16 %v1412, %v1411
        %v1425 = vpack.c.b16 %v1414, %v1413
        %v1426 = vpack.c.b16 %v1416, %v1415
        %v1427 = vpack.c.b16 %v1418, %v1417
        %v1428 = vpack.c.b16 %v1420, %v1419
        %1437 = vmatprep.subr.bf16.mxu0 0
        %1438 = vmatpush1.bf16.msra.mxu0 %v1421
        %1439 = vmatprep.subr.bf16.mxu0 0
        %1440 = vmatpush1.bf16.msra.mxu0 %v1422
        %1441 = vmatprep.subr.bf16.mxu0 0
        %1442 = vmatpush1.bf16.msra.mxu0 %v1423
        %1443 = vmatprep.subr.bf16.mxu0 0
        %1444 = vmatpush1.bf16.msra.mxu0 %v1424
        %1445 = vmatprep.subr.bf16.mxu0 0
        %1446 = vmatpush1.bf16.msra.mxu0 %v1425
        %1447 = vmatprep.subr.bf16.mxu0 0
        %1448 = vmatpush1.bf16.msra.mxu0 %v1426
        %1449 = vmatprep.subr.bf16.mxu0 0
        %1450 = vmatpush1.bf16.msra.mxu0 %v1427
        %1451 = vmatprep.subr.bf16.mxu0 0
        %1452 = vmatpush1.bf16.msra.mxu0 %v1428
        %1453 = vmatprep.subr.bf16.mxu0 0
        %1454 = vmatpush1.bf16.msra.mxu0 0
        %1455 = vmatprep.subr.bf16.mxu0 0
        %1456 = vmatpush1.bf16.msra.mxu0 0
        %1457 = vmatprep.subr.bf16.mxu0 0
        %1458 = vmatpush1.bf16.msra.mxu0 0
        %1459 = vmatprep.subr.bf16.mxu0 0
        %1460 = vmatpush1.bf16.msra.mxu0 0
        %1461 = vmatprep.subr.bf16.mxu0 0
        %1462 = vmatpush1.bf16.msra.mxu0 0
        %1463 = vmatprep.subr.bf16.mxu0 0
        %1464 = vmatpush1.bf16.msra.mxu0 0
        %1465 = vmatprep.subr.bf16.mxu0 0
        %1466 = vmatpush1.bf16.msra.mxu0 0
        %1467 = vmatprep.subr.bf16.mxu0 0
        %1468 = vmatpush1.bf16.msra.mxu0 0
        %1469 = vmatprep.mubr.bf16.mxu0 0
        %1470 = vmatmul.mubr.bf16.gmra.mrb[0].mxu0 %v1371
        %v1471 = vpop.f32.mrb[0].mxu0
        %v1472 = vadd.f32 0.0, %v1471
        %v1473 = vpop.f32.mrb[0].mxu0
        %v1474 = vpop.f32.mrb[0].mxu0
        %v1475 = vadd.f32 0.0, %v1474
        %v1476 = vpop.f32.mrb[0].mxu0
        %1477 = vdwg.mxu0
        %v1478 = vadd.f32 %v1367, %v1472
        %v1479 = vadd.f32 %v1368, %v1475
        %v1480 = vld [vmem:[#allocation2 + $0xb] sm:$0xff]
        %v1481 = vld [vmem:[#allocation2 + $0x13] sm:$0xff]
        %v1482 = vpack.c.bf16 %v1481, %v1480
        %s1483 = scalar_lea.vmem [#allocation6], 704
        %v1484 = vld [vmem:[%s1483] sm:$0xf]
        %v1485 = vld [vmem:[%s1483 + $0x4] sm:$0xf]
        %v1486 = vld [vmem:[%s1483 + $0x8] sm:$0xf]
        %v1487 = vld [vmem:[%s1483 + $0xc] sm:$0xf]
        %v1488 = vld [vmem:[%s1483 + $0x10] sm:$0xf]
        %v1489 = vld [vmem:[%s1483 + $0x14] sm:$0xf]
        %v1490 = vld [vmem:[%s1483 + $0x18] sm:$0xf]
        %v1491 = vld [vmem:[%s1483 + $0x1c] sm:$0xf]
        %v1492 = vld [vmem:[%s1483 + $0x20] sm:$0xf]
        %v1493 = vld [vmem:[%s1483 + $0x24] sm:$0xf]
        %v1494 = vld [vmem:[%s1483 + $0x28] sm:$0xf]
        %v1495 = vld [vmem:[%s1483 + $0x2c] sm:$0xf]
        %v1496 = vld [vmem:[%s1483 + $0x30] sm:$0xf]
        %v1497 = vld [vmem:[%s1483 + $0x34] sm:$0xf]
        %v1498 = vld [vmem:[%s1483 + $0x38] sm:$0xf]
        %v1499 = vld [vmem:[%s1483 + $0x3c] sm:$0xf]
        %v1516 = vunpack.c.l.b16 %v1484
        %v1517 = vunpack.c.l.b16 %v1485
        %v1518 = vunpack.c.l.b16 %v1486
        %v1519 = vunpack.c.l.b16 %v1487
        %v1520 = vunpack.c.l.b16 %v1488
        %v1521 = vunpack.c.l.b16 %v1489
        %v1522 = vunpack.c.l.b16 %v1490
        %v1523 = vunpack.c.l.b16 %v1491
        %v1524 = vunpack.c.l.b16 %v1492
        %v1525 = vunpack.c.l.b16 %v1493
        %v1526 = vunpack.c.l.b16 %v1494
        %v1527 = vunpack.c.l.b16 %v1495
        %v1528 = vunpack.c.l.b16 %v1496
        %v1529 = vunpack.c.l.b16 %v1497
        %v1530 = vunpack.c.l.b16 %v1498
        %v1531 = vunpack.c.l.b16 %v1499
        %v1532 = vpack.c.b16 %v1517, %v1516
        %v1533 = vpack.c.b16 %v1519, %v1518
        %v1534 = vpack.c.b16 %v1521, %v1520
        %v1535 = vpack.c.b16 %v1523, %v1522
        %v1536 = vpack.c.b16 %v1525, %v1524
        %v1537 = vpack.c.b16 %v1527, %v1526
        %v1538 = vpack.c.b16 %v1529, %v1528
        %v1539 = vpack.c.b16 %v1531, %v1530
        %1548 = vmatprep.subr.bf16.mxu0 0
        %1549 = vmatpush1.bf16.msra.mxu0 %v1532
        %1550 = vmatprep.subr.bf16.mxu0 0
        %1551 = vmatpush1.bf16.msra.mxu0 %v1533
        %1552 = vmatprep.subr.bf16.mxu0 0
        %1553 = vmatpush1.bf16.msra.mxu0 %v1534
        %1554 = vmatprep.subr.bf16.mxu0 0
        %1555 = vmatpush1.bf16.msra.mxu0 %v1535
        %1556 = vmatprep.subr.bf16.mxu0 0
        %1557 = vmatpush1.bf16.msra.mxu0 %v1536
        %1558 = vmatprep.subr.bf16.mxu0 0
        %1559 = vmatpush1.bf16.msra.mxu0 %v1537
        %1560 = vmatprep.subr.bf16.mxu0 0
        %1561 = vmatpush1.bf16.msra.mxu0 %v1538
        %1562 = vmatprep.subr.bf16.mxu0 0
        %1563 = vmatpush1.bf16.msra.mxu0 %v1539
        %1564 = vmatprep.subr.bf16.mxu0 0
        %1565 = vmatpush1.bf16.msra.mxu0 0
        %1566 = vmatprep.subr.bf16.mxu0 0
        %1567 = vmatpush1.bf16.msra.mxu0 0
        %1568 = vmatprep.subr.bf16.mxu0 0
        %1569 = vmatpush1.bf16.msra.mxu0 0
        %1570 = vmatprep.subr.bf16.mxu0 0
        %1571 = vmatpush1.bf16.msra.mxu0 0
        %1572 = vmatprep.subr.bf16.mxu0 0
        %1573 = vmatpush1.bf16.msra.mxu0 0
        %1574 = vmatprep.subr.bf16.mxu0 0
        %1575 = vmatpush1.bf16.msra.mxu0 0
        %1576 = vmatprep.subr.bf16.mxu0 0
        %1577 = vmatpush1.bf16.msra.mxu0 0
        %1578 = vmatprep.subr.bf16.mxu0 0
        %1579 = vmatpush1.bf16.msra.mxu0 0
        %1580 = vmatprep.mubr.bf16.mxu0 0
        %1581 = vmatmul.mubr.bf16.gmra.mrb[0].mxu0 %v1482
        %v1582 = vpop.f32.mrb[0].mxu0
        %v1583 = vadd.f32 0.0, %v1582
        %v1584 = vpop.f32.mrb[0].mxu0
        %v1585 = vpop.f32.mrb[0].mxu0
        %v1586 = vadd.f32 0.0, %v1585
        %v1587 = vpop.f32.mrb[0].mxu0
        %1588 = vdwg.mxu0
        %v1589 = vadd.f32 %v1478, %v1583
        %v1590 = vadd.f32 %v1479, %v1586
        %v1591 = vld [vmem:[#allocation2 + $0xc] sm:$0xff]
        %v1592 = vld [vmem:[#allocation2 + $0x14] sm:$0xff]
        %v1593 = vpack.c.bf16 %v1592, %v1591
        %s1594 = scalar_lea.vmem [#allocation6], 768
        %v1595 = vld [vmem:[%s1594] sm:$0xf]
        %v1596 = vld [vmem:[%s1594 + $0x4] sm:$0xf]
        %v1597 = vld [vmem:[%s1594 + $0x8] sm:$0xf]
        %v1598 = vld [vmem:[%s1594 + $0xc] sm:$0xf]
        %v1599 = vld [vmem:[%s1594 + $0x10] sm:$0xf]
        %v1600 = vld [vmem:[%s1594 + $0x14] sm:$0xf]
        %v1601 = vld [vmem:[%s1594 + $0x18] sm:$0xf]
        %v1602 = vld [vmem:[%s1594 + $0x1c] sm:$0xf]
        %v1603 = vld [vmem:[%s1594 + $0x20] sm:$0xf]
        %v1604 = vld [vmem:[%s1594 + $0x24] sm:$0xf]
        %v1605 = vld [vmem:[%s1594 + $0x28] sm:$0xf]
        %v1606 = vld [vmem:[%s1594 + $0x2c] sm:$0xf]
        %v1607 = vld [vmem:[%s1594 + $0x30] sm:$0xf]
        %v1608 = vld [vmem:[%s1594 + $0x34] sm:$0xf]
        %v1609 = vld [vmem:[%s1594 + $0x38] sm:$0xf]
        %v1610 = vld [vmem:[%s1594 + $0x3c] sm:$0xf]
        %v1627 = vunpack.c.l.b16 %v1595
        %v1628 = vunpack.c.l.b16 %v1596
        %v1629 = vunpack.c.l.b16 %v1597
        %v1630 = vunpack.c.l.b16 %v1598
        %v1631 = vunpack.c.l.b16 %v1599
        %v1632 = vunpack.c.l.b16 %v1600
        %v1633 = vunpack.c.l.b16 %v1601
        %v1634 = vunpack.c.l.b16 %v1602
        %v1635 = vunpack.c.l.b16 %v1603
        %v1636 = vunpack.c.l.b16 %v1604
        %v1637 = vunpack.c.l.b16 %v1605
        %v1638 = vunpack.c.l.b16 %v1606
        %v1639 = vunpack.c.l.b16 %v1607
        %v1640 = vunpack.c.l.b16 %v1608
        %v1641 = vunpack.c.l.b16 %v1609
        %v1642 = vunpack.c.l.b16 %v1610
        %v1643 = vpack.c.b16 %v1628, %v1627
        %v1644 = vpack.c.b16 %v1630, %v1629
        %v1645 = vpack.c.b16 %v1632, %v1631
        %v1646 = vpack.c.b16 %v1634, %v1633
        %v1647 = vpack.c.b16 %v1636, %v1635
        %v1648 = vpack.c.b16 %v1638, %v1637
        %v1649 = vpack.c.b16 %v1640, %v1639
        %v1650 = vpack.c.b16 %v1642, %v1641
        %1659 = vmatprep.subr.bf16.mxu0 0
        %1660 = vmatpush1.bf16.msra.mxu0 %v1643
        %1661 = vmatprep.subr.bf16.mxu0 0
        %1662 = vmatpush1.bf16.msra.mxu0 %v1644
        %1663 = vmatprep.subr.bf16.mxu0 0
        %1664 = vmatpush1.bf16.msra.mxu0 %v1645
        %1665 = vmatprep.subr.bf16.mxu0 0
        %1666 = vmatpush1.bf16.msra.mxu0 %v1646
        %1667 = vmatprep.subr.bf16.mxu0 0
        %1668 = vmatpush1.bf16.msra.mxu0 %v1647
        %1669 = vmatprep.subr.bf16.mxu0 0
        %1670 = vmatpush1.bf16.msra.mxu0 %v1648
        %1671 = vmatprep.subr.bf16.mxu0 0
        %1672 = vmatpush1.bf16.msra.mxu0 %v1649
        %1673 = vmatprep.subr.bf16.mxu0 0
        %1674 = vmatpush1.bf16.msra.mxu0 %v1650
        %1675 = vmatprep.subr.bf16.mxu0 0
        %1676 = vmatpush1.bf16.msra.mxu0 0
        %1677 = vmatprep.subr.bf16.mxu0 0
        %1678 = vmatpush1.bf16.msra.mxu0 0
        %1679 = vmatprep.subr.bf16.mxu0 0
        %1680 = vmatpush1.bf16.msra.mxu0 0
        %1681 = vmatprep.subr.bf16.mxu0 0
        %1682 = vmatpush1.bf16.msra.mxu0 0
        %1683 = vmatprep.subr.bf16.mxu0 0
        %1684 = vmatpush1.bf16.msra.mxu0 0
        %1685 = vmatprep.subr.bf16.mxu0 0
        %1686 = vmatpush1.bf16.msra.mxu0 0
        %1687 = vmatprep.subr.bf16.mxu0 0
        %1688 = vmatpush1.bf16.msra.mxu0 0
        %1689 = vmatprep.subr.bf16.mxu0 0
        %1690 = vmatpush1.bf16.msra.mxu0 0
        %1691 = vmatprep.mubr.bf16.mxu0 0
        %1692 = vmatmul.mubr.bf16.gmra.mrb[0].mxu0 %v1593
        %v1693 = vpop.f32.mrb[0].mxu0
        %v1694 = vadd.f32 0.0, %v1693
        %v1695 = vpop.f32.mrb[0].mxu0
        %v1696 = vpop.f32.mrb[0].mxu0
        %v1697 = vadd.f32 0.0, %v1696
        %v1698 = vpop.f32.mrb[0].mxu0
        %1699 = vdwg.mxu0
        %v1700 = vadd.f32 %v1589, %v1694
        %v1701 = vadd.f32 %v1590, %v1697
        %v1702 = vld [vmem:[#allocation2 + $0xd] sm:$0xff]
        %v1703 = vld [vmem:[#allocation2 + $0x15] sm:$0xff]
        %v1704 = vpack.c.bf16 %v1703, %v1702
        %s1705 = scalar_lea.vmem [#allocation6], 832
        %v1706 = vld [vmem:[%s1705] sm:$0xf]
        %v1707 = vld [vmem:[%s1705 + $0x4] sm:$0xf]
        %v1708 = vld [vmem:[%s1705 + $0x8] sm:$0xf]
        %v1709 = vld [vmem:[%s1705 + $0xc] sm:$0xf]
        %v1710 = vld [vmem:[%s1705 + $0x10] sm:$0xf]
        %v1711 = vld [vmem:[%s1705 + $0x14] sm:$0xf]
        %v1712 = vld [vmem:[%s1705 + $0x18] sm:$0xf]
        %v1713 = vld [vmem:[%s1705 + $0x1c] sm:$0xf]
        %v1714 = vld [vmem:[%s1705 + $0x20] sm:$0xf]
        %v1715 = vld [vmem:[%s1705 + $0x24] sm:$0xf]
        %v1716 = vld [vmem:[%s1705 + $0x28] sm:$0xf]
        %v1717 = vld [vmem:[%s1705 + $0x2c] sm:$0xf]
        %v1718 = vld [vmem:[%s1705 + $0x30] sm:$0xf]
        %v1719 = vld [vmem:[%s1705 + $0x34] sm:$0xf]
        %v1720 = vld [vmem:[%s1705 + $0x38] sm:$0xf]
        %v1721 = vld [vmem:[%s1705 + $0x3c] sm:$0xf]
        %v1738 = vunpack.c.l.b16 %v1706
        %v1739 = vunpack.c.l.b16 %v1707
        %v1740 = vunpack.c.l.b16 %v1708
        %v1741 = vunpack.c.l.b16 %v1709
        %v1742 = vunpack.c.l.b16 %v1710
        %v1743 = vunpack.c.l.b16 %v1711
        %v1744 = vunpack.c.l.b16 %v1712
        %v1745 = vunpack.c.l.b16 %v1713
        %v1746 = vunpack.c.l.b16 %v1714
        %v1747 = vunpack.c.l.b16 %v1715
        %v1748 = vunpack.c.l.b16 %v1716
        %v1749 = vunpack.c.l.b16 %v1717
        %v1750 = vunpack.c.l.b16 %v1718
        %v1751 = vunpack.c.l.b16 %v1719
        %v1752 = vunpack.c.l.b16 %v1720
        %v1753 = vunpack.c.l.b16 %v1721
        %v1754 = vpack.c.b16 %v1739, %v1738
        %v1755 = vpack.c.b16 %v1741, %v1740
        %v1756 = vpack.c.b16 %v1743, %v1742
        %v1757 = vpack.c.b16 %v1745, %v1744
        %v1758 = vpack.c.b16 %v1747, %v1746
        %v1759 = vpack.c.b16 %v1749, %v1748
        %v1760 = vpack.c.b16 %v1751, %v1750
        %v1761 = vpack.c.b16 %v1753, %v1752
        %1770 = vmatprep.subr.bf16.mxu0 0
        %1771 = vmatpush1.bf16.msra.mxu0 %v1754
        %1772 = vmatprep.subr.bf16.mxu0 0
        %1773 = vmatpush1.bf16.msra.mxu0 %v1755
        %1774 = vmatprep.subr.bf16.mxu0 0
        %1775 = vmatpush1.bf16.msra.mxu0 %v1756
        %1776 = vmatprep.subr.bf16.mxu0 0
        %1777 = vmatpush1.bf16.msra.mxu0 %v1757
        %1778 = vmatprep.subr.bf16.mxu0 0
        %1779 = vmatpush1.bf16.msra.mxu0 %v1758
        %1780 = vmatprep.subr.bf16.mxu0 0
        %1781 = vmatpush1.bf16.msra.mxu0 %v1759
        %1782 = vmatprep.subr.bf16.mxu0 0
        %1783 = vmatpush1.bf16.msra.mxu0 %v1760
        %1784 = vmatprep.subr.bf16.mxu0 0
        %1785 = vmatpush1.bf16.msra.mxu0 %v1761
        %1786 = vmatprep.subr.bf16.mxu0 0
        %1787 = vmatpush1.bf16.msra.mxu0 0
        %1788 = vmatprep.subr.bf16.mxu0 0
        %1789 = vmatpush1.bf16.msra.mxu0 0
        %1790 = vmatprep.subr.bf16.mxu0 0
        %1791 = vmatpush1.bf16.msra.mxu0 0
        %1792 = vmatprep.subr.bf16.mxu0 0
        %1793 = vmatpush1.bf16.msra.mxu0 0
        %1794 = vmatprep.subr.bf16.mxu0 0
        %1795 = vmatpush1.bf16.msra.mxu0 0
        %1796 = vmatprep.subr.bf16.mxu0 0
        %1797 = vmatpush1.bf16.msra.mxu0 0
        %1798 = vmatprep.subr.bf16.mxu0 0
        %1799 = vmatpush1.bf16.msra.mxu0 0
        %1800 = vmatprep.subr.bf16.mxu0 0
        %1801 = vmatpush1.bf16.msra.mxu0 0
        %1802 = vmatprep.mubr.bf16.mxu0 0
        %1803 = vmatmul.mubr.bf16.gmra.mrb[0].mxu0 %v1704
        %v1804 = vpop.f32.mrb[0].mxu0
        %v1805 = vadd.f32 0.0, %v1804
        %v1806 = vpop.f32.mrb[0].mxu0
        %v1807 = vpop.f32.mrb[0].mxu0
        %v1808 = vadd.f32 0.0, %v1807
        %v1809 = vpop.f32.mrb[0].mxu0
        %1810 = vdwg.mxu0
        %v1811 = vadd.f32 %v1700, %v1805
        %v1812 = vadd.f32 %v1701, %v1808
        %v1813 = vld [vmem:[#allocation2 + $0xe] sm:$0xff]
        %v1814 = vld [vmem:[#allocation2 + $0x16] sm:$0xff]
        %v1815 = vpack.c.bf16 %v1814, %v1813
        %s1816 = scalar_lea.vmem [#allocation6], 896
        %v1817 = vld [vmem:[%s1816] sm:$0xf]
        %v1818 = vld [vmem:[%s1816 + $0x4] sm:$0xf]
        %v1819 = vld [vmem:[%s1816 + $0x8] sm:$0xf]
        %v1820 = vld [vmem:[%s1816 + $0xc] sm:$0xf]
        %v1821 = vld [vmem:[%s1816 + $0x10] sm:$0xf]
        %v1822 = vld [vmem:[%s1816 + $0x14] sm:$0xf]
        %v1823 = vld [vmem:[%s1816 + $0x18] sm:$0xf]
        %v1824 = vld [vmem:[%s1816 + $0x1c] sm:$0xf]
        %v1825 = vld [vmem:[%s1816 + $0x20] sm:$0xf]
        %v1826 = vld [vmem:[%s1816 + $0x24] sm:$0xf]
        %v1827 = vld [vmem:[%s1816 + $0x28] sm:$0xf]
        %v1828 = vld [vmem:[%s1816 + $0x2c] sm:$0xf]
        %v1829 = vld [vmem:[%s1816 + $0x30] sm:$0xf]
        %v1830 = vld [vmem:[%s1816 + $0x34] sm:$0xf]
        %v1831 = vld [vmem:[%s1816 + $0x38] sm:$0xf]
        %v1832 = vld [vmem:[%s1816 + $0x3c] sm:$0xf]
        %v1849 = vunpack.c.l.b16 %v1817
        %v1850 = vunpack.c.l.b16 %v1818
        %v1851 = vunpack.c.l.b16 %v1819
        %v1852 = vunpack.c.l.b16 %v1820
        %v1853 = vunpack.c.l.b16 %v1821
        %v1854 = vunpack.c.l.b16 %v1822
        %v1855 = vunpack.c.l.b16 %v1823
        %v1856 = vunpack.c.l.b16 %v1824
        %v1857 = vunpack.c.l.b16 %v1825
        %v1858 = vunpack.c.l.b16 %v1826
        %v1859 = vunpack.c.l.b16 %v1827
        %v1860 = vunpack.c.l.b16 %v1828
        %v1861 = vunpack.c.l.b16 %v1829
        %v1862 = vunpack.c.l.b16 %v1830
        %v1863 = vunpack.c.l.b16 %v1831
        %v1864 = vunpack.c.l.b16 %v1832
        %v1865 = vpack.c.b16 %v1850, %v1849
        %v1866 = vpack.c.b16 %v1852, %v1851
        %v1867 = vpack.c.b16 %v1854, %v1853
        %v1868 = vpack.c.b16 %v1856, %v1855
        %v1869 = vpack.c.b16 %v1858, %v1857
        %v1870 = vpack.c.b16 %v1860, %v1859
        %v1871 = vpack.c.b16 %v1862, %v1861
        %v1872 = vpack.c.b16 %v1864, %v1863
        %1881 = vmatprep.subr.bf16.mxu0 0
        %1882 = vmatpush1.bf16.msra.mxu0 %v1865
        %1883 = vmatprep.subr.bf16.mxu0 0
        %1884 = vmatpush1.bf16.msra.mxu0 %v1866
        %1885 = vmatprep.subr.bf16.mxu0 0
        %1886 = vmatpush1.bf16.msra.mxu0 %v1867
        %1887 = vmatprep.subr.bf16.mxu0 0
        %1888 = vmatpush1.bf16.msra.mxu0 %v1868
        %1889 = vmatprep.subr.bf16.mxu0 0
        %1890 = vmatpush1.bf16.msra.mxu0 %v1869
        %1891 = vmatprep.subr.bf16.mxu0 0
        %1892 = vmatpush1.bf16.msra.mxu0 %v1870
        %1893 = vmatprep.subr.bf16.mxu0 0
        %1894 = vmatpush1.bf16.msra.mxu0 %v1871
        %1895 = vmatprep.subr.bf16.mxu0 0
        %1896 = vmatpush1.bf16.msra.mxu0 %v1872
        %1897 = vmatprep.subr.bf16.mxu0 0
        %1898 = vmatpush1.bf16.msra.mxu0 0
        %1899 = vmatprep.subr.bf16.mxu0 0
        %1900 = vmatpush1.bf16.msra.mxu0 0
        %1901 = vmatprep.subr.bf16.mxu0 0
        %1902 = vmatpush1.bf16.msra.mxu0 0
        %1903 = vmatprep.subr.bf16.mxu0 0
        %1904 = vmatpush1.bf16.msra.mxu0 0
        %1905 = vmatprep.subr.bf16.mxu0 0
        %1906 = vmatpush1.bf16.msra.mxu0 0
        %1907 = vmatprep.subr.bf16.mxu0 0
        %1908 = vmatpush1.bf16.msra.mxu0 0
        %1909 = vmatprep.subr.bf16.mxu0 0
        %1910 = vmatpush1.bf16.msra.mxu0 0
        %1911 = vmatprep.subr.bf16.mxu0 0
        %1912 = vmatpush1.bf16.msra.mxu0 0
        %1913 = vmatprep.mubr.bf16.mxu0 0
        %1914 = vmatmul.mubr.bf16.gmra.mrb[0].mxu0 %v1815
        %v1915 = vpop.f32.mrb[0].mxu0
        %v1916 = vadd.f32 0.0, %v1915
        %v1917 = vpop.f32.mrb[0].mxu0
        %v1918 = vpop.f32.mrb[0].mxu0
        %v1919 = vadd.f32 0.0, %v1918
        %v1920 = vpop.f32.mrb[0].mxu0
        %1921 = vdwg.mxu0
        %v1922 = vadd.f32 %v1811, %v1916
        %v1923 = vadd.f32 %v1812, %v1919
        %v1924 = vld [vmem:[%s2] sm:$0x1]
        %v1926 = vlaneseq
        %v1927 = vshrl.u32 %v1926, 7
        %v1928 = vsub.s32 0, %v1927
        %v1929 = vrot.slane %v1924, %v1928
        %v1931 = vadd.f32 %v1922, %v1929
        %v1932 = vadd.f32 %v1923, %v1929
        %1933 = vst [vmem:[%s203] sm:$0xff] %v1931
        %1934 = vst [vmem:[%s203 + $0x8] sm:$0xff] %v1932
        %s1935 = sand.u32 %s97, 1
        %s1936 = scalar_lea.sflag [#allocation5], %s1935
        %s1937 = sand.u32 %s97, 1
        %s1938 = smul.addr %s1937, 16
        %s1939 = scalar_lea.vmem [#allocation8], %s1938
        // Predicated region
        $region41: #{tpu_custom_call.1} parent=31 // pred_check
          %p1940 = pneg %p107
        $region42: #{tpu_custom_call.1} parent=31 // pred_check_branch
          %1942 = sbr.rel (%p1940) target = $region44
        $region43: #{tpu_custom_call.1} parent=31 // pred_region
          %s1944 = ssub.s32 256, 256
          %1945 = vsyncadd %s1936, %s1944
          %s1946 = smul.addr %s21, 2
          %s1947 = smul.addr %s1946, 128
          %s1948 = scalar_lea.hbm %s3, %s1947
          %s1949 = sshll.u32 %s1939, 4
          %s1950 = int_to_ptr.vmem [resolvable:$true] %s1949
          %1955 = dma.vmem_to_hbm [thread:$0]  %s1950, 256, %s1948, %s1936, 128, 128, 8
        $region44: #{tpu_custom_call.1} parent=31 // pred_fallthru
          _
      $region32: #{tpu_custom_call.1} parent=5 // pred_fallthru
        _
      %p1956 = scmp.le.s32.totalorder 2, %s16
      // Predicated region
      $region45: #{tpu_custom_call.1} parent=5 // pred_check
        %p1957 = pneg %p1956
      $region46: #{tpu_custom_call.1} parent=5 // pred_check_branch
        %1959 = sbr.rel (%p1957) target = $region48
      $region47: #{tpu_custom_call.1} parent=5 // pred_region
        %s1960 = ssub.s32 %s16, 2
        // Predicated region
        $region49: #{tpu_custom_call.1} parent=47 // pred_check
          %p1961 = pneg %p113
        $region50: #{tpu_custom_call.1} parent=47 // pred_check_branch
          %1963 = sbr.rel (%p1961) target = $region52
        $region51: #{tpu_custom_call.1} parent=47 // pred_region
          %s1964 = sand.u32 %s98, 1
          %s1965 = scalar_lea.sflag [#allocation5], %s1964
          %s1966 = sand.u32 %s98, 1
          %s1967 = smul.addr %s1966, 16
          %s1968 = scalar_lea.vmem [#allocation8], %s1967
          %1969 = dma.done %s1965, 256
        $region52: #{tpu_custom_call.1} parent=47 // pred_fallthru
          _
      $region48: #{tpu_custom_call.1} parent=5 // pred_fallthru
        _
    $region6: #{tpu_custom_call.1} parent=1 // loop_footer
      %s20 = sadd.s32 1, %s16
    $region7: #{tpu_custom_call.1} parent=1 // loop_footer_branch
      %15 = sbr.rel target = $region3
    $region8: #{tpu_custom_call.1} parent=1 // loop_exit
      _
    %1970 = vsyncpa [#allocation4], 1
    %s1971 = scalar_lea.sflag [#allocation4], 1
    %1972 = vsyncpa %s1971, 1
    %1973 = vsyncpa [#allocation7], 1
    %1974 = vsyncpa [#allocation5], 1
    %s1975 = scalar_lea.sflag [#allocation5], 1
    %1976 = vsyncpa %s1975, 1

// kernel: tpu_custom_call.1
$region0: #{tpu_custom_call.1}
  #allocation0 [shape = 'u32[]', space=smem, size = 0x4, offset = 0x4, fixed_abs, tag = 'smem constant byte address 0x4 - core index']
  #allocation1 [shape = 'u32[144,128]{1,0:T(1,128)}', space=vmem, size = 0x12000, scoped, tag = 'internal scratch']
  #allocation2 [shape = 'f32[30,128]{1,0:T(8,128)}', space=vmem, size = 0x4000, scoped, tag = 'scratch operand']
  %s0 = inlined_call_operand.hbm [shape: f32[2,4,16,16], index: 0, kind: input, shape index: {}]
  %s1 = inlined_call_operand.hbm [shape: bf16[15,128,128], index: 1, kind: input, shape index: {}]
  %s2 = inlined_call_operand.vmem [shape: f32[1,128], index: 2, kind: input, shape index: {}]
  %s3 = inlined_call_operand.hbm [shape: f32[2,16,128], index: 3, kind: output, shape index: {}]
  %s4 = sld [smem:[#allocation0]]
  $region53: #{tpu_custom_call.1} parent=0
    _
  %s6 = ssub.s32 1, %s4
  %s7 = scalar_select 0, %s6, %s4
  $region1: #{tpu_custom_call.1} parent=0
    #allocation3 [shape = 'u8[65536]{0}', space=vmem, size = 0x10000, scoped, tag = 'input window, operand 0']
    #allocation4 [shape = 's32[2]{0}', space=sflag, size = 0x8, scoped, tag = 'scoped memory for tpu_custom_call.1']
    #allocation5 [shape = 's32[2]{0}', space=sflag, size = 0x8, scoped, tag = 'scoped memory for tpu_custom_call.1']
    #allocation6 [shape = 'u8[491520]{0}', space=vmem, size = 0x78000, scoped, tag = 'input window, operand 1, single buffered']
    #allocation7 [shape = 's32[1]{0}', space=sflag, size = 0x4, scoped, tag = 'scoped memory for tpu_custom_call.1']
    #allocation8 [shape = 'u8[16384]{0}', space=vmem, size = 0x4000, scoped, tag = 'output window, operand 0']
    %8 = vsyncpa [#allocation4], 0
    %s9 = scalar_lea.sflag [#allocation4], 1
    %10 = vsyncpa %s9, 0
    %11 = vsyncpa [#allocation7], 0
    %12 = vsyncpa [#allocation5], 0
    %s13 = scalar_lea.sflag [#allocation5], 1
    %14 = vsyncpa %s13, 0
    loop: start=0, step=1, limit=4
    $region2: #{tpu_custom_call.1} parent=1 // loop_pre_header
      _
    $region3: #{tpu_custom_call.1} parent=1 // loop_header
      %s16 = sphi 0, %s20
      %p17 = scmp.ge.s32.totalorder %s16, 4
      %s26 = sphi 0, %s28
      %s29 = sphi 0, %s26
      %s30 = sphi 0, %s29
      %s46 = sphi 0, %s30
      %s50 = sphi 0, %s50
      %s52 = sphi 0, %s50
      %s53 = sphi 0, %s52
      %s67 = sphi 0, %s53
      %s71 = sphi 0, %s71
      %s73 = sphi 0, %s71
      %s74 = sphi 0, %s73
      %s88 = sphi 0, %s74
      %s94 = sphi 0, %s96
      %s97 = sphi 0, %s94
      %s98 = sphi 0, %s97
      %s114 = sphi 0, %s98
    $region4: #{tpu_custom_call.1} parent=1 // loop_header_branch
      %19 = sbr.rel (%p17) target = $region8
    $region5: #{tpu_custom_call.1} parent=1 // loop_body
      %s21 = ssub.s32 %s16, 1
      %s22 = ssub.s32 %s16, 2
      %s23 = sadd.s32 %s16, 1
      %s24 = ssub.s32 %s16, %s23
      %p25 = scmp.eq.s32.totalorder %s24, 0
      %s27 = sadd.s32 %s26, 1
      %s28 = scalar_select %p25, %s26, %s27
      %p31 = pneg %p25
      %p32 = scmp.eq.s32.totalorder %s16, 1
      %p33 = por %p31, %p32
      %p34 = scmp.ne.s32.totalorder %s26, %s29
      %p35 = scmp.eq.s32.totalorder %s16, 0
      %p36 = por %p34, %p35
      %p37 = scmp.ne.s32.totalorder %s26, %s29
      %p38 = scmp.eq.s32.totalorder %s21, 1
      %p39 = por %p37, %p38
      %p40 = scmp.ne.s32.totalorder %s29, %s30
      %p41 = scmp.eq.s32.totalorder %s21, 0
      %p42 = por %p40, %p41
      %p43 = scmp.ne.s32.totalorder %s29, %s30
      %p44 = scmp.eq.s32.totalorder %s22, 1
      %p45 = por %p43, %p44
      %p47 = scmp.ne.s32.totalorder %s30, %s46
      %p48 = scmp.eq.s32.totalorder %s22, 0
      %p49 = por %p47, %p48
      %s51 = sadd.s32 %s50, 1
      %p54 = scmp.eq.s32.totalorder %s16, 1
      %p55 = scmp.ne.s32.totalorder %s50, %s52
      %p56 = scmp.eq.s32.totalorder %s16, 0
      %p57 = por %p55, %p56
      %p58 = scmp.ne.s32.totalorder %s50, %s52
      %p59 = scmp.eq.s32.totalorder %s21, 1
      %p60 = por %p58, %p59
      %p61 = scmp.ne.s32.totalorder %s52, %s53
      %p62 = scmp.eq.s32.totalorder %s21, 0
      %p63 = por %p61, %p62
      %p64 = scmp.ne.s32.totalorder %s52, %s53
      %p65 = scmp.eq.s32.totalorder %s22, 1
      %p66 = por %p64, %p65
      %p68 = scmp.ne.s32.totalorder %s53, %s67
      %p69 = scmp.eq.s32.totalorder %s22, 0
      %p70 = por %p68, %p69
      %s72 = sadd.s32 %s71, 1
      %p75 = scmp.eq.s32.totalorder %s16, 1
      %p76 = scmp.ne.s32.totalorder %s71, %s73
      %p77 = scmp.eq.s32.totalorder %s16, 0
      %p78 = por %p76, %p77
      %p79 = scmp.ne.s32.totalorder %s71, %s73
      %p80 = scmp.eq.s32.totalorder %s21, 1
      %p81 = por %p79, %p80
      %p82 = scmp.ne.s32.totalorder %s73, %s74
      %p83 = scmp.eq.s32.totalorder %s21, 0
      %p84 = por %p82, %p83
      %p85 = scmp.ne.s32.totalorder %s73, %s74
      %p86 = scmp.eq.s32.totalorder %s22, 1
      %p87 = por %p85, %p86
      %p89 = scmp.ne.s32.totalorder %s74, %s88
      %p90 = scmp.eq.s32.totalorder %s22, 0
      %p91 = por %p89, %p90
      %s92 = ssub.s32 %s16, %s23
      %p93 = scmp.eq.s32.totalorder %s92, 0
      %s95 = sadd.s32 %s94, 1
      %s96 = scalar_select %p93, %s94, %s95
      %p99 = pneg %p93
      %p100 = scmp.eq.s32.totalorder %s16, 1
      %p101 = por %p99, %p100
      %p102 = scmp.ne.s32.totalorder %s94, %s97
      %p103 = scmp.eq.s32.totalorder %s16, 0
      %p104 = por %p102, %p103
      %p105 = scmp.ne.s32.totalorder %s94, %s97
      %p106 = scmp.eq.s32.totalorder %s21, 1
      %p107 = por %p105, %p106
      %p108 = scmp.ne.s32.totalorder %s97, %s98
      %p109 = scmp.eq.s32.totalorder %s21, 0
      %p110 = por %p108, %p109
      %p111 = scmp.ne.s32.totalorder %s97, %s98
      %p112 = scmp.eq.s32.totalorder %s22, 1
      %p113 = por %p111, %p112
      %p115 = scmp.ne.s32.totalorder %s98, %s114
      %p116 = scmp.eq.s32.totalorder %s22, 0
      %p117 = por %p115, %p116
      %p118 = scmp.le.s32.totalorder 1, %s16
      %p119 = scmp.lt.s32.totalorder %s16, 3
      %p120 = pnand %p118, %p119
      %p121 = pneg %p120
      // Predicated region
      $region9: #{tpu_custom_call.1} parent=5 // pred_check
        _
      $region10: #{tpu_custom_call.1} parent=5 // pred_check_branch
        %123 = sbr.rel (%p120) target = $region12
      $region11: #{tpu_custom_call.1} parent=5 // pred_region
        %s124 = ssub.s32 %s16, 1
        // Predicated region
        $region13: #{tpu_custom_call.1} parent=11 // pred_check
          %p125 = pneg %p63
        $region14: #{tpu_custom_call.1} parent=11 // pred_check_branch
          %127 = sbr.rel (%p125) target = $region16
        $region15: #{tpu_custom_call.1} parent=11 // pred_region
          %s129 = ssub.s32 15360, 15360
          %130 = vsyncadd [#allocation7], %s129
          %s131 = sshll.u32 [#allocation6], 4
          %s132 = int_to_ptr.vmem [resolvable:$true] %s131
          %137 = dma.hbm_to_vmem [thread:$0]  %s1, 15360, %s132, [#allocation7], 64, 64, 4
        $region16: #{tpu_custom_call.1} parent=11 // pred_fallthru
          _
        // Predicated region
        $region17: #{tpu_custom_call.1} parent=11 // pred_check
          %p138 = pneg %p84
        $region18: #{tpu_custom_call.1} parent=11 // pred_check_branch
          %140 = sbr.rel (%p138) target = $region20
        $region19: #{tpu_custom_call.1} parent=11 // pred_region
          _
        $region20: #{tpu_custom_call.1} parent=11 // pred_fallthru
          _
      $region12: #{tpu_custom_call.1} parent=5 // pred_fallthru
        _
      %p141 = scmp.lt.s32.totalorder %s16, 2
      // Predicated region
      $region21: #{tpu_custom_call.1} parent=5 // pred_check
        %p142 = pneg %p141
      $region22: #{tpu_custom_call.1} parent=5 // pred_check_branch
        %144 = sbr.rel (%p142) target = $region24
      $region23: #{tpu_custom_call.1} parent=5 // pred_region
        // Predicated region
        $region25: #{tpu_custom_call.1} parent=23 // pred_check
          %p145 = pneg %p36
        $region26: #{tpu_custom_call.1} parent=23 // pred_check_branch
          %147 = sbr.rel (%p145) target = $region28
        $region27: #{tpu_custom_call.1} parent=23 // pred_region
          %s148 = sand.u32 %s26, 1
          %s149 = scalar_lea.sflag [#allocation4], %s148
          %s150 = sand.u32 %s26, 1
          %s151 = smul.addr %s150, 64
          %s152 = scalar_lea.vmem [#allocation3], %s151
          %s154 = ssub.s32 1024, 1024
          %155 = vsyncadd %s149, %s154
          %s156 = smul.addr %s16, 8
          %s157 = smul.addr %s156, 128
          %s158 = scalar_lea.hbm %s0, %s157
          %s159 = sshll.u32 %s152, 4
          %s160 = int_to_ptr.vmem [resolvable:$true] %s159
          %165 = dma.hbm_to_vmem [thread:$0]  %s158, 1024, %s160, %s149, 128, 128, 8
        $region28: #{tpu_custom_call.1} parent=23 // pred_fallthru
          _
      $region24: #{tpu_custom_call.1} parent=5 // pred_fallthru
        _
      %p166 = scmp.le.s32.totalorder 1, %s16
      %p167 = scmp.lt.s32.totalorder %s16, 3
      %p168 = pnand %p166, %p167
      %p169 = pneg %p168
      // Predicated region
      $region29: #{tpu_custom_call.1} parent=5 // pred_check
        _
      $region30: #{tpu_custom_call.1} parent=5 // pred_check_branch
        %171 = sbr.rel (%p168) target = $region32
      $region31: #{tpu_custom_call.1} parent=5 // pred_region
        %s172 = ssub.s32 %s16, 1
        %s173 = sand.u32 %s29, 1
        %s174 = scalar_lea.sflag [#allocation4], %s173
        %s175 = sand.u32 %s29, 1
        %s176 = smul.addr %s175, 64
        %s177 = scalar_lea.vmem [#allocation3], %s176
        // Predicated region
        $region33: #{tpu_custom_call.1} parent=31 // pred_check
          %p178 = pneg %p42
        $region34: #{tpu_custom_call.1} parent=31 // pred_check_branch
          %180 = sbr.rel (%p178) target = $region36
        $region35: #{tpu_custom_call.1} parent=31 // pred_region
          %181 = dma.done %s174, 1024
        $region36: #{tpu_custom_call.1} parent=31 // pred_fallthru
          _
        // Predicated region
        $region37: #{tpu_custom_call.1} parent=31 // pred_check
          %p182 = pneg %p63
        $region38: #{tpu_custom_call.1} parent=31 // pred_check_branch
          %184 = sbr.rel (%p182) target = $region40
        $region39: #{tpu_custom_call.1} parent=31 // pred_region
          %185 = dma.done [#allocation7], 15360
        $region40: #{tpu_custom_call.1} parent=31 // pred_fallthru
          _
        %s186 = sand.u32 %s29, 1
        %s187 = scalar_lea.sflag [#allocation4], %s186
        %s188 = sand.u32 %s29, 1
        %s189 = smul.addr %s188, 64
        %s190 = scalar_lea.vmem [#allocation3], %s189
        %p191 = pneg %p42
        %p192 = pneg %p39
        %p193 = pneg %p63
        %p194 = pneg %p60
        %p195 = pneg %p84
        %p196 = pneg %p81
        %p197 = pneg %p110
        %p198 = pneg %p107
        %s199 = sand.u32 %s97, 1
        %s200 = scalar_lea.sflag [#allocation5], %s199
        %s201 = sand.u32 %s97, 1
        %s202 = smul.addr %s201, 16
        %s203 = scalar_lea.vmem [#allocation8], %s202
        %205 = vst [vmem:[#allocation2] sm:$0xff] 0.0
        %206 = vst [vmem:[#allocation2 + $0x8] sm:$0xff] 0.0
        %207 = vst [vmem:[#allocation2 + $0x10] sm:$0xff] 0.0
        %208 = vst [vmem:[#allocation2 + $0x18] sm:$0x3f] 0.0
        %v209 = vld [vmem:[%s177] sm:$0xff]
        %v210 = vld [vmem:[%s177 + $0x8] sm:$0xff]
        %213 = vrot.lane.b32.xlu0 %v209, 7
        %v214 = vpop.permute.xlu0 %213
        %215 = vrot.lane.b32.xlu0 %v210, 7
        %v216 = vpop.permute.xlu0 %215
        %vm219 = vcmask 187448
        %220 = vst.msk [vmem:[#allocation2 + $0x7] sm:$0xff] %vm219, %v214
        %221 = vst.msk [vmem:[#allocation2 + $0xf] sm:$0xff] %vm219, %v216
        %s222 = scalar_lea.vmem %s177, 16 [#allocation3]
        %v223 = vld [vmem:[%s222] sm:$0xff]
        %v224 = vld [vmem:[%s222 + $0x8] sm:$0xff]
        %227 = vrot.lane.b32.xlu0 %v223, 37
        %v228 = vpop.permute.xlu0 %227
        %229 = vrot.lane.b32.xlu0 %v224, 37
        %v230 = vpop.permute.xlu0 %229
        %vm233 = vcmask 433448
        %234 = vst.msk [vmem:[#allocation2 + $0x7] sm:$0xff] %vm233, %v228
        %235 = vst.msk [vmem:[#allocation2 + $0xf] sm:$0xff] %vm233, %v230
        %s236 = scalar_lea.vmem %s177, 32 [#allocation3]
        %v237 = vld [vmem:[%s236] sm:$0xff]
        %v238 = vld [vmem:[%s236 + $0x8] sm:$0xff]
        %241 = vrot.lane.b32.xlu0 %v237, 67
        %v242 = vpop.permute.xlu0 %241
        %243 = vrot.lane.b32.xlu0 %v238, 67
        %v244 = vpop.permute.xlu0 %243
        %vm247 = vcmask 679448
        %248 = vst.msk [vmem:[#allocation2 + $0x7] sm:$0xff] %vm247, %v242
        %249 = vst.msk [vmem:[#allocation2 + $0xf] sm:$0xff] %vm247, %v244
        %s250 = scalar_lea.vmem %s177, 48 [#allocation3]
        %v251 = vld [vmem:[%s250] sm:$0xff]
        %v252 = vld [vmem:[%s250 + $0x8] sm:$0xff]
        %255 = vrot.lane.b32.xlu0 %v251, 97
        %v256 = vpop.permute.xlu0 %255
        %257 = vrot.lane.b32.xlu0 %v252, 97
        %v258 = vpop.permute.xlu0 %257
        %vm261 = vcmask 925448
        %262 = vst.msk [vmem:[#allocation2 + $0x7] sm:$0xff] %vm261, %v256
        %263 = vst.msk [vmem:[#allocation2 + $0xf] sm:$0xff] %vm261, %v258
        %v264 = vld [vmem:[#allocation2] sm:$0xff]
        %v265 = vld [vmem:[#allocation2 + $0x8] sm:$0xff]
        %v266 = vpack.c.bf16 %v265, %v264
        %v267 = vld [vmem:[#allocation6] sm:$0xf]
        %v268 = vld [vmem:[#allocation6 + $0x4] sm:$0xf]
        %v269 = vld [vmem:[#allocation6 + $0x8] sm:$0xf]
        %v270 = vld [vmem:[#allocation6 + $0xc] sm:$0xf]
        %v271 = vld [vmem:[#allocation6 + $0x10] sm:$0xf]
        %v272 = vld [vmem:[#allocation6 + $0x14] sm:$0xf]
        %v273 = vld [vmem:[#allocation6 + $0x18] sm:$0xf]
        %v274 = vld [vmem:[#allocation6 + $0x1c] sm:$0xf]
        %v275 = vld [vmem:[#allocation6 + $0x20] sm:$0xf]
        %v276 = vld [vmem:[#allocation6 + $0x24] sm:$0xf]
        %v277 = vld [vmem:[#allocation6 + $0x28] sm:$0xf]
        %v278 = vld [vmem:[#allocation6 + $0x2c] sm:$0xf]
        %v279 = vld [vmem:[#allocation6 + $0x30] sm:$0xf]
        %v280 = vld [vmem:[#allocation6 + $0x34] sm:$0xf]
        %v281 = vld [vmem:[#allocation6 + $0x38] sm:$0xf]
        %v282 = vld [vmem:[#allocation6 + $0x3c] sm:$0xf]
        %v283 = vld [vmem:[#allocation2 + $0x1] sm:$0xff]
        %v284 = vld [vmem:[#allocation2 + $0x9] sm:$0xff]
        %v285 = vpack.c.bf16 %v284, %v283
        %s286 = scalar_lea.vmem [#allocation6], 64
        %v287 = vld [vmem:[%s286] sm:$0xf]
        %v288 = vld [vmem:[%s286 + $0x4] sm:$0xf]
        %v289 = vld [vmem:[%s286 + $0x8] sm:$0xf]
        %v290 = vld [vmem:[%s286 + $0xc] sm:$0xf]
        %v291 = vld [vmem:[%s286 + $0x10] sm:$0xf]
        %v292 = vld [vmem:[%s286 + $0x14] sm:$0xf]
        %v293 = vld [vmem:[%s286 + $0x18] sm:$0xf]
        %v294 = vld [vmem:[%s286 + $0x1c] sm:$0xf]
        %v295 = vld [vmem:[%s286 + $0x20] sm:$0xf]
        %v296 = vld [vmem:[%s286 + $0x24] sm:$0xf]
        %v297 = vld [vmem:[%s286 + $0x28] sm:$0xf]
        %v298 = vld [vmem:[%s286 + $0x2c] sm:$0xf]
        %v299 = vld [vmem:[%s286 + $0x30] sm:$0xf]
        %v300 = vld [vmem:[%s286 + $0x34] sm:$0xf]
        %v301 = vld [vmem:[%s286 + $0x38] sm:$0xf]
        %v302 = vld [vmem:[%s286 + $0x3c] sm:$0xf]
        %v319 = vunpack.c.l.b16 %v287
        %v320 = vunpack.c.l.b16 %v288
        %v321 = vunpack.c.l.b16 %v289
        %v322 = vunpack.c.l.b16 %v290
        %v323 = vunpack.c.l.b16 %v291
        %v324 = vunpack.c.l.b16 %v292
        %v325 = vunpack.c.l.b16 %v293
        %v326 = vunpack.c.l.b16 %v294
        %v327 = vunpack.c.l.b16 %v295
        %v328 = vunpack.c.l.b16 %v296
        %v329 = vunpack.c.l.b16 %v297
        %v330 = vunpack.c.l.b16 %v298
        %v331 = vunpack.c.l.b16 %v299
        %v332 = vunpack.c.l.b16 %v300
        %v333 = vunpack.c.l.b16 %v301
        %v334 = vunpack.c.l.b16 %v302
        %v335 = vpack.c.b16 %v320, %v319
        %v336 = vpack.c.b16 %v322, %v321
        %v337 = vpack.c.b16 %v324, %v323
        %v338 = vpack.c.b16 %v326, %v325
        %v339 = vpack.c.b16 %v328, %v327
        %v340 = vpack.c.b16 %v330, %v329
        %v341 = vpack.c.b16 %v332, %v331
        %v342 = vpack.c.b16 %v334, %v333
        %351 = vmatprep.subr.bf16.mxu0 0
        %352 = vmatpush1.bf16.msra.mxu0 %v335
        %353 = vmatprep.subr.bf16.mxu0 0
        %354 = vmatpush1.bf16.msra.mxu0 %v336
        %355 = vmatprep.subr.bf16.mxu0 0
        %356 = vmatpush1.bf16.msra.mxu0 %v337
        %357 = vmatprep.subr.bf16.mxu0 0
        %358 = vmatpush1.bf16.msra.mxu0 %v338
        %359 = vmatprep.subr.bf16.mxu0 0
        %360 = vmatpush1.bf16.msra.mxu0 %v339
        %361 = vmatprep.subr.bf16.mxu0 0
        %362 = vmatpush1.bf16.msra.mxu0 %v340
        %363 = vmatprep.subr.bf16.mxu0 0
        %364 = vmatpush1.bf16.msra.mxu0 %v341
        %365 = vmatprep.subr.bf16.mxu0 0
        %366 = vmatpush1.bf16.msra.mxu0 %v342
        %367 = vmatprep.subr.bf16.mxu0 0
        %368 = vmatpush1.bf16.msra.mxu0 0
        %369 = vmatprep.subr.bf16.mxu0 0
        %370 = vmatpush1.bf16.msra.mxu0 0
        %371 = vmatprep.subr.bf16.mxu0 0
        %372 = vmatpush1.bf16.msra.mxu0 0
        %373 = vmatprep.subr.bf16.mxu0 0
        %374 = vmatpush1.bf16.msra.mxu0 0
        %375 = vmatprep.subr.bf16.mxu0 0
        %376 = vmatpush1.bf16.msra.mxu0 0
        %377 = vmatprep.subr.bf16.mxu0 0
        %378 = vmatpush1.bf16.msra.mxu0 0
        %379 = vmatprep.subr.bf16.mxu0 0
        %380 = vmatpush1.bf16.msra.mxu0 0
        %381 = vmatprep.subr.bf16.mxu0 0
        %382 = vmatpush1.bf16.msra.mxu0 0
        %383 = vmatprep.mubr.bf16.mxu0 0
        %384 = vmatmul.mubr.bf16.gmra.mrb[0].mxu0 %v285
        %v385 = vpop.f32.mrb[0].mxu0
        %v386 = vadd.f32 0.0, %v385
        %v387 = vpop.f32.mrb[0].mxu0
        %v388 = vpop.f32.mrb[0].mxu0
        %v389 = vadd.f32 0.0, %v388
        %v390 = vpop.f32.mrb[0].mxu0
        %391 = vdwg.mxu0
        %v408 = vunpack.c.l.b16 %v267
        %v409 = vunpack.c.l.b16 %v268
        %v410 = vunpack.c.l.b16 %v269
        %v411 = vunpack.c.l.b16 %v270
        %v412 = vunpack.c.l.b16 %v271
        %v413 = vunpack.c.l.b16 %v272
        %v414 = vunpack.c.l.b16 %v273
        %v415 = vunpack.c.l.b16 %v274
        %v416 = vunpack.c.l.b16 %v275
        %v417 = vunpack.c.l.b16 %v276
        %v418 = vunpack.c.l.b16 %v277
        %v419 = vunpack.c.l.b16 %v278
        %v420 = vunpack.c.l.b16 %v279
        %v421 = vunpack.c.l.b16 %v280
        %v422 = vunpack.c.l.b16 %v281
        %v423 = vunpack.c.l.b16 %v282
        %v424 = vpack.c.b16 %v409, %v408
        %v425 = vpack.c.b16 %v411, %v410
        %v426 = vpack.c.b16 %v413, %v412
        %v427 = vpack.c.b16 %v415, %v414
        %v428 = vpack.c.b16 %v417, %v416
        %v429 = vpack.c.b16 %v419, %v418
        %v430 = vpack.c.b16 %v421, %v420
        %v431 = vpack.c.b16 %v423, %v422
        %440 = vmatprep.subr.bf16.mxu0 0
        %441 = vmatpush1.bf16.msra.mxu0 %v424
        %442 = vmatprep.subr.bf16.mxu0 0
        %443 = vmatpush1.bf16.msra.mxu0 %v425
        %444 = vmatprep.subr.bf16.mxu0 0
        %445 = vmatpush1.bf16.msra.mxu0 %v426
        %446 = vmatprep.subr.bf16.mxu0 0
        %447 = vmatpush1.bf16.msra.mxu0 %v427
        %448 = vmatprep.subr.bf16.mxu0 0
        %449 = vmatpush1.bf16.msra.mxu0 %v428
        %450 = vmatprep.subr.bf16.mxu0 0
        %451 = vmatpush1.bf16.msra.mxu0 %v429
        %452 = vmatprep.subr.bf16.mxu0 0
        %453 = vmatpush1.bf16.msra.mxu0 %v430
        %454 = vmatprep.subr.bf16.mxu0 0
        %455 = vmatpush1.bf16.msra.mxu0 %v431
        %456 = vmatprep.subr.bf16.mxu0 0
        %457 = vmatpush1.bf16.msra.mxu0 0
        %458 = vmatprep.subr.bf16.mxu0 0
        %459 = vmatpush1.bf16.msra.mxu0 0
        %460 = vmatprep.subr.bf16.mxu0 0
        %461 = vmatpush1.bf16.msra.mxu0 0
        %462 = vmatprep.subr.bf16.mxu0 0
        %463 = vmatpush1.bf16.msra.mxu0 0
        %464 = vmatprep.subr.bf16.mxu0 0
        %465 = vmatpush1.bf16.msra.mxu0 0
        %466 = vmatprep.subr.bf16.mxu0 0
        %467 = vmatpush1.bf16.msra.mxu0 0
        %468 = vmatprep.subr.bf16.mxu0 0
        %469 = vmatpush1.bf16.msra.mxu0 0
        %470 = vmatprep.subr.bf16.mxu0 0
        %471 = vmatpush1.bf16.msra.mxu0 0
        %472 = vmatprep.mubr.bf16.mxu0 0
        %473 = vmatmul.mubr.bf16.gmra.mrb[0].mxu0 %v266
        %v474 = vpop.f32.mrb[0].mxu0
        %v475 = vadd.f32 %v386, %v474
        %v476 = vpop.f32.mrb[0].mxu0
        %v477 = vpop.f32.mrb[0].mxu0
        %v478 = vadd.f32 %v389, %v477
        %v479 = vpop.f32.mrb[0].mxu0
        %480 = vdwg.mxu0
        %v481 = vld [vmem:[#allocation2 + $0x2] sm:$0xff]
        %v482 = vld [vmem:[#allocation2 + $0xa] sm:$0xff]
        %v483 = vpack.c.bf16 %v482, %v481
        %s484 = scalar_lea.vmem [#allocation6], 128
        %v485 = vld [vmem:[%s484] sm:$0xf]
        %v486 = vld [vmem:[%s484 + $0x4] sm:$0xf]
        %v487 = vld [vmem:[%s484 + $0x8] sm:$0xf]
        %v488 = vld [vmem:[%s484 + $0xc] sm:$0xf]
        %v489 = vld [vmem:[%s484 + $0x10] sm:$0xf]
        %v490 = vld [vmem:[%s484 + $0x14] sm:$0xf]
        %v491 = vld [vmem:[%s484 + $0x18] sm:$0xf]
        %v492 = vld [vmem:[%s484 + $0x1c] sm:$0xf]
        %v493 = vld [vmem:[%s484 + $0x20] sm:$0xf]
        %v494 = vld [vmem:[%s484 + $0x24] sm:$0xf]
        %v495 = vld [vmem:[%s484 + $0x28] sm:$0xf]
        %v496 = vld [vmem:[%s484 + $0x2c] sm:$0xf]
        %v497 = vld [vmem:[%s484 + $0x30] sm:$0xf]
        %v498 = vld [vmem:[%s484 + $0x34] sm:$0xf]
        %v499 = vld [vmem:[%s484 + $0x38] sm:$0xf]
        %v500 = vld [vmem:[%s484 + $0x3c] sm:$0xf]
        %v517 = vunpack.c.l.b16 %v485
        %v518 = vunpack.c.l.b16 %v486
        %v519 = vunpack.c.l.b16 %v487
        %v520 = vunpack.c.l.b16 %v488
        %v521 = vunpack.c.l.b16 %v489
        %v522 = vunpack.c.l.b16 %v490
        %v523 = vunpack.c.l.b16 %v491
        %v524 = vunpack.c.l.b16 %v492
        %v525 = vunpack.c.l.b16 %v493
        %v526 = vunpack.c.l.b16 %v494
        %v527 = vunpack.c.l.b16 %v495
        %v528 = vunpack.c.l.b16 %v496
        %v529 = vunpack.c.l.b16 %v497
        %v530 = vunpack.c.l.b16 %v498
        %v531 = vunpack.c.l.b16 %v499
        %v532 = vunpack.c.l.b16 %v500
        %v533 = vpack.c.b16 %v518, %v517
        %v534 = vpack.c.b16 %v520, %v519
        %v535 = vpack.c.b16 %v522, %v521
        %v536 = vpack.c.b16 %v524, %v523
        %v537 = vpack.c.b16 %v526, %v525
        %v538 = vpack.c.b16 %v528, %v527
        %v539 = vpack.c.b16 %v530, %v529
        %v540 = vpack.c.b16 %v532, %v531
        %549 = vmatprep.subr.bf16.mxu0 0
        %550 = vmatpush1.bf16.msra.mxu0 %v533
        %551 = vmatprep.subr.bf16.mxu0 0
        %552 = vmatpush1.bf16.msra.mxu0 %v534
        %553 = vmatprep.subr.bf16.mxu0 0
        %554 = vmatpush1.bf16.msra.mxu0 %v535
        %555 = vmatprep.subr.bf16.mxu0 0
        %556 = vmatpush1.bf16.msra.mxu0 %v536
        %557 = vmatprep.subr.bf16.mxu0 0
        %558 = vmatpush1.bf16.msra.mxu0 %v537
        %559 = vmatprep.subr.bf16.mxu0 0
        %560 = vmatpush1.bf16.msra.mxu0 %v538
        %561 = vmatprep.subr.bf16.mxu0 0
        %562 = vmatpush1.bf16.msra.mxu0 %v539
        %563 = vmatprep.subr.bf16.mxu0 0
        %564 = vmatpush1.bf16.msra.mxu0 %v540
        %565 = vmatprep.subr.bf16.mxu0 0
        %566 = vmatpush1.bf16.msra.mxu0 0
        %567 = vmatprep.subr.bf16.mxu0 0
        %568 = vmatpush1.bf16.msra.mxu0 0
        %569 = vmatprep.subr.bf16.mxu0 0
        %570 = vmatpush1.bf16.msra.mxu0 0
        %571 = vmatprep.subr.bf16.mxu0 0
        %572 = vmatpush1.bf16.msra.mxu0 0
        %573 = vmatprep.subr.bf16.mxu0 0
        %574 = vmatpush1.bf16.msra.mxu0 0
        %575 = vmatprep.subr.bf16.mxu0 0
        %576 = vmatpush1.bf16.msra.mxu0 0
        %577 = vmatprep.subr.bf16.mxu0 0
        %578 = vmatpush1.bf16.msra.mxu0 0
        %579 = vmatprep.subr.bf16.mxu0 0
        %580 = vmatpush1.bf16.msra.mxu0 0
        %581 = vmatprep.mubr.bf16.mxu0 0
        %582 = vmatmul.mubr.bf16.gmra.mrb[0].mxu0 %v483
        %v583 = vpop.f32.mrb[0].mxu0
        %v584 = vadd.f32 0.0, %v583
        %v585 = vpop.f32.mrb[0].mxu0
        %v586 = vpop.f32.mrb[0].mxu0
        %v587 = vadd.f32 0.0, %v586
        %v588 = vpop.f32.mrb[0].mxu0
        %589 = vdwg.mxu0
        %v590 = vadd.f32 %v475, %v584
        %v591 = vadd.f32 %v478, %v587
        %v592 = vld [vmem:[#allocation2 + $0x3] sm:$0xff]
        %v593 = vld [vmem:[#allocation2 + $0xb] sm:$0xff]
        %v594 = vpack.c.bf16 %v593, %v592
        %s595 = scalar_lea.vmem [#allocation6], 192
        %v596 = vld [vmem:[%s595] sm:$0xf]
        %v597 = vld [vmem:[%s595 + $0x4] sm:$0xf]
        %v598 = vld [vmem:[%s595 + $0x8] sm:$0xf]
        %v599 = vld [vmem:[%s595 + $0xc] sm:$0xf]
        %v600 = vld [vmem:[%s595 + $0x10] sm:$0xf]
        %v601 = vld [vmem:[%s595 + $0x14] sm:$0xf]
        %v602 = vld [vmem:[%s595 + $0x18] sm:$0xf]
        %v603 = vld [vmem:[%s595 + $0x1c] sm:$0xf]
        %v604 = vld [vmem:[%s595 + $0x20] sm:$0xf]
        %v605 = vld [vmem:[%s595 + $0x24] sm:$0xf]
        %v606 = vld [vmem:[%s595 + $0x28] sm:$0xf]
        %v607 = vld [vmem:[%s595 + $0x2c] sm:$0xf]
        %v608 = vld [vmem:[%s595 + $0x30] sm:$0xf]
        %v609 = vld [vmem:[%s595 + $0x34] sm:$0xf]
        %v610 = vld [vmem:[%s595 + $0x38] sm:$0xf]
        %v611 = vld [vmem:[%s595 + $0x3c] sm:$0xf]
        %v628 = vunpack.c.l.b16 %v596
        %v629 = vunpack.c.l.b16 %v597
        %v630 = vunpack.c.l.b16 %v598
        %v631 = vunpack.c.l.b16 %v599
        %v632 = vunpack.c.l.b16 %v600
        %v633 = vunpack.c.l.b16 %v601
        %v634 = vunpack.c.l.b16 %v602
        %v635 = vunpack.c.l.b16 %v603
        %v636 = vunpack.c.l.b16 %v604
        %v637 = vunpack.c.l.b16 %v605
        %v638 = vunpack.c.l.b16 %v606
        %v639 = vunpack.c.l.b16 %v607
        %v640 = vunpack.c.l.b16 %v608
        %v641 = vunpack.c.l.b16 %v609
        %v642 = vunpack.c.l.b16 %v610
        %v643 = vunpack.c.l.b16 %v611
        %v644 = vpack.c.b16 %v629, %v628
        %v645 = vpack.c.b16 %v631, %v630
        %v646 = vpack.c.b16 %v633, %v632
        %v647 = vpack.c.b16 %v635, %v634
        %v648 = vpack.c.b16 %v637, %v636
        %v649 = vpack.c.b16 %v639, %v638
        %v650 = vpack.c.b16 %v641, %v640
        %v651 = vpack.c.b16 %v643, %v642
        %660 = vmatprep.subr.bf16.mxu0 0
        %661 = vmatpush1.bf16.msra.mxu0 %v644
        %662 = vmatprep.subr.bf16.mxu0 0
        %663 = vmatpush1.bf16.msra.mxu0 %v645
        %664 = vmatprep.subr.bf16.mxu0 0
        %665 = vmatpush1.bf16.msra.mxu0 %v646
        %666 = vmatprep.subr.bf16.mxu0 0
        %667 = vmatpush1.bf16.msra.mxu0 %v647
        %668 = vmatprep.subr.bf16.mxu0 0
        %669 = vmatpush1.bf16.msra.mxu0 %v648
        %670 = vmatprep.subr.bf16.mxu0 0
        %671 = vmatpush1.bf16.msra.mxu0 %v649
        %672 = vmatprep.subr.bf16.mxu0 0
        %673 = vmatpush1.bf16.msra.mxu0 %v650
        %674 = vmatprep.subr.bf16.mxu0 0
        %675 = vmatpush1.bf16.msra.mxu0 %v651
        %676 = vmatprep.subr.bf16.mxu0 0
        %677 = vmatpush1.bf16.msra.mxu0 0
        %678 = vmatprep.subr.bf16.mxu0 0
        %679 = vmatpush1.bf16.msra.mxu0 0
        %680 = vmatprep.subr.bf16.mxu0 0
        %681 = vmatpush1.bf16.msra.mxu0 0
        %682 = vmatprep.subr.bf16.mxu0 0
        %683 = vmatpush1.bf16.msra.mxu0 0
        %684 = vmatprep.subr.bf16.mxu0 0
        %685 = vmatpush1.bf16.msra.mxu0 0
        %686 = vmatprep.subr.bf16.mxu0 0
        %687 = vmatpush1.bf16.msra.mxu0 0
        %688 = vmatprep.subr.bf16.mxu0 0
        %689 = vmatpush1.bf16.msra.mxu0 0
        %690 = vmatprep.subr.bf16.mxu0 0
        %691 = vmatpush1.bf16.msra.mxu0 0
        %692 = vmatprep.mubr.bf16.mxu0 0
        %693 = vmatmul.mubr.bf16.gmra.mrb[0].mxu0 %v594
        %v694 = vpop.f32.mrb[0].mxu0
        %v695 = vadd.f32 0.0, %v694
        %v696 = vpop.f32.mrb[0].mxu0
        %v697 = vpop.f32.mrb[0].mxu0
        %v698 = vadd.f32 0.0, %v697
        %v699 = vpop.f32.mrb[0].mxu0
        %700 = vdwg.mxu0
        %v701 = vadd.f32 %v590, %v695
        %v702 = vadd.f32 %v591, %v698
        %v703 = vld [vmem:[#allocation2 + $0x4] sm:$0xff]
        %v704 = vld [vmem:[#allocation2 + $0xc] sm:$0xff]
        %v705 = vpack.c.bf16 %v704, %v703
        %s706 = scalar_lea.vmem [#allocation6], 256
        %v707 = vld [vmem:[%s706] sm:$0xf]
        %v708 = vld [vmem:[%s706 + $0x4] sm:$0xf]
        %v709 = vld [vmem:[%s706 + $0x8] sm:$0xf]
        %v710 = vld [vmem:[%s706 + $0xc] sm:$0xf]
        %v711 = vld [vmem:[%s706 + $0x10] sm:$0xf]
        %v712 = vld [vmem:[%s706 + $0x14] sm:$0xf]
        %v713 = vld [vmem:[%s706 + $0x18] sm:$0xf]
        %v714 = vld [vmem:[%s706 + $0x1c] sm:$0xf]
        %v715 = vld [vmem:[%s706 + $0x20] sm:$0xf]
        %v716 = vld [vmem:[%s706 + $0x24] sm:$0xf]
        %v717 = vld [vmem:[%s706 + $0x28] sm:$0xf]
        %v718 = vld [vmem:[%s706 + $0x2c] sm:$0xf]
        %v719 = vld [vmem:[%s706 + $0x30] sm:$0xf]
        %v720 = vld [vmem:[%s706 + $0x34] sm:$0xf]
        %v721 = vld [vmem:[%s706 + $0x38] sm:$0xf]
        %v722 = vld [vmem:[%s706 + $0x3c] sm:$0xf]
        %v739 = vunpack.c.l.b16 %v707
        %v740 = vunpack.c.l.b16 %v708
        %v741 = vunpack.c.l.b16 %v709
        %v742 = vunpack.c.l.b16 %v710
        %v743 = vunpack.c.l.b16 %v711
        %v744 = vunpack.c.l.b16 %v712
        %v745 = vunpack.c.l.b16 %v713
        %v746 = vunpack.c.l.b16 %v714
        %v747 = vunpack.c.l.b16 %v715
        %v748 = vunpack.c.l.b16 %v716
        %v749 = vunpack.c.l.b16 %v717
        %v750 = vunpack.c.l.b16 %v718
        %v751 = vunpack.c.l.b16 %v719
        %v752 = vunpack.c.l.b16 %v720
        %v753 = vunpack.c.l.b16 %v721
        %v754 = vunpack.c.l.b16 %v722
        %v755 = vpack.c.b16 %v740, %v739
        %v756 = vpack.c.b16 %v742, %v741
        %v757 = vpack.c.b16 %v744, %v743
        %v758 = vpack.c.b16 %v746, %v745
        %v759 = vpack.c.b16 %v748, %v747
        %v760 = vpack.c.b16 %v750, %v749
        %v761 = vpack.c.b16 %v752, %v751
        %v762 = vpack.c.b16 %v754, %v753
        %771 = vmatprep.subr.bf16.mxu0 0
        %772 = vmatpush1.bf16.msra.mxu0 %v755
        %773 = vmatprep.subr.bf16.mxu0 0
        %774 = vmatpush1.bf16.msra.mxu0 %v756
        %775 = vmatprep.subr.bf16.mxu0 0
        %776 = vmatpush1.bf16.msra.mxu0 %v757
        %777 = vmatprep.subr.bf16.mxu0 0
        %778 = vmatpush1.bf16.msra.mxu0 %v758
        %779 = vmatprep.subr.bf16.mxu0 0
        %780 = vmatpush1.bf16.msra.mxu0 %v759
        %781 = vmatprep.subr.bf16.mxu0 0
        %782 = vmatpush1.bf16.msra.mxu0 %v760
        %783 = vmatprep.subr.bf16.mxu0 0
        %784 = vmatpush1.bf16.msra.mxu0 %v761
        %785 = vmatprep.subr.bf16.mxu0 0
        %786 = vmatpush1.bf16.msra.mxu0 %v762
        %787 = vmatprep.subr.bf16.mxu0 0
        %788 = vmatpush1.bf16.msra.mxu0 0
        %789 = vmatprep.subr.bf16.mxu0 0
        %790 = vmatpush1.bf16.msra.mxu0 0
        %791 = vmatprep.subr.bf16.mxu0 0
        %792 = vmatpush1.bf16.msra.mxu0 0
        %793 = vmatprep.subr.bf16.mxu0 0
        %794 = vmatpush1.bf16.msra.mxu0 0
        %795 = vmatprep.subr.bf16.mxu0 0
        %796 = vmatpush1.bf16.msra.mxu0 0
        %797 = vmatprep.subr.bf16.mxu0 0
        %798 = vmatpush1.bf16.msra.mxu0 0
        %799 = vmatprep.subr.bf16.mxu0 0
        %800 = vmatpush1.bf16.msra.mxu0 0
        %801 = vmatprep.subr.bf16.mxu0 0
        %802 = vmatpush1.bf16.msra.mxu0 0
        %803 = vmatprep.mubr.bf16.mxu0 0
        %804 = vmatmul.mubr.bf16.gmra.mrb[0].mxu0 %v705
        %v805 = vpop.f32.mrb[0].mxu0
        %v806 = vadd.f32 0.0, %v805
        %v807 = vpop.f32.mrb[0].mxu0
        %v808 = vpop.f32.mrb[0].mxu0
        %v809 = vadd.f32 0.0, %v808
        %v810 = vpop.f32.mrb[0].mxu0
        %811 = vdwg.mxu0
        %v812 = vadd.f32 %v701, %v806
        %v813 = vadd.f32 %v702, %v809
        %v814 = vld [vmem:[#allocation2 + $0x5] sm:$0xff]
        %v815 = vld [vmem:[#allocation2 + $0xd] sm:$0xff]
        %v816 = vpack.c.bf16 %v815, %v814
        %s817 = scalar_lea.vmem [#allocation6], 320
        %v818 = vld [vmem:[%s817] sm:$0xf]
        %v819 = vld [vmem:[%s817 + $0x4] sm:$0xf]
        %v820 = vld [vmem:[%s817 + $0x8] sm:$0xf]
        %v821 = vld [vmem:[%s817 + $0xc] sm:$0xf]
        %v822 = vld [vmem:[%s817 + $0x10] sm:$0xf]
        %v823 = vld [vmem:[%s817 + $0x14] sm:$0xf]
        %v824 = vld [vmem:[%s817 + $0x18] sm:$0xf]
        %v825 = vld [vmem:[%s817 + $0x1c] sm:$0xf]
        %v826 = vld [vmem:[%s817 + $0x20] sm:$0xf]
        %v827 = vld [vmem:[%s817 + $0x24] sm:$0xf]
        %v828 = vld [vmem:[%s817 + $0x28] sm:$0xf]
        %v829 = vld [vmem:[%s817 + $0x2c] sm:$0xf]
        %v830 = vld [vmem:[%s817 + $0x30] sm:$0xf]
        %v831 = vld [vmem:[%s817 + $0x34] sm:$0xf]
        %v832 = vld [vmem:[%s817 + $0x38] sm:$0xf]
        %v833 = vld [vmem:[%s817 + $0x3c] sm:$0xf]
        %v850 = vunpack.c.l.b16 %v818
        %v851 = vunpack.c.l.b16 %v819
        %v852 = vunpack.c.l.b16 %v820
        %v853 = vunpack.c.l.b16 %v821
        %v854 = vunpack.c.l.b16 %v822
        %v855 = vunpack.c.l.b16 %v823
        %v856 = vunpack.c.l.b16 %v824
        %v857 = vunpack.c.l.b16 %v825
        %v858 = vunpack.c.l.b16 %v826
        %v859 = vunpack.c.l.b16 %v827
        %v860 = vunpack.c.l.b16 %v828
        %v861 = vunpack.c.l.b16 %v829
        %v862 = vunpack.c.l.b16 %v830
        %v863 = vunpack.c.l.b16 %v831
        %v864 = vunpack.c.l.b16 %v832
        %v865 = vunpack.c.l.b16 %v833
        %v866 = vpack.c.b16 %v851, %v850
        %v867 = vpack.c.b16 %v853, %v852
        %v868 = vpack.c.b16 %v855, %v854
        %v869 = vpack.c.b16 %v857, %v856
        %v870 = vpack.c.b16 %v859, %v858
        %v871 = vpack.c.b16 %v861, %v860
        %v872 = vpack.c.b16 %v863, %v862
        %v873 = vpack.c.b16 %v865, %v864
        %882 = vmatprep.subr.bf16.mxu0 0
        %883 = vmatpush1.bf16.msra.mxu0 %v866
        %884 = vmatprep.subr.bf16.mxu0 0
        %885 = vmatpush1.bf16.msra.mxu0 %v867
        %886 = vmatprep.subr.bf16.mxu0 0
        %887 = vmatpush1.bf16.msra.mxu0 %v868
        %888 = vmatprep.subr.bf16.mxu0 0
        %889 = vmatpush1.bf16.msra.mxu0 %v869
        %890 = vmatprep.subr.bf16.mxu0 0
        %891 = vmatpush1.bf16.msra.mxu0 %v870
        %892 = vmatprep.subr.bf16.mxu0 0
        %893 = vmatpush1.bf16.msra.mxu0 %v871
        %894 = vmatprep.subr.bf16.mxu0 0
        %895 = vmatpush1.bf16.msra.mxu0 %v872
        %896 = vmatprep.subr.bf16.mxu0 0
        %897 = vmatpush1.bf16.msra.mxu0 %v873
        %898 = vmatprep.subr.bf16.mxu0 0
        %899 = vmatpush1.bf16.msra.mxu0 0
        %900 = vmatprep.subr.bf16.mxu0 0
        %901 = vmatpush1.bf16.msra.mxu0 0
        %902 = vmatprep.subr.bf16.mxu0 0
        %903 = vmatpush1.bf16.msra.mxu0 0
        %904 = vmatprep.subr.bf16.mxu0 0
        %905 = vmatpush1.bf16.msra.mxu0 0
        %906 = vmatprep.subr.bf16.mxu0 0
        %907 = vmatpush1.bf16.msra.mxu0 0
        %908 = vmatprep.subr.bf16.mxu0 0
        %909 = vmatpush1.bf16.msra.mxu0 0
        %910 = vmatprep.subr.bf16.mxu0 0
        %911 = vmatpush1.bf16.msra.mxu0 0
        %912 = vmatprep.subr.bf16.mxu0 0
        %913 = vmatpush1.bf16.msra.mxu0 0
        %914 = vmatprep.mubr.bf16.mxu0 0
        %915 = vmatmul.mubr.bf16.gmra.mrb[0].mxu0 %v816
        %v916 = vpop.f32.mrb[0].mxu0
        %v917 = vadd.f32 0.0, %v916
        %v918 = vpop.f32.mrb[0].mxu0
        %v919 = vpop.f32.mrb[0].mxu0
        %v920 = vadd.f32 0.0, %v919
        %v921 = vpop.f32.mrb[0].mxu0
        %922 = vdwg.mxu0
        %v923 = vadd.f32 %v812, %v917
        %v924 = vadd.f32 %v813, %v920
        %v925 = vld [vmem:[#allocation2 + $0x6] sm:$0xff]
        %v926 = vld [vmem:[#allocation2 + $0xe] sm:$0xff]
        %v927 = vpack.c.bf16 %v926, %v925
        %s928 = scalar_lea.vmem [#allocation6], 384
        %v929 = vld [vmem:[%s928] sm:$0xf]
        %v930 = vld [vmem:[%s928 + $0x4] sm:$0xf]
        %v931 = vld [vmem:[%s928 + $0x8] sm:$0xf]
        %v932 = vld [vmem:[%s928 + $0xc] sm:$0xf]
        %v933 = vld [vmem:[%s928 + $0x10] sm:$0xf]
        %v934 = vld [vmem:[%s928 + $0x14] sm:$0xf]
        %v935 = vld [vmem:[%s928 + $0x18] sm:$0xf]
        %v936 = vld [vmem:[%s928 + $0x1c] sm:$0xf]
        %v937 = vld [vmem:[%s928 + $0x20] sm:$0xf]
        %v938 = vld [vmem:[%s928 + $0x24] sm:$0xf]
        %v939 = vld [vmem:[%s928 + $0x28] sm:$0xf]
        %v940 = vld [vmem:[%s928 + $0x2c] sm:$0xf]
        %v941 = vld [vmem:[%s928 + $0x30] sm:$0xf]
        %v942 = vld [vmem:[%s928 + $0x34] sm:$0xf]
        %v943 = vld [vmem:[%s928 + $0x38] sm:$0xf]
        %v944 = vld [vmem:[%s928 + $0x3c] sm:$0xf]
        %v961 = vunpack.c.l.b16 %v929
        %v962 = vunpack.c.l.b16 %v930
        %v963 = vunpack.c.l.b16 %v931
        %v964 = vunpack.c.l.b16 %v932
        %v965 = vunpack.c.l.b16 %v933
        %v966 = vunpack.c.l.b16 %v934
        %v967 = vunpack.c.l.b16 %v935
        %v968 = vunpack.c.l.b16 %v936
        %v969 = vunpack.c.l.b16 %v937
        %v970 = vunpack.c.l.b16 %v938
        %v971 = vunpack.c.l.b16 %v939
        %v972 = vunpack.c.l.b16 %v940
        %v973 = vunpack.c.l.b16 %v941
        %v974 = vunpack.c.l.b16 %v942
        %v975 = vunpack.c.l.b16 %v943
        %v976 = vunpack.c.l.b16 %v944
        %v977 = vpack.c.b16 %v962, %v961
        %v978 = vpack.c.b16 %v964, %v963
        %v979 = vpack.c.b16 %v966, %v965
        %v980 = vpack.c.b16 %v968, %v967
        %v981 = vpack.c.b16 %v970, %v969
        %v982 = vpack.c.b16 %v972, %v971
        %v983 = vpack.c.b16 %v974, %v973
        %v984 = vpack.c.b16 %v976, %v975
        %993 = vmatprep.subr.bf16.mxu0 0
        %994 = vmatpush1.bf16.msra.mxu0 %v977
        %995 = vmatprep.subr.bf16.mxu0 0
        %996 = vmatpush1.bf16.msra.mxu0 %v978
        %997 = vmatprep.subr.bf16.mxu0 0
        %998 = vmatpush1.bf16.msra.mxu0 %v979
        %999 = vmatprep.subr.bf16.mxu0 0
        %1000 = vmatpush1.bf16.msra.mxu0 %v980
        %1001 = vmatprep.subr.bf16.mxu0 0
        %1002 = vmatpush1.bf16.msra.mxu0 %v981
        %1003 = vmatprep.subr.bf16.mxu0 0
        %1004 = vmatpush1.bf16.msra.mxu0 %v982
        %1005 = vmatprep.subr.bf16.mxu0 0
        %1006 = vmatpush1.bf16.msra.mxu0 %v983
        %1007 = vmatprep.subr.bf16.mxu0 0
        %1008 = vmatpush1.bf16.msra.mxu0 %v984
        %1009 = vmatprep.subr.bf16.mxu0 0
        %1010 = vmatpush1.bf16.msra.mxu0 0
        %1011 = vmatprep.subr.bf16.mxu0 0
        %1012 = vmatpush1.bf16.msra.mxu0 0
        %1013 = vmatprep.subr.bf16.mxu0 0
        %1014 = vmatpush1.bf16.msra.mxu0 0
        %1015 = vmatprep.subr.bf16.mxu0 0
        %1016 = vmatpush1.bf16.msra.mxu0 0
        %1017 = vmatprep.subr.bf16.mxu0 0
        %1018 = vmatpush1.bf16.msra.mxu0 0
        %1019 = vmatprep.subr.bf16.mxu0 0
        %1020 = vmatpush1.bf16.msra.mxu0 0
        %1021 = vmatprep.subr.bf16.mxu0 0
        %1022 = vmatpush1.bf16.msra.mxu0 0
        %1023 = vmatprep.subr.bf16.mxu0 0
        %1024 = vmatpush1.bf16.msra.mxu0 0
        %1025 = vmatprep.mubr.bf16.mxu0 0
        %1026 = vmatmul.mubr.bf16.gmra.mrb[0].mxu0 %v927
        %v1027 = vpop.f32.mrb[0].mxu0
        %v1028 = vadd.f32 0.0, %v1027
        %v1029 = vpop.f32.mrb[0].mxu0
        %v1030 = vpop.f32.mrb[0].mxu0
        %v1031 = vadd.f32 0.0, %v1030
        %v1032 = vpop.f32.mrb[0].mxu0
        %1033 = vdwg.mxu0
        %v1034 = vadd.f32 %v923, %v1028
        %v1035 = vadd.f32 %v924, %v1031
        %v1036 = vld [vmem:[#allocation2 + $0x7] sm:$0xff]
        %v1037 = vld [vmem:[#allocation2 + $0xf] sm:$0xff]
        %v1038 = vpack.c.bf16 %v1037, %v1036
        %s1039 = scalar_lea.vmem [#allocation6], 448
        %v1040 = vld [vmem:[%s1039] sm:$0xf]
        %v1041 = vld [vmem:[%s1039 + $0x4] sm:$0xf]
        %v1042 = vld [vmem:[%s1039 + $0x8] sm:$0xf]
        %v1043 = vld [vmem:[%s1039 + $0xc] sm:$0xf]
        %v1044 = vld [vmem:[%s1039 + $0x10] sm:$0xf]
        %v1045 = vld [vmem:[%s1039 + $0x14] sm:$0xf]
        %v1046 = vld [vmem:[%s1039 + $0x18] sm:$0xf]
        %v1047 = vld [vmem:[%s1039 + $0x1c] sm:$0xf]
        %v1048 = vld [vmem:[%s1039 + $0x20] sm:$0xf]
        %v1049 = vld [vmem:[%s1039 + $0x24] sm:$0xf]
        %v1050 = vld [vmem:[%s1039 + $0x28] sm:$0xf]
        %v1051 = vld [vmem:[%s1039 + $0x2c] sm:$0xf]
        %v1052 = vld [vmem:[%s1039 + $0x30] sm:$0xf]
        %v1053 = vld [vmem:[%s1039 + $0x34] sm:$0xf]
        %v1054 = vld [vmem:[%s1039 + $0x38] sm:$0xf]
        %v1055 = vld [vmem:[%s1039 + $0x3c] sm:$0xf]
        %v1072 = vunpack.c.l.b16 %v1040
        %v1073 = vunpack.c.l.b16 %v1041
        %v1074 = vunpack.c.l.b16 %v1042
        %v1075 = vunpack.c.l.b16 %v1043
        %v1076 = vunpack.c.l.b16 %v1044
        %v1077 = vunpack.c.l.b16 %v1045
        %v1078 = vunpack.c.l.b16 %v1046
        %v1079 = vunpack.c.l.b16 %v1047
        %v1080 = vunpack.c.l.b16 %v1048
        %v1081 = vunpack.c.l.b16 %v1049
        %v1082 = vunpack.c.l.b16 %v1050
        %v1083 = vunpack.c.l.b16 %v1051
        %v1084 = vunpack.c.l.b16 %v1052
        %v1085 = vunpack.c.l.b16 %v1053
        %v1086 = vunpack.c.l.b16 %v1054
        %v1087 = vunpack.c.l.b16 %v1055
        %v1088 = vpack.c.b16 %v1073, %v1072
        %v1089 = vpack.c.b16 %v1075, %v1074
        %v1090 = vpack.c.b16 %v1077, %v1076
        %v1091 = vpack.c.b16 %v1079, %v1078
        %v1092 = vpack.c.b16 %v1081, %v1080
        %v1093 = vpack.c.b16 %v1083, %v1082
        %v1094 = vpack.c.b16 %v1085, %v1084
        %v1095 = vpack.c.b16 %v1087, %v1086
        %1104 = vmatprep.subr.bf16.mxu0 0
        %1105 = vmatpush1.bf16.msra.mxu0 %v1088
        %1106 = vmatprep.subr.bf16.mxu0 0
        %1107 = vmatpush1.bf16.msra.mxu0 %v1089
        %1108 = vmatprep.subr.bf16.mxu0 0
        %1109 = vmatpush1.bf16.msra.mxu0 %v1090
        %1110 = vmatprep.subr.bf16.mxu0 0
        %1111 = vmatpush1.bf16.msra.mxu0 %v1091
        %1112 = vmatprep.subr.bf16.mxu0 0
        %1113 = vmatpush1.bf16.msra.mxu0 %v1092
        %1114 = vmatprep.subr.bf16.mxu0 0
        %1115 = vmatpush1.bf16.msra.mxu0 %v1093
        %1116 = vmatprep.subr.bf16.mxu0 0
        %1117 = vmatpush1.bf16.msra.mxu0 %v1094
        %1118 = vmatprep.subr.bf16.mxu0 0
        %1119 = vmatpush1.bf16.msra.mxu0 %v1095
        %1120 = vmatprep.subr.bf16.mxu0 0
        %1121 = vmatpush1.bf16.msra.mxu0 0
        %1122 = vmatprep.subr.bf16.mxu0 0
        %1123 = vmatpush1.bf16.msra.mxu0 0
        %1124 = vmatprep.subr.bf16.mxu0 0
        %1125 = vmatpush1.bf16.msra.mxu0 0
        %1126 = vmatprep.subr.bf16.mxu0 0
        %1127 = vmatpush1.bf16.msra.mxu0 0
        %1128 = vmatprep.subr.bf16.mxu0 0
        %1129 = vmatpush1.bf16.msra.mxu0 0
        %1130 = vmatprep.subr.bf16.mxu0 0
        %1131 = vmatpush1.bf16.msra.mxu0 0
        %1132 = vmatprep.subr.bf16.mxu0 0
        %1133 = vmatpush1.bf16.msra.mxu0 0
        %1134 = vmatprep.subr.bf16.mxu0 0
        %1135 = vmatpush1.bf16.msra.mxu0 0
        %1136 = vmatprep.mubr.bf16.mxu0 0
        %1137 = vmatmul.mubr.bf16.gmra.mrb[0].mxu0 %v1038
        %v1138 = vpop.f32.mrb[0].mxu0
        %v1139 = vadd.f32 0.0, %v1138
        %v1140 = vpop.f32.mrb[0].mxu0
        %v1141 = vpop.f32.mrb[0].mxu0
        %v1142 = vadd.f32 0.0, %v1141
        %v1143 = vpop.f32.mrb[0].mxu0
        %1144 = vdwg.mxu0
        %v1145 = vadd.f32 %v1034, %v1139
        %v1146 = vadd.f32 %v1035, %v1142
        %v1147 = vld [vmem:[#allocation2 + $0x8] sm:$0xff]
        %v1148 = vld [vmem:[#allocation2 + $0x10] sm:$0xff]
        %v1149 = vpack.c.bf16 %v1148, %v1147
        %s1150 = scalar_lea.vmem [#allocation6], 512
        %v1151 = vld [vmem:[%s1150] sm:$0xf]
        %v1152 = vld [vmem:[%s1150 + $0x4] sm:$0xf]
        %v1153 = vld [vmem:[%s1150 + $0x8] sm:$0xf]
        %v1154 = vld [vmem:[%s1150 + $0xc] sm:$0xf]
        %v1155 = vld [vmem:[%s1150 + $0x10] sm:$0xf]
        %v1156 = vld [vmem:[%s1150 + $0x14] sm:$0xf]
        %v1157 = vld [vmem:[%s1150 + $0x18] sm:$0xf]
        %v1158 = vld [vmem:[%s1150 + $0x1c] sm:$0xf]
        %v1159 = vld [vmem:[%s1150 + $0x20] sm:$0xf]
        %v1160 = vld [vmem:[%s1150 + $0x24] sm:$0xf]
        %v1161 = vld [vmem:[%s1150 + $0x28] sm:$0xf]
        %v1162 = vld [vmem:[%s1150 + $0x2c] sm:$0xf]
        %v1163 = vld [vmem:[%s1150 + $0x30] sm:$0xf]
        %v1164 = vld [vmem:[%s1150 + $0x34] sm:$0xf]
        %v1165 = vld [vmem:[%s1150 + $0x38] sm:$0xf]
        %v1166 = vld [vmem:[%s1150 + $0x3c] sm:$0xf]
        %v1183 = vunpack.c.l.b16 %v1151
        %v1184 = vunpack.c.l.b16 %v1152
        %v1185 = vunpack.c.l.b16 %v1153
        %v1186 = vunpack.c.l.b16 %v1154
        %v1187 = vunpack.c.l.b16 %v1155
        %v1188 = vunpack.c.l.b16 %v1156
        %v1189 = vunpack.c.l.b16 %v1157
        %v1190 = vunpack.c.l.b16 %v1158
        %v1191 = vunpack.c.l.b16 %v1159
        %v1192 = vunpack.c.l.b16 %v1160
        %v1193 = vunpack.c.l.b16 %v1161
        %v1194 = vunpack.c.l.b16 %v1162
        %v1195 = vunpack.c.l.b16 %v1163
        %v1196 = vunpack.c.l.b16 %v1164
        %v1197 = vunpack.c.l.b16 %v1165
        %v1198 = vunpack.c.l.b16 %v1166
        %v1199 = vpack.c.b16 %v1184, %v1183
        %v1200 = vpack.c.b16 %v1186, %v1185
        %v1201 = vpack.c.b16 %v1188, %v1187
        %v1202 = vpack.c.b16 %v1190, %v1189
        %v1203 = vpack.c.b16 %v1192, %v1191
        %v1204 = vpack.c.b16 %v1194, %v1193
        %v1205 = vpack.c.b16 %v1196, %v1195
        %v1206 = vpack.c.b16 %v1198, %v1197
        %1215 = vmatprep.subr.bf16.mxu0 0
        %1216 = vmatpush1.bf16.msra.mxu0 %v1199
        %1217 = vmatprep.subr.bf16.mxu0 0
        %1218 = vmatpush1.bf16.msra.mxu0 %v1200
        %1219 = vmatprep.subr.bf16.mxu0 0
        %1220 = vmatpush1.bf16.msra.mxu0 %v1201
        %1221 = vmatprep.subr.bf16.mxu0 0
        %1222 = vmatpush1.bf16.msra.mxu0 %v1202
        %1223 = vmatprep.subr.bf16.mxu0 0
        %1224 = vmatpush1.bf16.msra.mxu0 %v1203
        %1225 = vmatprep.subr.bf16.mxu0 0
        %1226 = vmatpush1.bf16.msra.mxu0 %v1204
        %1227 = vmatprep.subr.bf16.mxu0 0
        %1228 = vmatpush1.bf16.msra.mxu0 %v1205
        %1229 = vmatprep.subr.bf16.mxu0 0
        %1230 = vmatpush1.bf16.msra.mxu0 %v1206
        %1231 = vmatprep.subr.bf16.mxu0 0
        %1232 = vmatpush1.bf16.msra.mxu0 0
        %1233 = vmatprep.subr.bf16.mxu0 0
        %1234 = vmatpush1.bf16.msra.mxu0 0
        %1235 = vmatprep.subr.bf16.mxu0 0
        %1236 = vmatpush1.bf16.msra.mxu0 0
        %1237 = vmatprep.subr.bf16.mxu0 0
        %1238 = vmatpush1.bf16.msra.mxu0 0
        %1239 = vmatprep.subr.bf16.mxu0 0
        %1240 = vmatpush1.bf16.msra.mxu0 0
        %1241 = vmatprep.subr.bf16.mxu0 0
        %1242 = vmatpush1.bf16.msra.mxu0 0
        %1243 = vmatprep.subr.bf16.mxu0 0
        %1244 = vmatpush1.bf16.msra.mxu0 0
        %1245 = vmatprep.subr.bf16.mxu0 0
        %1246 = vmatpush1.bf16.msra.mxu0 0
        %1247 = vmatprep.mubr.bf16.mxu0 0
        %1248 = vmatmul.mubr.bf16.gmra.mrb[0].mxu0 %v1149
        %v1249 = vpop.f32.mrb[0].mxu0
        %v1250 = vadd.f32 0.0, %v1249
        %v1251 = vpop.f32.mrb[0].mxu0
        %v1252 = vpop.f32.mrb[0].mxu0
        %v1253 = vadd.f32 0.0, %v1252
        %v1254 = vpop.f32.mrb[0].mxu0
        %1255 = vdwg.mxu0
        %v1256 = vadd.f32 %v1145, %v1250
        %v1257 = vadd.f32 %v1146, %v1253
        %v1258 = vld [vmem:[#allocation2 + $0x9] sm:$0xff]
        %v1259 = vld [vmem:[#allocation2 + $0x11] sm:$0xff]
        %v1260 = vpack.c.bf16 %v1259, %v1258
        %s1261 = scalar_lea.vmem [#allocation6], 576
        %v1262 = vld [vmem:[%s1261] sm:$0xf]
        %v1263 = vld [vmem:[%s1261 + $0x4] sm:$0xf]
        %v1264 = vld [vmem:[%s1261 + $0x8] sm:$0xf]
        %v1265 = vld [vmem:[%s1261 + $0xc] sm:$0xf]
        %v1266 = vld [vmem:[%s1261 + $0x10] sm:$0xf]
        %v1267 = vld [vmem:[%s1261 + $0x14] sm:$0xf]
        %v1268 = vld [vmem:[%s1261 + $0x18] sm:$0xf]
        %v1269 = vld [vmem:[%s1261 + $0x1c] sm:$0xf]
        %v1270 = vld [vmem:[%s1261 + $0x20] sm:$0xf]
        %v1271 = vld [vmem:[%s1261 + $0x24] sm:$0xf]
        %v1272 = vld [vmem:[%s1261 + $0x28] sm:$0xf]
        %v1273 = vld [vmem:[%s1261 + $0x2c] sm:$0xf]
        %v1274 = vld [vmem:[%s1261 + $0x30] sm:$0xf]
        %v1275 = vld [vmem:[%s1261 + $0x34] sm:$0xf]
        %v1276 = vld [vmem:[%s1261 + $0x38] sm:$0xf]
        %v1277 = vld [vmem:[%s1261 + $0x3c] sm:$0xf]
        %v1294 = vunpack.c.l.b16 %v1262
        %v1295 = vunpack.c.l.b16 %v1263
        %v1296 = vunpack.c.l.b16 %v1264
        %v1297 = vunpack.c.l.b16 %v1265
        %v1298 = vunpack.c.l.b16 %v1266
        %v1299 = vunpack.c.l.b16 %v1267
        %v1300 = vunpack.c.l.b16 %v1268
        %v1301 = vunpack.c.l.b16 %v1269
        %v1302 = vunpack.c.l.b16 %v1270
        %v1303 = vunpack.c.l.b16 %v1271
        %v1304 = vunpack.c.l.b16 %v1272
        %v1305 = vunpack.c.l.b16 %v1273
        %v1306 = vunpack.c.l.b16 %v1274
        %v1307 = vunpack.c.l.b16 %v1275
        %v1308 = vunpack.c.l.b16 %v1276
        %v1309 = vunpack.c.l.b16 %v1277
        %v1310 = vpack.c.b16 %v1295, %v1294
        %v1311 = vpack.c.b16 %v1297, %v1296
        %v1312 = vpack.c.b16 %v1299, %v1298
        %v1313 = vpack.c.b16 %v1301, %v1300
        %v1314 = vpack.c.b16 %v1303, %v1302
        %v1315 = vpack.c.b16 %v1305, %v1304
        %v1316 = vpack.c.b16 %v1307, %v1306
        %v1317 = vpack.c.b16 %v1309, %v1308
        %1326 = vmatprep.subr.bf16.mxu0 0
        %1327 = vmatpush1.bf16.msra.mxu0 %v1310
        %1328 = vmatprep.subr.bf16.mxu0 0
        %1329 = vmatpush1.bf16.msra.mxu0 %v1311
        %1330 = vmatprep.subr.bf16.mxu0 0
        %1331 = vmatpush1.bf16.msra.mxu0 %v1312
        %1332 = vmatprep.subr.bf16.mxu0 0
        %1333 = vmatpush1.bf16.msra.mxu0 %v1313
        %1334 = vmatprep.subr.bf16.mxu0 0
        %1335 = vmatpush1.bf16.msra.mxu0 %v1314
        %1336 = vmatprep.subr.bf16.mxu0 0
        %1337 = vmatpush1.bf16.msra.mxu0 %v1315
        %1338 = vmatprep.subr.bf16.mxu0 0
        %1339 = vmatpush1.bf16.msra.mxu0 %v1316
        %1340 = vmatprep.subr.bf16.mxu0 0
        %1341 = vmatpush1.bf16.msra.mxu0 %v1317
        %1342 = vmatprep.subr.bf16.mxu0 0
        %1343 = vmatpush1.bf16.msra.mxu0 0
        %1344 = vmatprep.subr.bf16.mxu0 0
        %1345 = vmatpush1.bf16.msra.mxu0 0
        %1346 = vmatprep.subr.bf16.mxu0 0
        %1347 = vmatpush1.bf16.msra.mxu0 0
        %1348 = vmatprep.subr.bf16.mxu0 0
        %1349 = vmatpush1.bf16.msra.mxu0 0
        %1350 = vmatprep.subr.bf16.mxu0 0
        %1351 = vmatpush1.bf16.msra.mxu0 0
        %1352 = vmatprep.subr.bf16.mxu0 0
        %1353 = vmatpush1.bf16.msra.mxu0 0
        %1354 = vmatprep.subr.bf16.mxu0 0
        %1355 = vmatpush1.bf16.msra.mxu0 0
        %1356 = vmatprep.subr.bf16.mxu0 0
        %1357 = vmatpush1.bf16.msra.mxu0 0
        %1358 = vmatprep.mubr.bf16.mxu0 0
        %1359 = vmatmul.mubr.bf16.gmra.mrb[0].mxu0 %v1260
        %v1360 = vpop.f32.mrb[0].mxu0
        %v1361 = vadd.f32 0.0, %v1360
        %v1362 = vpop.f32.mrb[0].mxu0
        %v1363 = vpop.f32.mrb[0].mxu0
        %v1364 = vadd.f32 0.0, %v1363
        %v1365 = vpop.f32.mrb[0].mxu0
        %1366 = vdwg.mxu0
        %v1367 = vadd.f32 %v1256, %v1361
        %v1368 = vadd.f32 %v1257, %v1364
        %v1369 = vld [vmem:[#allocation2 + $0xa] sm:$0xff]
        %v1370 = vld [vmem:[#allocation2 + $0x12] sm:$0xff]
        %v1371 = vpack.c.bf16 %v1370, %v1369
        %s1372 = scalar_lea.vmem [#allocation6], 640
        %v1373 = vld [vmem:[%s1372] sm:$0xf]
        %v1374 = vld [vmem:[%s1372 + $0x4] sm:$0xf]
        %v1375 = vld [vmem:[%s1372 + $0x8] sm:$0xf]
        %v1376 = vld [vmem:[%s1372 + $0xc] sm:$0xf]
        %v1377 = vld [vmem:[%s1372 + $0x10] sm:$0xf]
        %v1378 = vld [vmem:[%s1372 + $0x14] sm:$0xf]
        %v1379 = vld [vmem:[%s1372 + $0x18] sm:$0xf]
        %v1380 = vld [vmem:[%s1372 + $0x1c] sm:$0xf]
        %v1381 = vld [vmem:[%s1372 + $0x20] sm:$0xf]
        %v1382 = vld [vmem:[%s1372 + $0x24] sm:$0xf]
        %v1383 = vld [vmem:[%s1372 + $0x28] sm:$0xf]
        %v1384 = vld [vmem:[%s1372 + $0x2c] sm:$0xf]
        %v1385 = vld [vmem:[%s1372 + $0x30] sm:$0xf]
        %v1386 = vld [vmem:[%s1372 + $0x34] sm:$0xf]
        %v1387 = vld [vmem:[%s1372 + $0x38] sm:$0xf]
        %v1388 = vld [vmem:[%s1372 + $0x3c] sm:$0xf]
        %v1405 = vunpack.c.l.b16 %v1373
        %v1406 = vunpack.c.l.b16 %v1374
        %v1407 = vunpack.c.l.b16 %v1375
        %v1408 = vunpack.c.l.b16 %v1376
        %v1409 = vunpack.c.l.b16 %v1377
        %v1410 = vunpack.c.l.b16 %v1378
        %v1411 = vunpack.c.l.b16 %v1379
        %v1412 = vunpack.c.l.b16 %v1380
        %v1413 = vunpack.c.l.b16 %v1381
        %v1414 = vunpack.c.l.b16 %v1382
        %v1415 = vunpack.c.l.b16 %v1383
        %v1416 = vunpack.c.l.b16 %v1384
        %v1417 = vunpack.c.l.b16 %v1385
        %v1418 = vunpack.c.l.b16 %v1386
        %v1419 = vunpack.c.l.b16 %v1387
        %v1420 = vunpack.c.l.b16 %v1388
        %v1421 = vpack.c.b16 %v1406, %v1405
        %v1422 = vpack.c.b16 %v1408, %v1407
        %v1423 = vpack.c.b16 %v1410, %v1409
        %v1424 = vpack.c.b16 %v1412, %v1411
        %v1425 = vpack.c.b16 %v1414, %v1413
        %v1426 = vpack.c.b16 %v1416, %v1415
        %v1427 = vpack.c.b16 %v1418, %v1417
        %v1428 = vpack.c.b16 %v1420, %v1419
        %1437 = vmatprep.subr.bf16.mxu0 0
        %1438 = vmatpush1.bf16.msra.mxu0 %v1421
        %1439 = vmatprep.subr.bf16.mxu0 0
        %1440 = vmatpush1.bf16.msra.mxu0 %v1422
        %1441 = vmatprep.subr.bf16.mxu0 0
        %1442 = vmatpush1.bf16.msra.mxu0 %v1423
        %1443 = vmatprep.subr.bf16.mxu0 0
        %1444 = vmatpush1.bf16.msra.mxu0 %v1424
        %1445 = vmatprep.subr.bf16.mxu0 0
        %1446 = vmatpush1.bf16.msra.mxu0 %v1425
        %1447 = vmatprep.subr.bf16.mxu0 0
        %1448 = vmatpush1.bf16.msra.mxu0 %v1426
        %1449 = vmatprep.subr.bf16.mxu0 0
        %1450 = vmatpush1.bf16.msra.mxu0 %v1427
        %1451 = vmatprep.subr.bf16.mxu0 0
        %1452 = vmatpush1.bf16.msra.mxu0 %v1428
        %1453 = vmatprep.subr.bf16.mxu0 0
        %1454 = vmatpush1.bf16.msra.mxu0 0
        %1455 = vmatprep.subr.bf16.mxu0 0
        %1456 = vmatpush1.bf16.msra.mxu0 0
        %1457 = vmatprep.subr.bf16.mxu0 0
        %1458 = vmatpush1.bf16.msra.mxu0 0
        %1459 = vmatprep.subr.bf16.mxu0 0
        %1460 = vmatpush1.bf16.msra.mxu0 0
        %1461 = vmatprep.subr.bf16.mxu0 0
        %1462 = vmatpush1.bf16.msra.mxu0 0
        %1463 = vmatprep.subr.bf16.mxu0 0
        %1464 = vmatpush1.bf16.msra.mxu0 0
        %1465 = vmatprep.subr.bf16.mxu0 0
        %1466 = vmatpush1.bf16.msra.mxu0 0
        %1467 = vmatprep.subr.bf16.mxu0 0
        %1468 = vmatpush1.bf16.msra.mxu0 0
        %1469 = vmatprep.mubr.bf16.mxu0 0
        %1470 = vmatmul.mubr.bf16.gmra.mrb[0].mxu0 %v1371
        %v1471 = vpop.f32.mrb[0].mxu0
        %v1472 = vadd.f32 0.0, %v1471
        %v1473 = vpop.f32.mrb[0].mxu0
        %v1474 = vpop.f32.mrb[0].mxu0
        %v1475 = vadd.f32 0.0, %v1474
        %v1476 = vpop.f32.mrb[0].mxu0
        %1477 = vdwg.mxu0
        %v1478 = vadd.f32 %v1367, %v1472
        %v1479 = vadd.f32 %v1368, %v1475
        %v1480 = vld [vmem:[#allocation2 + $0xb] sm:$0xff]
        %v1481 = vld [vmem:[#allocation2 + $0x13] sm:$0xff]
        %v1482 = vpack.c.bf16 %v1481, %v1480
        %s1483 = scalar_lea.vmem [#allocation6], 704
        %v1484 = vld [vmem:[%s1483] sm:$0xf]
        %v1485 = vld [vmem:[%s1483 + $0x4] sm:$0xf]
        %v1486 = vld [vmem:[%s1483 + $0x8] sm:$0xf]
        %v1487 = vld [vmem:[%s1483 + $0xc] sm:$0xf]
        %v1488 = vld [vmem:[%s1483 + $0x10] sm:$0xf]
        %v1489 = vld [vmem:[%s1483 + $0x14] sm:$0xf]
        %v1490 = vld [vmem:[%s1483 + $0x18] sm:$0xf]
        %v1491 = vld [vmem:[%s1483 + $0x1c] sm:$0xf]
        %v1492 = vld [vmem:[%s1483 + $0x20] sm:$0xf]
        %v1493 = vld [vmem:[%s1483 + $0x24] sm:$0xf]
        %v1494 = vld [vmem:[%s1483 + $0x28] sm:$0xf]
        %v1495 = vld [vmem:[%s1483 + $0x2c] sm:$0xf]
        %v1496 = vld [vmem:[%s1483 + $0x30] sm:$0xf]
        %v1497 = vld [vmem:[%s1483 + $0x34] sm:$0xf]
        %v1498 = vld [vmem:[%s1483 + $0x38] sm:$0xf]
        %v1499 = vld [vmem:[%s1483 + $0x3c] sm:$0xf]
        %v1516 = vunpack.c.l.b16 %v1484
        %v1517 = vunpack.c.l.b16 %v1485
        %v1518 = vunpack.c.l.b16 %v1486
        %v1519 = vunpack.c.l.b16 %v1487
        %v1520 = vunpack.c.l.b16 %v1488
        %v1521 = vunpack.c.l.b16 %v1489
        %v1522 = vunpack.c.l.b16 %v1490
        %v1523 = vunpack.c.l.b16 %v1491
        %v1524 = vunpack.c.l.b16 %v1492
        %v1525 = vunpack.c.l.b16 %v1493
        %v1526 = vunpack.c.l.b16 %v1494
        %v1527 = vunpack.c.l.b16 %v1495
        %v1528 = vunpack.c.l.b16 %v1496
        %v1529 = vunpack.c.l.b16 %v1497
        %v1530 = vunpack.c.l.b16 %v1498
        %v1531 = vunpack.c.l.b16 %v1499
        %v1532 = vpack.c.b16 %v1517, %v1516
        %v1533 = vpack.c.b16 %v1519, %v1518
        %v1534 = vpack.c.b16 %v1521, %v1520
        %v1535 = vpack.c.b16 %v1523, %v1522
        %v1536 = vpack.c.b16 %v1525, %v1524
        %v1537 = vpack.c.b16 %v1527, %v1526
        %v1538 = vpack.c.b16 %v1529, %v1528
        %v1539 = vpack.c.b16 %v1531, %v1530
        %1548 = vmatprep.subr.bf16.mxu0 0
        %1549 = vmatpush1.bf16.msra.mxu0 %v1532
        %1550 = vmatprep.subr.bf16.mxu0 0
        %1551 = vmatpush1.bf16.msra.mxu0 %v1533
        %1552 = vmatprep.subr.bf16.mxu0 0
        %1553 = vmatpush1.bf16.msra.mxu0 %v1534
        %1554 = vmatprep.subr.bf16.mxu0 0
        %1555 = vmatpush1.bf16.msra.mxu0 %v1535
        %1556 = vmatprep.subr.bf16.mxu0 0
        %1557 = vmatpush1.bf16.msra.mxu0 %v1536
        %1558 = vmatprep.subr.bf16.mxu0 0
        %1559 = vmatpush1.bf16.msra.mxu0 %v1537
        %1560 = vmatprep.subr.bf16.mxu0 0
        %1561 = vmatpush1.bf16.msra.mxu0 %v1538
        %1562 = vmatprep.subr.bf16.mxu0 0
        %1563 = vmatpush1.bf16.msra.mxu0 %v1539
        %1564 = vmatprep.subr.bf16.mxu0 0
        %1565 = vmatpush1.bf16.msra.mxu0 0
        %1566 = vmatprep.subr.bf16.mxu0 0
        %1567 = vmatpush1.bf16.msra.mxu0 0
        %1568 = vmatprep.subr.bf16.mxu0 0
        %1569 = vmatpush1.bf16.msra.mxu0 0
        %1570 = vmatprep.subr.bf16.mxu0 0
        %1571 = vmatpush1.bf16.msra.mxu0 0
        %1572 = vmatprep.subr.bf16.mxu0 0
        %1573 = vmatpush1.bf16.msra.mxu0 0
        %1574 = vmatprep.subr.bf16.mxu0 0
        %1575 = vmatpush1.bf16.msra.mxu0 0
        %1576 = vmatprep.subr.bf16.mxu0 0
        %1577 = vmatpush1.bf16.msra.mxu0 0
        %1578 = vmatprep.subr.bf16.mxu0 0
        %1579 = vmatpush1.bf16.msra.mxu0 0
        %1580 = vmatprep.mubr.bf16.mxu0 0
        %1581 = vmatmul.mubr.bf16.gmra.mrb[0].mxu0 %v1482
        %v1582 = vpop.f32.mrb[0].mxu0
        %v1583 = vadd.f32 0.0, %v1582
        %v1584 = vpop.f32.mrb[0].mxu0
        %v1585 = vpop.f32.mrb[0].mxu0
        %v1586 = vadd.f32 0.0, %v1585
        %v1587 = vpop.f32.mrb[0].mxu0
        %1588 = vdwg.mxu0
        %v1589 = vadd.f32 %v1478, %v1583
        %v1590 = vadd.f32 %v1479, %v1586
        %v1591 = vld [vmem:[#allocation2 + $0xc] sm:$0xff]
        %v1592 = vld [vmem:[#allocation2 + $0x14] sm:$0xff]
        %v1593 = vpack.c.bf16 %v1592, %v1591
        %s1594 = scalar_lea.vmem [#allocation6], 768
        %v1595 = vld [vmem:[%s1594] sm:$0xf]
        %v1596 = vld [vmem:[%s1594 + $0x4] sm:$0xf]
        %v1597 = vld [vmem:[%s1594 + $0x8] sm:$0xf]
        %v1598 = vld [vmem:[%s1594 + $0xc] sm:$0xf]
        %v1599 = vld [vmem:[%s1594 + $0x10] sm:$0xf]
        %v1600 = vld [vmem:[%s1594 + $0x14] sm:$0xf]
        %v1601 = vld [vmem:[%s1594 + $0x18] sm:$0xf]
        %v1602 = vld [vmem:[%s1594 + $0x1c] sm:$0xf]
        %v1603 = vld [vmem:[%s1594 + $0x20] sm:$0xf]
        %v1604 = vld [vmem:[%s1594 + $0x24] sm:$0xf]
        %v1605 = vld [vmem:[%s1594 + $0x28] sm:$0xf]
        %v1606 = vld [vmem:[%s1594 + $0x2c] sm:$0xf]
        %v1607 = vld [vmem:[%s1594 + $0x30] sm:$0xf]
        %v1608 = vld [vmem:[%s1594 + $0x34] sm:$0xf]
        %v1609 = vld [vmem:[%s1594 + $0x38] sm:$0xf]
        %v1610 = vld [vmem:[%s1594 + $0x3c] sm:$0xf]
        %v1627 = vunpack.c.l.b16 %v1595
        %v1628 = vunpack.c.l.b16 %v1596
        %v1629 = vunpack.c.l.b16 %v1597
        %v1630 = vunpack.c.l.b16 %v1598
        %v1631 = vunpack.c.l.b16 %v1599
        %v1632 = vunpack.c.l.b16 %v1600
        %v1633 = vunpack.c.l.b16 %v1601
        %v1634 = vunpack.c.l.b16 %v1602
        %v1635 = vunpack.c.l.b16 %v1603
        %v1636 = vunpack.c.l.b16 %v1604
        %v1637 = vunpack.c.l.b16 %v1605
        %v1638 = vunpack.c.l.b16 %v1606
        %v1639 = vunpack.c.l.b16 %v1607
        %v1640 = vunpack.c.l.b16 %v1608
        %v1641 = vunpack.c.l.b16 %v1609
        %v1642 = vunpack.c.l.b16 %v1610
        %v1643 = vpack.c.b16 %v1628, %v1627
        %v1644 = vpack.c.b16 %v1630, %v1629
        %v1645 = vpack.c.b16 %v1632, %v1631
        %v1646 = vpack.c.b16 %v1634, %v1633
        %v1647 = vpack.c.b16 %v1636, %v1635
        %v1648 = vpack.c.b16 %v1638, %v1637
        %v1649 = vpack.c.b16 %v1640, %v1639
        %v1650 = vpack.c.b16 %v1642, %v1641
        %1659 = vmatprep.subr.bf16.mxu0 0
        %1660 = vmatpush1.bf16.msra.mxu0 %v1643
        %1661 = vmatprep.subr.bf16.mxu0 0
        %1662 = vmatpush1.bf16.msra.mxu0 %v1644
        %1663 = vmatprep.subr.bf16.mxu0 0
        %1664 = vmatpush1.bf16.msra.mxu0 %v1645
        %1665 = vmatprep.subr.bf16.mxu0 0
        %1666 = vmatpush1.bf16.msra.mxu0 %v1646
        %1667 = vmatprep.subr.bf16.mxu0 0
        %1668 = vmatpush1.bf16.msra.mxu0 %v1647
        %1669 = vmatprep.subr.bf16.mxu0 0
        %1670 = vmatpush1.bf16.msra.mxu0 %v1648
        %1671 = vmatprep.subr.bf16.mxu0 0
        %1672 = vmatpush1.bf16.msra.mxu0 %v1649
        %1673 = vmatprep.subr.bf16.mxu0 0
        %1674 = vmatpush1.bf16.msra.mxu0 %v1650
        %1675 = vmatprep.subr.bf16.mxu0 0
        %1676 = vmatpush1.bf16.msra.mxu0 0
        %1677 = vmatprep.subr.bf16.mxu0 0
        %1678 = vmatpush1.bf16.msra.mxu0 0
        %1679 = vmatprep.subr.bf16.mxu0 0
        %1680 = vmatpush1.bf16.msra.mxu0 0
        %1681 = vmatprep.subr.bf16.mxu0 0
        %1682 = vmatpush1.bf16.msra.mxu0 0
        %1683 = vmatprep.subr.bf16.mxu0 0
        %1684 = vmatpush1.bf16.msra.mxu0 0
        %1685 = vmatprep.subr.bf16.mxu0 0
        %1686 = vmatpush1.bf16.msra.mxu0 0
        %1687 = vmatprep.subr.bf16.mxu0 0
        %1688 = vmatpush1.bf16.msra.mxu0 0
        %1689 = vmatprep.subr.bf16.mxu0 0
        %1690 = vmatpush1.bf16.msra.mxu0 0
        %1691 = vmatprep.mubr.bf16.mxu0 0
        %1692 = vmatmul.mubr.bf16.gmra.mrb[0].mxu0 %v1593
        %v1693 = vpop.f32.mrb[0].mxu0
        %v1694 = vadd.f32 0.0, %v1693
        %v1695 = vpop.f32.mrb[0].mxu0
        %v1696 = vpop.f32.mrb[0].mxu0
        %v1697 = vadd.f32 0.0, %v1696
        %v1698 = vpop.f32.mrb[0].mxu0
        %1699 = vdwg.mxu0
        %v1700 = vadd.f32 %v1589, %v1694
        %v1701 = vadd.f32 %v1590, %v1697
        %v1702 = vld [vmem:[#allocation2 + $0xd] sm:$0xff]
        %v1703 = vld [vmem:[#allocation2 + $0x15] sm:$0xff]
        %v1704 = vpack.c.bf16 %v1703, %v1702
        %s1705 = scalar_lea.vmem [#allocation6], 832
        %v1706 = vld [vmem:[%s1705] sm:$0xf]
        %v1707 = vld [vmem:[%s1705 + $0x4] sm:$0xf]
        %v1708 = vld [vmem:[%s1705 + $0x8] sm:$0xf]
        %v1709 = vld [vmem:[%s1705 + $0xc] sm:$0xf]
        %v1710 = vld [vmem:[%s1705 + $0x10] sm:$0xf]
        %v1711 = vld [vmem:[%s1705 + $0x14] sm:$0xf]
        %v1712 = vld [vmem:[%s1705 + $0x18] sm:$0xf]
        %v1713 = vld [vmem:[%s1705 + $0x1c] sm:$0xf]
        %v1714 = vld [vmem:[%s1705 + $0x20] sm:$0xf]
        %v1715 = vld [vmem:[%s1705 + $0x24] sm:$0xf]
        %v1716 = vld [vmem:[%s1705 + $0x28] sm:$0xf]
        %v1717 = vld [vmem:[%s1705 + $0x2c] sm:$0xf]
        %v1718 = vld [vmem:[%s1705 + $0x30] sm:$0xf]
        %v1719 = vld [vmem:[%s1705 + $0x34] sm:$0xf]
        %v1720 = vld [vmem:[%s1705 + $0x38] sm:$0xf]
        %v1721 = vld [vmem:[%s1705 + $0x3c] sm:$0xf]
        %v1738 = vunpack.c.l.b16 %v1706
        %v1739 = vunpack.c.l.b16 %v1707
        %v1740 = vunpack.c.l.b16 %v1708
        %v1741 = vunpack.c.l.b16 %v1709
        %v1742 = vunpack.c.l.b16 %v1710
        %v1743 = vunpack.c.l.b16 %v1711
        %v1744 = vunpack.c.l.b16 %v1712
        %v1745 = vunpack.c.l.b16 %v1713
        %v1746 = vunpack.c.l.b16 %v1714
        %v1747 = vunpack.c.l.b16 %v1715
        %v1748 = vunpack.c.l.b16 %v1716
        %v1749 = vunpack.c.l.b16 %v1717
        %v1750 = vunpack.c.l.b16 %v1718
        %v1751 = vunpack.c.l.b16 %v1719
        %v1752 = vunpack.c.l.b16 %v1720
        %v1753 = vunpack.c.l.b16 %v1721
        %v1754 = vpack.c.b16 %v1739, %v1738
        %v1755 = vpack.c.b16 %v1741, %v1740
        %v1756 = vpack.c.b16 %v1743, %v1742
        %v1757 = vpack.c.b16 %v1745, %v1744
        %v1758 = vpack.c.b16 %v1747, %v1746
        %v1759 = vpack.c.b16 %v1749, %v1748
        %v1760 = vpack.c.b16 %v1751, %v1750
        %v1761 = vpack.c.b16 %v1753, %v1752
        %1770 = vmatprep.subr.bf16.mxu0 0
        %1771 = vmatpush1.bf16.msra.mxu0 %v1754
        %1772 = vmatprep.subr.bf16.mxu0 0
        %1773 = vmatpush1.bf16.msra.mxu0 %v1755
        %1774 = vmatprep.subr.bf16.mxu0 0
        %1775 = vmatpush1.bf16.msra.mxu0 %v1756
        %1776 = vmatprep.subr.bf16.mxu0 0
        %1777 = vmatpush1.bf16.msra.mxu0 %v1757
        %1778 = vmatprep.subr.bf16.mxu0 0
        %1779 = vmatpush1.bf16.msra.mxu0 %v1758
        %1780 = vmatprep.subr.bf16.mxu0 0
        %1781 = vmatpush1.bf16.msra.mxu0 %v1759
        %1782 = vmatprep.subr.bf16.mxu0 0
        %1783 = vmatpush1.bf16.msra.mxu0 %v1760
        %1784 = vmatprep.subr.bf16.mxu0 0
        %1785 = vmatpush1.bf16.msra.mxu0 %v1761
        %1786 = vmatprep.subr.bf16.mxu0 0
        %1787 = vmatpush1.bf16.msra.mxu0 0
        %1788 = vmatprep.subr.bf16.mxu0 0
        %1789 = vmatpush1.bf16.msra.mxu0 0
        %1790 = vmatprep.subr.bf16.mxu0 0
        %1791 = vmatpush1.bf16.msra.mxu0 0
        %1792 = vmatprep.subr.bf16.mxu0 0
        %1793 = vmatpush1.bf16.msra.mxu0 0
        %1794 = vmatprep.subr.bf16.mxu0 0
        %1795 = vmatpush1.bf16.msra.mxu0 0
        %1796 = vmatprep.subr.bf16.mxu0 0
        %1797 = vmatpush1.bf16.msra.mxu0 0
        %1798 = vmatprep.subr.bf16.mxu0 0
        %1799 = vmatpush1.bf16.msra.mxu0 0
        %1800 = vmatprep.subr.bf16.mxu0 0
        %1801 = vmatpush1.bf16.msra.mxu0 0
        %1802 = vmatprep.mubr.bf16.mxu0 0
        %1803 = vmatmul.mubr.bf16.gmra.mrb[0].mxu0 %v1704
        %v1804 = vpop.f32.mrb[0].mxu0
        %v1805 = vadd.f32 0.0, %v1804
        %v1806 = vpop.f32.mrb[0].mxu0
        %v1807 = vpop.f32.mrb[0].mxu0
        %v1808 = vadd.f32 0.0, %v1807
        %v1809 = vpop.f32.mrb[0].mxu0
        %1810 = vdwg.mxu0
        %v1811 = vadd.f32 %v1700, %v1805
        %v1812 = vadd.f32 %v1701, %v1808
        %v1813 = vld [vmem:[#allocation2 + $0xe] sm:$0xff]
        %v1814 = vld [vmem:[#allocation2 + $0x16] sm:$0xff]
        %v1815 = vpack.c.bf16 %v1814, %v1813
        %s1816 = scalar_lea.vmem [#allocation6], 896
        %v1817 = vld [vmem:[%s1816] sm:$0xf]
        %v1818 = vld [vmem:[%s1816 + $0x4] sm:$0xf]
        %v1819 = vld [vmem:[%s1816 + $0x8] sm:$0xf]
        %v1820 = vld [vmem:[%s1816 + $0xc] sm:$0xf]
        %v1821 = vld [vmem:[%s1816 + $0x10] sm:$0xf]
        %v1822 = vld [vmem:[%s1816 + $0x14] sm:$0xf]
        %v1823 = vld [vmem:[%s1816 + $0x18] sm:$0xf]
        %v1824 = vld [vmem:[%s1816 + $0x1c] sm:$0xf]
        %v1825 = vld [vmem:[%s1816 + $0x20] sm:$0xf]
        %v1826 = vld [vmem:[%s1816 + $0x24] sm:$0xf]
        %v1827 = vld [vmem:[%s1816 + $0x28] sm:$0xf]
        %v1828 = vld [vmem:[%s1816 + $0x2c] sm:$0xf]
        %v1829 = vld [vmem:[%s1816 + $0x30] sm:$0xf]
        %v1830 = vld [vmem:[%s1816 + $0x34] sm:$0xf]
        %v1831 = vld [vmem:[%s1816 + $0x38] sm:$0xf]
        %v1832 = vld [vmem:[%s1816 + $0x3c] sm:$0xf]
        %v1849 = vunpack.c.l.b16 %v1817
        %v1850 = vunpack.c.l.b16 %v1818
        %v1851 = vunpack.c.l.b16 %v1819
        %v1852 = vunpack.c.l.b16 %v1820
        %v1853 = vunpack.c.l.b16 %v1821
        %v1854 = vunpack.c.l.b16 %v1822
        %v1855 = vunpack.c.l.b16 %v1823
        %v1856 = vunpack.c.l.b16 %v1824
        %v1857 = vunpack.c.l.b16 %v1825
        %v1858 = vunpack.c.l.b16 %v1826
        %v1859 = vunpack.c.l.b16 %v1827
        %v1860 = vunpack.c.l.b16 %v1828
        %v1861 = vunpack.c.l.b16 %v1829
        %v1862 = vunpack.c.l.b16 %v1830
        %v1863 = vunpack.c.l.b16 %v1831
        %v1864 = vunpack.c.l.b16 %v1832
        %v1865 = vpack.c.b16 %v1850, %v1849
        %v1866 = vpack.c.b16 %v1852, %v1851
        %v1867 = vpack.c.b16 %v1854, %v1853
        %v1868 = vpack.c.b16 %v1856, %v1855
        %v1869 = vpack.c.b16 %v1858, %v1857
        %v1870 = vpack.c.b16 %v1860, %v1859
        %v1871 = vpack.c.b16 %v1862, %v1861
        %v1872 = vpack.c.b16 %v1864, %v1863
        %1881 = vmatprep.subr.bf16.mxu0 0
        %1882 = vmatpush1.bf16.msra.mxu0 %v1865
        %1883 = vmatprep.subr.bf16.mxu0 0
        %1884 = vmatpush1.bf16.msra.mxu0 %v1866
        %1885 = vmatprep.subr.bf16.mxu0 0
        %1886 = vmatpush1.bf16.msra.mxu0 %v1867
        %1887 = vmatprep.subr.bf16.mxu0 0
        %1888 = vmatpush1.bf16.msra.mxu0 %v1868
        %1889 = vmatprep.subr.bf16.mxu0 0
        %1890 = vmatpush1.bf16.msra.mxu0 %v1869
        %1891 = vmatprep.subr.bf16.mxu0 0
        %1892 = vmatpush1.bf16.msra.mxu0 %v1870
        %1893 = vmatprep.subr.bf16.mxu0 0
        %1894 = vmatpush1.bf16.msra.mxu0 %v1871
        %1895 = vmatprep.subr.bf16.mxu0 0
        %1896 = vmatpush1.bf16.msra.mxu0 %v1872
        %1897 = vmatprep.subr.bf16.mxu0 0
        %1898 = vmatpush1.bf16.msra.mxu0 0
        %1899 = vmatprep.subr.bf16.mxu0 0
        %1900 = vmatpush1.bf16.msra.mxu0 0
        %1901 = vmatprep.subr.bf16.mxu0 0
        %1902 = vmatpush1.bf16.msra.mxu0 0
        %1903 = vmatprep.subr.bf16.mxu0 0
        %1904 = vmatpush1.bf16.msra.mxu0 0
        %1905 = vmatprep.subr.bf16.mxu0 0
        %1906 = vmatpush1.bf16.msra.mxu0 0
        %1907 = vmatprep.subr.bf16.mxu0 0
        %1908 = vmatpush1.bf16.msra.mxu0 0
        %1909 = vmatprep.subr.bf16.mxu0 0
        %1910 = vmatpush1.bf16.msra.mxu0 0
        %1911 = vmatprep.subr.bf16.mxu0 0
        %1912 = vmatpush1.bf16.msra.mxu0 0
        %1913 = vmatprep.mubr.bf16.mxu0 0
        %1914 = vmatmul.mubr.bf16.gmra.mrb[0].mxu0 %v1815
        %v1915 = vpop.f32.mrb[0].mxu0
        %v1916 = vadd.f32 0.0, %v1915
        %v1917 = vpop.f32.mrb[0].mxu0
        %v1918 = vpop.f32.mrb[0].mxu0
        %v1919 = vadd.f32 0.0, %v1918
        %v1920 = vpop.f32.mrb[0].mxu0
        %1921 = vdwg.mxu0
        %v1922 = vadd.f32 %v1811, %v1916
        %v1923 = vadd.f32 %v1812, %v1919
        %v1924 = vld [vmem:[%s2] sm:$0x1]
        %v1926 = vlaneseq
        %v1927 = vshrl.u32 %v1926, 7
        %v1928 = vsub.s32 0, %v1927
        %v1929 = vrot.slane %v1924, %v1928
        %v1931 = vadd.f32 %v1922, %v1929
        %v1932 = vadd.f32 %v1923, %v1929
        %1933 = vst [vmem:[%s203] sm:$0xff] %v1931
        %1934 = vst [vmem:[%s203 + $0x8] sm:$0xff] %v1932
        %s1935 = sand.u32 %s97, 1
        %s1936 = scalar_lea.sflag [#allocation5], %s1935
        %s1937 = sand.u32 %s97, 1
        %s1938 = smul.addr %s1937, 16
        %s1939 = scalar_lea.vmem [#allocation8], %s1938
        // Predicated region
        $region41: #{tpu_custom_call.1} parent=31 // pred_check
          %p1940 = pneg %p107
        $region42: #{tpu_custom_call.1} parent=31 // pred_check_branch
          %1942 = sbr.rel (%p1940) target = $region44
        $region43: #{tpu_custom_call.1} parent=31 // pred_region
          %s1944 = ssub.s32 256, 256
          %1945 = vsyncadd %s1936, %s1944
          %s1946 = smul.addr %s21, 2
          %s1947 = smul.addr %s1946, 128
          %s1948 = scalar_lea.hbm %s3, %s1947
          %s1949 = sshll.u32 %s1939, 4
          %s1950 = int_to_ptr.vmem [resolvable:$true] %s1949
          %1955 = dma.vmem_to_hbm [thread:$0]  %s1950, 256, %s1948, %s1936, 128, 128, 8
        $region44: #{tpu_custom_call.1} parent=31 // pred_fallthru
          _
      $region32: #{tpu_custom_call.1} parent=5 // pred_fallthru
        _
      %p1956 = scmp.le.s32.totalorder 2, %s16
      // Predicated region
      $region45: #{tpu_custom_call.1} parent=5 // pred_check
        %p1957 = pneg %p1956
      $region46: #{tpu_custom_call.1} parent=5 // pred_check_branch
        %1959 = sbr.rel (%p1957) target = $region48
      $region47: #{tpu_custom_call.1} parent=5 // pred_region
        %s1960 = ssub.s32 %s16, 2
        // Predicated region
        $region49: #{tpu_custom_call.1} parent=47 // pred_check
          %p1961 = pneg %p113
        $region50: #{tpu_custom_call.1} parent=47 // pred_check_branch
          %1963 = sbr.rel (%p1961) target = $region52
        $region51: #{tpu_custom_call.1} parent=47 // pred_region
          %s1964 = sand.u32 %s98, 1
          %s1965 = scalar_lea.sflag [#allocation5], %s1964
          %s1966 = sand.u32 %s98, 1
          %s1967 = smul.addr %s1966, 16
          %s1968 = scalar_lea.vmem [#allocation8], %s1967
          %1969 = dma.done %s1965, 256
        $region52: #{tpu_custom_call.1} parent=47 // pred_fallthru
          _
      $region48: #{tpu_custom_call.1} parent=5 // pred_fallthru
        _
    $region6: #{tpu_custom_call.1} parent=1 // loop_footer
      %s20 = sadd.s32 1, %s16
    $region7: #{tpu_custom_call.1} parent=1 // loop_footer_branch
      %15 = sbr.rel target = $region3
    $region8: #{tpu_custom_call.1} parent=1 // loop_exit
      _
    %1970 = vsyncpa [#allocation4], 1
    %s1971 = scalar_lea.sflag [#allocation4], 1
    %1972 = vsyncpa %s1971, 1
    %1973 = vsyncpa [#allocation7], 1
    %1974 = vsyncpa [#allocation5], 1
    %s1975 = scalar_lea.sflag [#allocation5], 1
    %1976 = vsyncpa %s1975, 1

</llo_original>
